<compile_context>
chip_gen: v7x
topology: tpu7x:2x2x1
jax: 0.10.0
libtpu: 0.0.40
codegen_flags: <defaults>
</compile_context>

<pallas_src>
import functools
import math

import jax
import jax.numpy as jnp
from jax.experimental import pallas as pl
from jax.experimental.pallas import tpu as pltpu


# Working set here is ~3 MB; keep the scoped limit small enough for v7x's 64 MiB
# physical VMEM while leaving headroom for double-buffered stacked weights.
_VMEM_LIMIT_BYTES = 32 * 1024 * 1024


# ----------------------------- fused kernel -----------------------------

def _vit_fused_kernel(x_ref, tokw_ref, tokb_ref, pe_ref,
                      wqkv_ref, bqkv_ref, wo_ref, bo_ref,
                      g1_ref, b1_ref, wff1_ref, bff1_ref,
                      wff2_ref, bff2_ref, g2_ref, b2_ref,
                      headw_ref, headb_ref,
                      h_ref, logits_ref,
                      *, nheads, eps, ff_chunk):
    l = pl.program_id(1)

    # ---- l == 0 prologue: visual tokenizer (ReLU -> Linear) + positional enc ----
    # LinearConstructor([d_in, token_size]) == [ReLU(), Linear(d_in, token_size)]:
    # ReLU is applied to the raw flattened pixels, then the linear projection.
    @pl.when(l == 0)
    def _():
        x = jnp.maximum(x_ref[...], 0.0).astype(jnp.bfloat16)
        t = jnp.dot(x, tokw_ref[...], preferred_element_type=jnp.float32)
        h_ref[...] = t + tokb_ref[...] + pe_ref[...]

    h = h_ref[...]                              # [S, d] f32, VMEM-resident residual
    rows, d = h.shape
    dh = d // nheads
    scale = 1.0 / math.sqrt(dh)

    def layer_norm(y, g_ref, b_ref):
        mu = jnp.mean(y, axis=-1, keepdims=True)
        var = jnp.mean(jnp.square(y - mu), axis=-1, keepdims=True)
        return (y - mu) * jax.lax.rsqrt(var + eps) * g_ref[0] + b_ref[0]

    # ---- self-attention block (post-norm) ----
    # True per-head contraction: each head contracts only its dh channels, and the
    # output projection is accumulated per head, so heads are never concatenated.
    hb = h.astype(jnp.bfloat16)
    qkv = jnp.dot(hb, wqkv_ref[0], preferred_element_type=jnp.float32) + bqkv_ref[0]
    ao = jnp.zeros((rows, d), jnp.float32)
    # TODO(synk): at S=8 each per-head dot uses a small fraction of the MXU rows;
    # when scaling S/M up, batch heads into one larger dot_general and flash-tile.
    for hh in range(nheads):
        c0 = hh * dh
        q_h = qkv[:, c0:c0 + dh].astype(jnp.bfloat16)                  # [S, dh]
        k_h = qkv[:, d + c0:d + c0 + dh].astype(jnp.bfloat16)          # [S, dh]
        v_h = qkv[:, 2 * d + c0:2 * d + c0 + dh].astype(jnp.bfloat16)  # [S, dh]
        s = jax.lax.dot_general(q_h, k_h, (((1,), (1,)), ((), ())),
                                preferred_element_type=jnp.float32) * scale
        s = s - jnp.max(s, axis=-1, keepdims=True)
        p = jnp.exp(s)
        p = p * pl.reciprocal(jnp.sum(p, axis=-1, keepdims=True), approx=True)
        o_h = jnp.dot(p.astype(jnp.bfloat16), v_h,
                      preferred_element_type=jnp.float32)              # [S, dh]
        ao = ao + jnp.dot(o_h.astype(jnp.bfloat16), wo_ref[0, c0:c0 + dh, :],
                          preferred_element_type=jnp.float32)
    ao = ao + bo_ref[0]
    h1 = layer_norm(h + ao, g1_ref, b1_ref)

    # ---- feed-forward block: linear2(relu(linear1(x))), chunked over d_ff ----
    h1b = h1.astype(jnp.bfloat16)
    dff = wff1_ref.shape[-1]
    f2 = jnp.zeros((rows, d), jnp.float32)
    for c0 in range(0, dff, ff_chunk):
        ck = min(ff_chunk, dff - c0)
        f1c = (jnp.dot(h1b, wff1_ref[0, :, c0:c0 + ck],
                       preferred_element_type=jnp.float32)
               + bff1_ref[0, :, c0:c0 + ck])
        f1c = jnp.maximum(f1c, 0.0).astype(jnp.bfloat16)
        f2 = f2 + jnp.dot(f1c, wff2_ref[0, c0:c0 + ck, :],
                          preferred_element_type=jnp.float32)
    f2 = f2 + bff2_ref[0]
    h2 = layer_norm(h1 + f2, g2_ref, b2_ref)

    # residual stream lives in the output block (written to HBM once per batch)
    h_ref[...] = h2

    # ---- l == L-1 epilogue: fused lm_head (lane-dense vocab) ----
    @pl.when(l == pl.num_programs(1) - 1)
    def _():
        logits_ref[...] = (jnp.dot(h2.astype(jnp.bfloat16), headw_ref[...],
                                   preferred_element_type=jnp.float32)
                           + headb_ref[...])


_ENC_ORDER = ["w_qkv", "b_qkv", "w_o", "b_o", "ln1_g", "ln1_b",
              "w_ff1", "b_ff1", "w_ff2", "b_ff2", "ln2_g", "ln2_b"]


# ----------------------------- parameters / glue -----------------------------

def positional_encoding(seq_len, d_model):
    pos = jnp.arange(seq_len, dtype=jnp.float32)[:, None]
    div = jnp.exp(jnp.arange(0, d_model, 2, dtype=jnp.float32)
                  * (-math.log(10000.0) / d_model))
    pe = jnp.zeros((seq_len, d_model), jnp.float32)
    pe = pe.at[:, 0::2].set(jnp.sin(pos * div))
    pe = pe.at[:, 1::2].set(jnp.cos(pos * div))
    return pe  # [S, d_model]


def init_params(key, d_in, d_model, nlayers, d_ff, vocab_size):
    scale = 0.02
    L, d = nlayers, d_model

    def nxt():
        nonlocal key
        key, sub = jax.random.split(key)
        return sub

    def dense(shape, dtype=jnp.bfloat16):
        return (jax.random.normal(nxt(), shape, jnp.float32) * scale).astype(dtype)

    # TODO(synk): if weight-DMA bound at scale, store FFN weights int8 on v5e/v6e /
    # fp8 on v7x and/or add pipeline_mode=pl.Buffered(3) on the FFN weight specs.
    enc = {
        "w_qkv": dense((L, d, 3 * d)),                    # MHA in_proj, stored [in, out]
        "b_qkv": dense((L, 1, 3 * d), jnp.float32),
        "w_o":   dense((L, d, d)),                        # MHA out_proj
        "b_o":   dense((L, 1, d), jnp.float32),
        "ln1_g": jnp.ones((L, 1, d), jnp.float32),
        "ln1_b": jnp.zeros((L, 1, d), jnp.float32),
        "w_ff1": dense((L, d, d_ff)),
        "b_ff1": dense((L, 1, d_ff), jnp.float32),
        "w_ff2": dense((L, d_ff, d)),
        "b_ff2": dense((L, 1, d), jnp.float32),
        "ln2_g": jnp.ones((L, 1, d), jnp.float32),
        "ln2_b": jnp.zeros((L, 1, d), jnp.float32),
    }
    return {
        "tok_w": dense((d_in, d)),
        "tok_b": dense((1, d), jnp.float32),
        "enc": enc,
        "head_w": dense((d, vocab_size)),
        "head_b": dense((1, vocab_size), jnp.float32),
    }


def vit_encoder_forward(params, input_visual_seq, *, nheads, eps=1e-5):
    """input_visual_seq: [B, S, C, W, H] float32 (same as the PyTorch module)."""
    B, S, C, W, H = input_visual_seq.shape
    d_in = C * W * H
    d = params["tok_w"].shape[1]
    V = params["head_w"].shape[1]
    enc = params["enc"]
    L = enc["w_qkv"].shape[0]
    M = B * S
    assert d % nheads == 0, "d_model must be divisible by nheads"

    # [B,S,C,W,H] -> batch-major rows [(B*S), d_in] (row = b*S + s); the module's
    # seq-first [S, B, .] layout is restored with one tiny XLA transpose at the end.
    x_flat = input_visual_seq.reshape(M, d_in)
    pe = positional_encoding(S, d)

    def per_batch(cols):      # one batch's [S, cols] block
        return pl.BlockSpec((S, cols), lambda b, l: (b, 0))

    def const2(a):            # whole 2-D array, VMEM-resident for the entire grid
        return pl.BlockSpec(a.shape, lambda b, l: (0, 0))

    def stacked(a):           # per-layer slice of a stacked [L, ...] weight
        return pl.BlockSpec((1,) + a.shape[1:], lambda b, l: (l, 0, 0))

    in_specs = ([per_batch(d_in), const2(params["tok_w"]),
                 const2(params["tok_b"]), const2(pe)]
                + [stacked(enc[k]) for k in _ENC_ORDER]
                + [const2(params["head_w"]), const2(params["head_b"])])

    out_shape = (jax.ShapeDtypeStruct((M, d), jnp.float32),
                 jax.ShapeDtypeStruct((M, V), jnp.float32))
    out_specs = (pl.BlockSpec((S, d), lambda b, l: (b, 0)),
                 pl.BlockSpec((S, V), lambda b, l: (b, 0)))

    ff_chunk = min(512, enc["w_ff1"].shape[-1])

    h, logits = pl.pallas_call(
        functools.partial(_vit_fused_kernel, nheads=nheads, eps=eps,
                          ff_chunk=ff_chunk),
        out_shape=out_shape,
        grid=(B, L),
        in_specs=in_specs,
        out_specs=out_specs,
        compiler_params=pltpu.CompilerParams(
            dimension_semantics=("parallel", "arbitrary"),
            vmem_limit_bytes=_VMEM_LIMIT_BYTES),
    )(x_flat, params["tok_w"], params["tok_b"], pe,
      *[enc[k] for k in _ENC_ORDER],
      params["head_w"], params["head_b"])

    features = jnp.transpose(h.reshape(B, S, d), (1, 0, 2))       # [S, B, d]
    logits = jnp.transpose(logits.reshape(B, S, V), (1, 0, 2))    # [S, B, V]
    # nn.LogSoftmax is constructed in __init__ but never applied in forward().
    return {"features": features, "language_head_output": logits}


# ----------------------------- demo -----------------------------

if __name__ == "__main__":
    key = jax.random.PRNGKey(0)

    # small shapes consistent with the module
    B, S = 2, 8                 # batch, sequence of visual tokens
    C, W, H = 3, 8, 8           # per-token patch; d_in = C*W*H = 192
    d_model, nheads, nlayers = 128, 8, 2
    d_ff = 2048                 # PyTorch TransformerEncoderLayer default dim_feedforward
    vocab_size = 256

    k_in, k_p = jax.random.split(key)
    input_visual_seq = jax.random.normal(k_in, (B, S, C, W, H), jnp.float32)
    params = init_params(k_p, C * W * H, d_model, nlayers, d_ff, vocab_size)

    fwd = jax.jit(functools.partial(vit_encoder_forward, nheads=nheads))
    out = fwd(params, input_visual_seq)
    jax.block_until_ready(out)

    assert out["features"].shape == (S, B, d_model)
    assert out["language_head_output"].shape == (S, B, vocab_size)
    assert bool(jnp.all(jnp.isfinite(out["features"])))
    assert bool(jnp.all(jnp.isfinite(out["language_head_output"])))
    print("KERNEL_OK")
</pallas_src>

<mosaic_0001>
module attributes {stable_mosaic.version = 11 : i64} {
  func.func @_vit_fused_kernel(%arg0: i32, %arg1: i32, %arg2: memref<8x192xf32, #tpu.memory_space<vmem>>, %arg3: memref<192x128xbf16, #tpu.memory_space<vmem>>, %arg4: memref<1x128xf32, #tpu.memory_space<vmem>>, %arg5: memref<8x128xf32, #tpu.memory_space<vmem>>, %arg6: memref<1x128x384xbf16, #tpu.memory_space<vmem>>, %arg7: memref<1x1x384xf32, #tpu.memory_space<vmem>>, %arg8: memref<1x128x128xbf16, #tpu.memory_space<vmem>>, %arg9: memref<1x1x128xf32, #tpu.memory_space<vmem>>, %arg10: memref<1x1x128xf32, #tpu.memory_space<vmem>>, %arg11: memref<1x1x128xf32, #tpu.memory_space<vmem>>, %arg12: memref<1x128x2048xbf16, #tpu.memory_space<vmem>>, %arg13: memref<1x1x2048xf32, #tpu.memory_space<vmem>>, %arg14: memref<1x2048x128xbf16, #tpu.memory_space<vmem>>, %arg15: memref<1x1x128xf32, #tpu.memory_space<vmem>>, %arg16: memref<1x1x128xf32, #tpu.memory_space<vmem>>, %arg17: memref<1x1x128xf32, #tpu.memory_space<vmem>>, %arg18: memref<128x256xbf16, #tpu.memory_space<vmem>>, %arg19: memref<1x256xf32, #tpu.memory_space<vmem>>, %arg20: memref<8x128xf32, #tpu.memory_space<vmem>>, %arg21: memref<8x256xf32, #tpu.memory_space<vmem>>) attributes {dimension_semantics = [#tpu.dimension_semantics<parallel>, #tpu.dimension_semantics<arbitrary>], iteration_bounds = array<i64: 2, 2>, scalar_prefetch = 0 : i64, scratch_operands = 0 : i64, tpu.core_type = #tpu.core_type<tc>, window_params = [{transform_indices = @transform_0, window_bounds = array<i64: 8, 192>}, {pipeline_mode = #tpu.pipeline_mode<synchronous>, transform_indices = @transform_1, window_bounds = array<i64: 192, 128>}, {pipeline_mode = #tpu.pipeline_mode<synchronous>, transform_indices = @transform_2, window_bounds = array<i64: 1, 128>}, {pipeline_mode = #tpu.pipeline_mode<synchronous>, transform_indices = @transform_3, window_bounds = array<i64: 8, 128>}, {transform_indices = @transform_4, window_bounds = array<i64: 1, 128, 384>}, {transform_indices = @transform_5, window_bounds = array<i64: 1, 1, 384>}, {transform_indices = @transform_6, window_bounds = array<i64: 1, 128, 128>}, {transform_indices = @transform_7, window_bounds = array<i64: 1, 1, 128>}, {transform_indices = @transform_8, window_bounds = array<i64: 1, 1, 128>}, {transform_indices = @transform_9, window_bounds = array<i64: 1, 1, 128>}, {transform_indices = @transform_10, window_bounds = array<i64: 1, 128, 2048>}, {transform_indices = @transform_11, window_bounds = array<i64: 1, 1, 2048>}, {transform_indices = @transform_12, window_bounds = array<i64: 1, 2048, 128>}, {transform_indices = @transform_13, window_bounds = array<i64: 1, 1, 128>}, {transform_indices = @transform_14, window_bounds = array<i64: 1, 1, 128>}, {transform_indices = @transform_15, window_bounds = array<i64: 1, 1, 128>}, {pipeline_mode = #tpu.pipeline_mode<synchronous>, transform_indices = @transform_16, window_bounds = array<i64: 128, 256>}, {pipeline_mode = #tpu.pipeline_mode<synchronous>, transform_indices = @transform_17, window_bounds = array<i64: 1, 256>}, {transform_indices = @transform_18, window_bounds = array<i64: 8, 128>}, {transform_indices = @transform_19, window_bounds = array<i64: 8, 256>}]} {
    %c0_i32 = arith.constant 0 : i32
    %0 = arith.cmpi eq, %arg1, %c0_i32 : i32
    %1 = arith.extui %0 : i1 to i32
    %c0_i32_0 = arith.constant 0 : i32
    %2 = arith.cmpi ne, %1, %c0_i32_0 : i32
    scf.if %2 {
      %c0_151 = arith.constant 0 : index
      %c0_152 = arith.constant 0 : index
      %345 = vector.load %arg2[%c0_151, %c0_152] : memref<8x192xf32, #tpu.memory_space<vmem>>, vector<8x192xf32>
      %cst_153 = arith.constant 0.000000e+00 : f32
      %346 = vector.broadcast %cst_153 : f32 to vector<8x192xf32>
      %347 = arith.maximumf %345, %346 : vector<8x192xf32>
      %348 = arith.truncf %347 : vector<8x192xf32> to vector<8x192xbf16>
      %c0_154 = arith.constant 0 : index
      %c0_155 = arith.constant 0 : index
      %349 = vector.load %arg3[%c0_154, %c0_155] : memref<192x128xbf16, #tpu.memory_space<vmem>>, vector<192x128xbf16>
      %cst_156 = arith.constant dense<0.000000e+00> : vector<8x128xf32>
      %350 = tpu.matmul %348, %349, %cst_156 {dimension_numbers = #tpu.dot_dimension_numbers<[1], [0], [0], [1], [0, 0, 1, 1], [], []>} : vector<8x192xbf16>, vector<192x128xbf16>, vector<8x128xf32> -> vector<8x128xf32>
      %c0_157 = arith.constant 0 : index
      %c0_158 = arith.constant 0 : index
      %351 = vector.load %arg4[%c0_157, %c0_158] : memref<1x128xf32, #tpu.memory_space<vmem>>, vector<1x128xf32>
      %352 = vector.broadcast %351 : vector<1x128xf32> to vector<8x128xf32>
      %353 = arith.addf %350, %352 : vector<8x128xf32>
      %c0_159 = arith.constant 0 : index
      %c0_160 = arith.constant 0 : index
      %354 = vector.load %arg5[%c0_159, %c0_160] : memref<8x128xf32, #tpu.memory_space<vmem>>, vector<8x128xf32>
      %355 = arith.addf %353, %354 : vector<8x128xf32>
      %c0_161 = arith.constant 0 : index
      %c0_162 = arith.constant 0 : index
      %356 = vector.load %arg20[%c0_161, %c0_162] : memref<8x128xf32, #tpu.memory_space<vmem>>, vector<8x128xf32>
      tpu.vector_store %arg20[%c0_161, %c0_162], %355 {strides = array<i32>} : memref<8x128xf32, #tpu.memory_space<vmem>>, vector<8x128xf32>,
    } else {
    }
    %c0 = arith.constant 0 : index
    %c0_1 = arith.constant 0 : index
    %3 = vector.load %arg20[%c0, %c0_1] : memref<8x128xf32, #tpu.memory_space<vmem>>, vector<8x128xf32>
    %4 = arith.truncf %3 : vector<8x128xf32> to vector<8x128xbf16>
    %c0_2 = arith.constant 0 : index
    %c0_3 = arith.constant 0 : index
    %c0_4 = arith.constant 0 : index
    %5 = vector.load %arg6[%c0_2, %c0_3, %c0_4] : memref<1x128x384xbf16, #tpu.memory_space<vmem>>, vector<1x128x384xbf16>
    %6 = vector.shape_cast %5 : vector<1x128x384xbf16> to vector<128x384xbf16>
    %cst = arith.constant dense<0.000000e+00> : vector<8x384xf32>
    %7 = tpu.matmul %4, %6, %cst {dimension_numbers = #tpu.dot_dimension_numbers<[1], [0], [0], [1], [0, 0, 1, 1], [], []>} : vector<8x128xbf16>, vector<128x384xbf16>, vector<8x384xf32> -> vector<8x384xf32>
    %c0_5 = arith.constant 0 : index
    %c0_6 = arith.constant 0 : index
    %c0_7 = arith.constant 0 : index
    %8 = vector.load %arg7[%c0_5, %c0_6, %c0_7] : memref<1x1x384xf32, #tpu.memory_space<vmem>>, vector<1x1x384xf32>
    %9 = vector.shape_cast %8 : vector<1x1x384xf32> to vector<1x384xf32>
    %10 = vector.broadcast %9 : vector<1x384xf32> to vector<8x384xf32>
    %11 = arith.addf %7, %10 : vector<8x384xf32>
    %cst_8 = arith.constant 0.000000e+00 : f32
    %12 = vector.broadcast %cst_8 : f32 to vector<8x128xf32>
    %13 = vector.extract_strided_slice %11 {offsets = [0, 0], sizes = [8, 16], strides = [1, 1]} : vector<8x384xf32> to vector<8x16xf32>
    %14 = arith.truncf %13 : vector<8x16xf32> to vector<8x16xbf16>
    %15 = vector.extract_strided_slice %11 {offsets = [0, 128], sizes = [8, 16], strides = [1, 1]} : vector<8x384xf32> to vector<8x16xf32>
    %16 = arith.truncf %15 : vector<8x16xf32> to vector<8x16xbf16>
    %17 = vector.extract_strided_slice %11 {offsets = [0, 256], sizes = [8, 16], strides = [1, 1]} : vector<8x384xf32> to vector<8x16xf32>
    %18 = arith.truncf %17 : vector<8x16xf32> to vector<8x16xbf16>
    %cst_9 = arith.constant dense<0.000000e+00> : vector<8x8xf32>
    %19 = tpu.matmul %14, %16, %cst_9 {dimension_numbers = #tpu.dot_dimension_numbers<[1], [1], [0], [0], [0, 0, 1, 0], [], []>} : vector<8x16xbf16>, vector<8x16xbf16>, vector<8x8xf32> -> vector<8x8xf32>
    %cst_10 = arith.constant 2.500000e-01 : f32
    %20 = vector.broadcast %cst_10 : f32 to vector<8x8xf32>
    %21 = arith.mulf %19, %20 : vector<8x8xf32>
    %cst_11 = arith.constant dense<0xFF800000> : vector<8xf32>
    %22 = vector.multi_reduction <maximumf>, %21, %cst_11 [1] : vector<8x8xf32> to vector<8xf32>
    %23 = vector.shape_cast %22 : vector<8xf32> to vector<8x1xf32>
    %24 = vector.broadcast %23 : vector<8x1xf32> to vector<8x8xf32>
    %25 = arith.subf %21, %24 : vector<8x8xf32>
    %26 = math.exp %25 : vector<8x8xf32>
    %cst_12 = arith.constant dense<0.000000e+00> : vector<8xf32>
    %27 = vector.multi_reduction <add>, %26, %cst_12 [1] : vector<8x8xf32> to vector<8xf32>
    %28 = vector.shape_cast %27 : vector<8xf32> to vector<8x1xf32>
    %29 = tpu.reciprocal %28 {approx = true} : vector<8x1xf32> -> vector<8x1xf32>
    %30 = vector.broadcast %29 : vector<8x1xf32> to vector<8x8xf32>
    %31 = arith.mulf %26, %30 : vector<8x8xf32>
    %32 = arith.truncf %31 : vector<8x8xf32> to vector<8x8xbf16>
    %cst_13 = arith.constant dense<0.000000e+00> : vector<8x16xf32>
    %33 = tpu.matmul %32, %18, %cst_13 {dimension_numbers = #tpu.dot_dimension_numbers<[1], [0], [0], [1], [0, 0, 1, 1], [], []>} : vector<8x8xbf16>, vector<8x16xbf16>, vector<8x16xf32> -> vector<8x16xf32>
    %34 = arith.truncf %33 : vector<8x16xf32> to vector<8x16xbf16>
    %c0_14 = arith.constant 0 : index
    %c0_15 = arith.constant 0 : index
    %c0_16 = arith.constant 0 : index
    %35 = vector.load %arg8[%c0_14, %c0_15, %c0_16] : memref<1x128x128xbf16, #tpu.memory_space<vmem>>, vector<1x16x128xbf16>
    %36 = vector.shape_cast %35 : vector<1x16x128xbf16> to vector<16x128xbf16>
    %cst_17 = arith.constant dense<0.000000e+00> : vector<8x128xf32>
    %37 = tpu.matmul %34, %36, %cst_17 {dimension_numbers = #tpu.dot_dimension_numbers<[1], [0], [0], [1], [0, 0, 1, 1], [], []>} : vector<8x16xbf16>, vector<16x128xbf16>, vector<8x128xf32> -> vector<8x128xf32>
    %38 = arith.addf %12, %37 : vector<8x128xf32>
    %39 = vector.extract_strided_slice %11 {offsets = [0, 16], sizes = [8, 16], strides = [1, 1]} : vector<8x384xf32> to vector<8x16xf32>
    %40 = arith.truncf %39 : vector<8x16xf32> to vector<8x16xbf16>
    %41 = vector.extract_strided_slice %11 {offsets = [0, 144], sizes = [8, 16], strides = [1, 1]} : vector<8x384xf32> to vector<8x16xf32>
    %42 = arith.truncf %41 : vector<8x16xf32> to vector<8x16xbf16>
    %43 = vector.extract_strided_slice %11 {offsets = [0, 272], sizes = [8, 16], strides = [1, 1]} : vector<8x384xf32> to vector<8x16xf32>
    %44 = arith.truncf %43 : vector<8x16xf32> to vector<8x16xbf16>
    %cst_18 = arith.constant dense<0.000000e+00> : vector<8x8xf32>
    %45 = tpu.matmul %40, %42, %cst_18 {dimension_numbers = #tpu.dot_dimension_numbers<[1], [1], [0], [0], [0, 0, 1, 0], [], []>} : vector<8x16xbf16>, vector<8x16xbf16>, vector<8x8xf32> -> vector<8x8xf32>
    %cst_19 = arith.constant 2.500000e-01 : f32
    %46 = vector.broadcast %cst_19 : f32 to vector<8x8xf32>
    %47 = arith.mulf %45, %46 : vector<8x8xf32>
    %cst_20 = arith.constant dense<0xFF800000> : vector<8xf32>
    %48 = vector.multi_reduction <maximumf>, %47, %cst_20 [1] : vector<8x8xf32> to vector<8xf32>
    %49 = vector.shape_cast %48 : vector<8xf32> to vector<8x1xf32>
    %50 = vector.broadcast %49 : vector<8x1xf32> to vector<8x8xf32>
    %51 = arith.subf %47, %50 : vector<8x8xf32>
    %52 = math.exp %51 : vector<8x8xf32>
    %cst_21 = arith.constant dense<0.000000e+00> : vector<8xf32>
    %53 = vector.multi_reduction <add>, %52, %cst_21 [1] : vector<8x8xf32> to vector<8xf32>
    %54 = vector.shape_cast %53 : vector<8xf32> to vector<8x1xf32>
    %55 = tpu.reciprocal %54 {approx = true} : vector<8x1xf32> -> vector<8x1xf32>
    %56 = vector.broadcast %55 : vector<8x1xf32> to vector<8x8xf32>
    %57 = arith.mulf %52, %56 : vector<8x8xf32>
    %58 = arith.truncf %57 : vector<8x8xf32> to vector<8x8xbf16>
    %cst_22 = arith.constant dense<0.000000e+00> : vector<8x16xf32>
    %59 = tpu.matmul %58, %44, %cst_22 {dimension_numbers = #tpu.dot_dimension_numbers<[1], [0], [0], [1], [0, 0, 1, 1], [], []>} : vector<8x8xbf16>, vector<8x16xbf16>, vector<8x16xf32> -> vector<8x16xf32>
    %60 = arith.truncf %59 : vector<8x16xf32> to vector<8x16xbf16>
    %c0_23 = arith.constant 0 : index
    %c16 = arith.constant 16 : index
    %c0_24 = arith.constant 0 : index
    %61 = vector.load %arg8[%c0_23, %c16, %c0_24] : memref<1x128x128xbf16, #tpu.memory_space<vmem>>, vector<1x16x128xbf16>
    %62 = vector.shape_cast %61 : vector<1x16x128xbf16> to vector<16x128xbf16>
    %cst_25 = arith.constant dense<0.000000e+00> : vector<8x128xf32>
    %63 = tpu.matmul %60, %62, %cst_25 {dimension_numbers = #tpu.dot_dimension_numbers<[1], [0], [0], [1], [0, 0, 1, 1], [], []>} : vector<8x16xbf16>, vector<16x128xbf16>, vector<8x128xf32> -> vector<8x128xf32>
    %64 = arith.addf %38, %63 : vector<8x128xf32>
    %65 = vector.extract_strided_slice %11 {offsets = [0, 32], sizes = [8, 16], strides = [1, 1]} : vector<8x384xf32> to vector<8x16xf32>
    %66 = arith.truncf %65 : vector<8x16xf32> to vector<8x16xbf16>
    %67 = vector.extract_strided_slice %11 {offsets = [0, 160], sizes = [8, 16], strides = [1, 1]} : vector<8x384xf32> to vector<8x16xf32>
    %68 = arith.truncf %67 : vector<8x16xf32> to vector<8x16xbf16>
    %69 = vector.extract_strided_slice %11 {offsets = [0, 288], sizes = [8, 16], strides = [1, 1]} : vector<8x384xf32> to vector<8x16xf32>
    %70 = arith.truncf %69 : vector<8x16xf32> to vector<8x16xbf16>
    %cst_26 = arith.constant dense<0.000000e+00> : vector<8x8xf32>
    %71 = tpu.matmul %66, %68, %cst_26 {dimension_numbers = #tpu.dot_dimension_numbers<[1], [1], [0], [0], [0, 0, 1, 0], [], []>} : vector<8x16xbf16>, vector<8x16xbf16>, vector<8x8xf32> -> vector<8x8xf32>
    %cst_27 = arith.constant 2.500000e-01 : f32
    %72 = vector.broadcast %cst_27 : f32 to vector<8x8xf32>
    %73 = arith.mulf %71, %72 : vector<8x8xf32>
    %cst_28 = arith.constant dense<0xFF800000> : vector<8xf32>
    %74 = vector.multi_reduction <maximumf>, %73, %cst_28 [1] : vector<8x8xf32> to vector<8xf32>
    %75 = vector.shape_cast %74 : vector<8xf32> to vector<8x1xf32>
    %76 = vector.broadcast %75 : vector<8x1xf32> to vector<8x8xf32>
    %77 = arith.subf %73, %76 : vector<8x8xf32>
    %78 = math.exp %77 : vector<8x8xf32>
    %cst_29 = arith.constant dense<0.000000e+00> : vector<8xf32>
    %79 = vector.multi_reduction <add>, %78, %cst_29 [1] : vector<8x8xf32> to vector<8xf32>
    %80 = vector.shape_cast %79 : vector<8xf32> to vector<8x1xf32>
    %81 = tpu.reciprocal %80 {approx = true} : vector<8x1xf32> -> vector<8x1xf32>
    %82 = vector.broadcast %81 : vector<8x1xf32> to vector<8x8xf32>
    %83 = arith.mulf %78, %82 : vector<8x8xf32>
    %84 = arith.truncf %83 : vector<8x8xf32> to vector<8x8xbf16>
    %cst_30 = arith.constant dense<0.000000e+00> : vector<8x16xf32>
    %85 = tpu.matmul %84, %70, %cst_30 {dimension_numbers = #tpu.dot_dimension_numbers<[1], [0], [0], [1], [0, 0, 1, 1], [], []>} : vector<8x8xbf16>, vector<8x16xbf16>, vector<8x16xf32> -> vector<8x16xf32>
    %86 = arith.truncf %85 : vector<8x16xf32> to vector<8x16xbf16>
    %c0_31 = arith.constant 0 : index
    %c32 = arith.constant 32 : index
    %c0_32 = arith.constant 0 : index
    %87 = vector.load %arg8[%c0_31, %c32, %c0_32] : memref<1x128x128xbf16, #tpu.memory_space<vmem>>, vector<1x16x128xbf16>
    %88 = vector.shape_cast %87 : vector<1x16x128xbf16> to vector<16x128xbf16>
    %cst_33 = arith.constant dense<0.000000e+00> : vector<8x128xf32>
    %89 = tpu.matmul %86, %88, %cst_33 {dimension_numbers = #tpu.dot_dimension_numbers<[1], [0], [0], [1], [0, 0, 1, 1], [], []>} : vector<8x16xbf16>, vector<16x128xbf16>, vector<8x128xf32> -> vector<8x128xf32>
    %90 = arith.addf %64, %89 : vector<8x128xf32>
    %91 = vector.extract_strided_slice %11 {offsets = [0, 48], sizes = [8, 16], strides = [1, 1]} : vector<8x384xf32> to vector<8x16xf32>
    %92 = arith.truncf %91 : vector<8x16xf32> to vector<8x16xbf16>
    %93 = vector.extract_strided_slice %11 {offsets = [0, 176], sizes = [8, 16], strides = [1, 1]} : vector<8x384xf32> to vector<8x16xf32>
    %94 = arith.truncf %93 : vector<8x16xf32> to vector<8x16xbf16>
    %95 = vector.extract_strided_slice %11 {offsets = [0, 304], sizes = [8, 16], strides = [1, 1]} : vector<8x384xf32> to vector<8x16xf32>
    %96 = arith.truncf %95 : vector<8x16xf32> to vector<8x16xbf16>
    %cst_34 = arith.constant dense<0.000000e+00> : vector<8x8xf32>
    %97 = tpu.matmul %92, %94, %cst_34 {dimension_numbers = #tpu.dot_dimension_numbers<[1], [1], [0], [0], [0, 0, 1, 0], [], []>} : vector<8x16xbf16>, vector<8x16xbf16>, vector<8x8xf32> -> vector<8x8xf32>
    %cst_35 = arith.constant 2.500000e-01 : f32
    %98 = vector.broadcast %cst_35 : f32 to vector<8x8xf32>
    %99 = arith.mulf %97, %98 : vector<8x8xf32>
    %cst_36 = arith.constant dense<0xFF800000> : vector<8xf32>
    %100 = vector.multi_reduction <maximumf>, %99, %cst_36 [1] : vector<8x8xf32> to vector<8xf32>
    %101 = vector.shape_cast %100 : vector<8xf32> to vector<8x1xf32>
    %102 = vector.broadcast %101 : vector<8x1xf32> to vector<8x8xf32>
    %103 = arith.subf %99, %102 : vector<8x8xf32>
    %104 = math.exp %103 : vector<8x8xf32>
    %cst_37 = arith.constant dense<0.000000e+00> : vector<8xf32>
    %105 = vector.multi_reduction <add>, %104, %cst_37 [1] : vector<8x8xf32> to vector<8xf32>
    %106 = vector.shape_cast %105 : vector<8xf32> to vector<8x1xf32>
    %107 = tpu.reciprocal %106 {approx = true} : vector<8x1xf32> -> vector<8x1xf32>
    %108 = vector.broadcast %107 : vector<8x1xf32> to vector<8x8xf32>
    %109 = arith.mulf %104, %108 : vector<8x8xf32>
    %110 = arith.truncf %109 : vector<8x8xf32> to vector<8x8xbf16>
    %cst_38 = arith.constant dense<0.000000e+00> : vector<8x16xf32>
    %111 = tpu.matmul %110, %96, %cst_38 {dimension_numbers = #tpu.dot_dimension_numbers<[1], [0], [0], [1], [0, 0, 1, 1], [], []>} : vector<8x8xbf16>, vector<8x16xbf16>, vector<8x16xf32> -> vector<8x16xf32>
    %112 = arith.truncf %111 : vector<8x16xf32> to vector<8x16xbf16>
    %c0_39 = arith.constant 0 : index
    %c48 = arith.constant 48 : index
    %c0_40 = arith.constant 0 : index
    %113 = vector.load %arg8[%c0_39, %c48, %c0_40] : memref<1x128x128xbf16, #tpu.memory_space<vmem>>, vector<1x16x128xbf16>
    %114 = vector.shape_cast %113 : vector<1x16x128xbf16> to vector<16x128xbf16>
    %cst_41 = arith.constant dense<0.000000e+00> : vector<8x128xf32>
    %115 = tpu.matmul %112, %114, %cst_41 {dimension_numbers = #tpu.dot_dimension_numbers<[1], [0], [0], [1], [0, 0, 1, 1], [], []>} : vector<8x16xbf16>, vector<16x128xbf16>, vector<8x128xf32> -> vector<8x128xf32>
    %116 = arith.addf %90, %115 : vector<8x128xf32>
    %117 = vector.extract_strided_slice %11 {offsets = [0, 64], sizes = [8, 16], strides = [1, 1]} : vector<8x384xf32> to vector<8x16xf32>
    %118 = arith.truncf %117 : vector<8x16xf32> to vector<8x16xbf16>
    %119 = vector.extract_strided_slice %11 {offsets = [0, 192], sizes = [8, 16], strides = [1, 1]} : vector<8x384xf32> to vector<8x16xf32>
    %120 = arith.truncf %119 : vector<8x16xf32> to vector<8x16xbf16>
    %121 = vector.extract_strided_slice %11 {offsets = [0, 320], sizes = [8, 16], strides = [1, 1]} : vector<8x384xf32> to vector<8x16xf32>
    %122 = arith.truncf %121 : vector<8x16xf32> to vector<8x16xbf16>
    %cst_42 = arith.constant dense<0.000000e+00> : vector<8x8xf32>
    %123 = tpu.matmul %118, %120, %cst_42 {dimension_numbers = #tpu.dot_dimension_numbers<[1], [1], [0], [0], [0, 0, 1, 0], [], []>} : vector<8x16xbf16>, vector<8x16xbf16>, vector<8x8xf32> -> vector<8x8xf32>
    %cst_43 = arith.constant 2.500000e-01 : f32
    %124 = vector.broadcast %cst_43 : f32 to vector<8x8xf32>
    %125 = arith.mulf %123, %124 : vector<8x8xf32>
    %cst_44 = arith.constant dense<0xFF800000> : vector<8xf32>
    %126 = vector.multi_reduction <maximumf>, %125, %cst_44 [1] : vector<8x8xf32> to vector<8xf32>
    %127 = vector.shape_cast %126 : vector<8xf32> to vector<8x1xf32>
    %128 = vector.broadcast %127 : vector<8x1xf32> to vector<8x8xf32>
    %129 = arith.subf %125, %128 : vector<8x8xf32>
    %130 = math.exp %129 : vector<8x8xf32>
    %cst_45 = arith.constant dense<0.000000e+00> : vector<8xf32>
    %131 = vector.multi_reduction <add>, %130, %cst_45 [1] : vector<8x8xf32> to vector<8xf32>
    %132 = vector.shape_cast %131 : vector<8xf32> to vector<8x1xf32>
    %133 = tpu.reciprocal %132 {approx = true} : vector<8x1xf32> -> vector<8x1xf32>
    %134 = vector.broadcast %133 : vector<8x1xf32> to vector<8x8xf32>
    %135 = arith.mulf %130, %134 : vector<8x8xf32>
    %136 = arith.truncf %135 : vector<8x8xf32> to vector<8x8xbf16>
    %cst_46 = arith.constant dense<0.000000e+00> : vector<8x16xf32>
    %137 = tpu.matmul %136, %122, %cst_46 {dimension_numbers = #tpu.dot_dimension_numbers<[1], [0], [0], [1], [0, 0, 1, 1], [], []>} : vector<8x8xbf16>, vector<8x16xbf16>, vector<8x16xf32> -> vector<8x16xf32>
    %138 = arith.truncf %137 : vector<8x16xf32> to vector<8x16xbf16>
    %c0_47 = arith.constant 0 : index
    %c64 = arith.constant 64 : index
    %c0_48 = arith.constant 0 : index
    %139 = vector.load %arg8[%c0_47, %c64, %c0_48] : memref<1x128x128xbf16, #tpu.memory_space<vmem>>, vector<1x16x128xbf16>
    %140 = vector.shape_cast %139 : vector<1x16x128xbf16> to vector<16x128xbf16>
    %cst_49 = arith.constant dense<0.000000e+00> : vector<8x128xf32>
    %141 = tpu.matmul %138, %140, %cst_49 {dimension_numbers = #tpu.dot_dimension_numbers<[1], [0], [0], [1], [0, 0, 1, 1], [], []>} : vector<8x16xbf16>, vector<16x128xbf16>, vector<8x128xf32> -> vector<8x128xf32>
    %142 = arith.addf %116, %141 : vector<8x128xf32>
    %143 = vector.extract_strided_slice %11 {offsets = [0, 80], sizes = [8, 16], strides = [1, 1]} : vector<8x384xf32> to vector<8x16xf32>
    %144 = arith.truncf %143 : vector<8x16xf32> to vector<8x16xbf16>
    %145 = vector.extract_strided_slice %11 {offsets = [0, 208], sizes = [8, 16], strides = [1, 1]} : vector<8x384xf32> to vector<8x16xf32>
    %146 = arith.truncf %145 : vector<8x16xf32> to vector<8x16xbf16>
    %147 = vector.extract_strided_slice %11 {offsets = [0, 336], sizes = [8, 16], strides = [1, 1]} : vector<8x384xf32> to vector<8x16xf32>
    %148 = arith.truncf %147 : vector<8x16xf32> to vector<8x16xbf16>
    %cst_50 = arith.constant dense<0.000000e+00> : vector<8x8xf32>
    %149 = tpu.matmul %144, %146, %cst_50 {dimension_numbers = #tpu.dot_dimension_numbers<[1], [1], [0], [0], [0, 0, 1, 0], [], []>} : vector<8x16xbf16>, vector<8x16xbf16>, vector<8x8xf32> -> vector<8x8xf32>
    %cst_51 = arith.constant 2.500000e-01 : f32
    %150 = vector.broadcast %cst_51 : f32 to vector<8x8xf32>
    %151 = arith.mulf %149, %150 : vector<8x8xf32>
    %cst_52 = arith.constant dense<0xFF800000> : vector<8xf32>
    %152 = vector.multi_reduction <maximumf>, %151, %cst_52 [1] : vector<8x8xf32> to vector<8xf32>
    %153 = vector.shape_cast %152 : vector<8xf32> to vector<8x1xf32>
    %154 = vector.broadcast %153 : vector<8x1xf32> to vector<8x8xf32>
    %155 = arith.subf %151, %154 : vector<8x8xf32>
    %156 = math.exp %155 : vector<8x8xf32>
    %cst_53 = arith.constant dense<0.000000e+00> : vector<8xf32>
    %157 = vector.multi_reduction <add>, %156, %cst_53 [1] : vector<8x8xf32> to vector<8xf32>
    %158 = vector.shape_cast %157 : vector<8xf32> to vector<8x1xf32>
    %159 = tpu.reciprocal %158 {approx = true} : vector<8x1xf32> -> vector<8x1xf32>
    %160 = vector.broadcast %159 : vector<8x1xf32> to vector<8x8xf32>
    %161 = arith.mulf %156, %160 : vector<8x8xf32>
    %162 = arith.truncf %161 : vector<8x8xf32> to vector<8x8xbf16>
    %cst_54 = arith.constant dense<0.000000e+00> : vector<8x16xf32>
    %163 = tpu.matmul %162, %148, %cst_54 {dimension_numbers = #tpu.dot_dimension_numbers<[1], [0], [0], [1], [0, 0, 1, 1], [], []>} : vector<8x8xbf16>, vector<8x16xbf16>, vector<8x16xf32> -> vector<8x16xf32>
    %164 = arith.truncf %163 : vector<8x16xf32> to vector<8x16xbf16>
    %c0_55 = arith.constant 0 : index
    %c80 = arith.constant 80 : index
    %c0_56 = arith.constant 0 : index
    %165 = vector.load %arg8[%c0_55, %c80, %c0_56] : memref<1x128x128xbf16, #tpu.memory_space<vmem>>, vector<1x16x128xbf16>
    %166 = vector.shape_cast %165 : vector<1x16x128xbf16> to vector<16x128xbf16>
    %cst_57 = arith.constant dense<0.000000e+00> : vector<8x128xf32>
    %167 = tpu.matmul %164, %166, %cst_57 {dimension_numbers = #tpu.dot_dimension_numbers<[1], [0], [0], [1], [0, 0, 1, 1], [], []>} : vector<8x16xbf16>, vector<16x128xbf16>, vector<8x128xf32> -> vector<8x128xf32>
    %168 = arith.addf %142, %167 : vector<8x128xf32>
    %169 = vector.extract_strided_slice %11 {offsets = [0, 96], sizes = [8, 16], strides = [1, 1]} : vector<8x384xf32> to vector<8x16xf32>
    %170 = arith.truncf %169 : vector<8x16xf32> to vector<8x16xbf16>
    %171 = vector.extract_strided_slice %11 {offsets = [0, 224], sizes = [8, 16], strides = [1, 1]} : vector<8x384xf32> to vector<8x16xf32>
    %172 = arith.truncf %171 : vector<8x16xf32> to vector<8x16xbf16>
    %173 = vector.extract_strided_slice %11 {offsets = [0, 352], sizes = [8, 16], strides = [1, 1]} : vector<8x384xf32> to vector<8x16xf32>
    %174 = arith.truncf %173 : vector<8x16xf32> to vector<8x16xbf16>
    %cst_58 = arith.constant dense<0.000000e+00> : vector<8x8xf32>
    %175 = tpu.matmul %170, %172, %cst_58 {dimension_numbers = #tpu.dot_dimension_numbers<[1], [1], [0], [0], [0, 0, 1, 0], [], []>} : vector<8x16xbf16>, vector<8x16xbf16>, vector<8x8xf32> -> vector<8x8xf32>
    %cst_59 = arith.constant 2.500000e-01 : f32
    %176 = vector.broadcast %cst_59 : f32 to vector<8x8xf32>
    %177 = arith.mulf %175, %176 : vector<8x8xf32>
    %cst_60 = arith.constant dense<0xFF800000> : vector<8xf32>
    %178 = vector.multi_reduction <maximumf>, %177, %cst_60 [1] : vector<8x8xf32> to vector<8xf32>
    %179 = vector.shape_cast %178 : vector<8xf32> to vector<8x1xf32>
    %180 = vector.broadcast %179 : vector<8x1xf32> to vector<8x8xf32>
    %181 = arith.subf %177, %180 : vector<8x8xf32>
    %182 = math.exp %181 : vector<8x8xf32>
    %cst_61 = arith.constant dense<0.000000e+00> : vector<8xf32>
    %183 = vector.multi_reduction <add>, %182, %cst_61 [1] : vector<8x8xf32> to vector<8xf32>
    %184 = vector.shape_cast %183 : vector<8xf32> to vector<8x1xf32>
    %185 = tpu.reciprocal %184 {approx = true} : vector<8x1xf32> -> vector<8x1xf32>
    %186 = vector.broadcast %185 : vector<8x1xf32> to vector<8x8xf32>
    %187 = arith.mulf %182, %186 : vector<8x8xf32>
    %188 = arith.truncf %187 : vector<8x8xf32> to vector<8x8xbf16>
    %cst_62 = arith.constant dense<0.000000e+00> : vector<8x16xf32>
    %189 = tpu.matmul %188, %174, %cst_62 {dimension_numbers = #tpu.dot_dimension_numbers<[1], [0], [0], [1], [0, 0, 1, 1], [], []>} : vector<8x8xbf16>, vector<8x16xbf16>, vector<8x16xf32> -> vector<8x16xf32>
    %190 = arith.truncf %189 : vector<8x16xf32> to vector<8x16xbf16>
    %c0_63 = arith.constant 0 : index
    %c96 = arith.constant 96 : index
    %c0_64 = arith.constant 0 : index
    %191 = vector.load %arg8[%c0_63, %c96, %c0_64] : memref<1x128x128xbf16, #tpu.memory_space<vmem>>, vector<1x16x128xbf16>
    %192 = vector.shape_cast %191 : vector<1x16x128xbf16> to vector<16x128xbf16>
    %cst_65 = arith.constant dense<0.000000e+00> : vector<8x128xf32>
    %193 = tpu.matmul %190, %192, %cst_65 {dimension_numbers = #tpu.dot_dimension_numbers<[1], [0], [0], [1], [0, 0, 1, 1], [], []>} : vector<8x16xbf16>, vector<16x128xbf16>, vector<8x128xf32> -> vector<8x128xf32>
    %194 = arith.addf %168, %193 : vector<8x128xf32>
    %195 = vector.extract_strided_slice %11 {offsets = [0, 112], sizes = [8, 16], strides = [1, 1]} : vector<8x384xf32> to vector<8x16xf32>
    %196 = arith.truncf %195 : vector<8x16xf32> to vector<8x16xbf16>
    %197 = vector.extract_strided_slice %11 {offsets = [0, 240], sizes = [8, 16], strides = [1, 1]} : vector<8x384xf32> to vector<8x16xf32>
    %198 = arith.truncf %197 : vector<8x16xf32> to vector<8x16xbf16>
    %199 = vector.extract_strided_slice %11 {offsets = [0, 368], sizes = [8, 16], strides = [1, 1]} : vector<8x384xf32> to vector<8x16xf32>
    %200 = arith.truncf %199 : vector<8x16xf32> to vector<8x16xbf16>
    %cst_66 = arith.constant dense<0.000000e+00> : vector<8x8xf32>
    %201 = tpu.matmul %196, %198, %cst_66 {dimension_numbers = #tpu.dot_dimension_numbers<[1], [1], [0], [0], [0, 0, 1, 0], [], []>} : vector<8x16xbf16>, vector<8x16xbf16>, vector<8x8xf32> -> vector<8x8xf32>
    %cst_67 = arith.constant 2.500000e-01 : f32
    %202 = vector.broadcast %cst_67 : f32 to vector<8x8xf32>
    %203 = arith.mulf %201, %202 : vector<8x8xf32>
    %cst_68 = arith.constant dense<0xFF800000> : vector<8xf32>
    %204 = vector.multi_reduction <maximumf>, %203, %cst_68 [1] : vector<8x8xf32> to vector<8xf32>
    %205 = vector.shape_cast %204 : vector<8xf32> to vector<8x1xf32>
    %206 = vector.broadcast %205 : vector<8x1xf32> to vector<8x8xf32>
    %207 = arith.subf %203, %206 : vector<8x8xf32>
    %208 = math.exp %207 : vector<8x8xf32>
    %cst_69 = arith.constant dense<0.000000e+00> : vector<8xf32>
    %209 = vector.multi_reduction <add>, %208, %cst_69 [1] : vector<8x8xf32> to vector<8xf32>
    %210 = vector.shape_cast %209 : vector<8xf32> to vector<8x1xf32>
    %211 = tpu.reciprocal %210 {approx = true} : vector<8x1xf32> -> vector<8x1xf32>
    %212 = vector.broadcast %211 : vector<8x1xf32> to vector<8x8xf32>
    %213 = arith.mulf %208, %212 : vector<8x8xf32>
    %214 = arith.truncf %213 : vector<8x8xf32> to vector<8x8xbf16>
    %cst_70 = arith.constant dense<0.000000e+00> : vector<8x16xf32>
    %215 = tpu.matmul %214, %200, %cst_70 {dimension_numbers = #tpu.dot_dimension_numbers<[1], [0], [0], [1], [0, 0, 1, 1], [], []>} : vector<8x8xbf16>, vector<8x16xbf16>, vector<8x16xf32> -> vector<8x16xf32>
    %216 = arith.truncf %215 : vector<8x16xf32> to vector<8x16xbf16>
    %c0_71 = arith.constant 0 : index
    %c112 = arith.constant 112 : index
    %c0_72 = arith.constant 0 : index
    %217 = vector.load %arg8[%c0_71, %c112, %c0_72] : memref<1x128x128xbf16, #tpu.memory_space<vmem>>, vector<1x16x128xbf16>
    %218 = vector.shape_cast %217 : vector<1x16x128xbf16> to vector<16x128xbf16>
    %cst_73 = arith.constant dense<0.000000e+00> : vector<8x128xf32>
    %219 = tpu.matmul %216, %218, %cst_73 {dimension_numbers = #tpu.dot_dimension_numbers<[1], [0], [0], [1], [0, 0, 1, 1], [], []>} : vector<8x16xbf16>, vector<16x128xbf16>, vector<8x128xf32> -> vector<8x128xf32>
    %220 = arith.addf %194, %219 : vector<8x128xf32>
    %c0_74 = arith.constant 0 : index
    %c0_75 = arith.constant 0 : index
    %c0_76 = arith.constant 0 : index
    %221 = vector.load %arg9[%c0_74, %c0_75, %c0_76] : memref<1x1x128xf32, #tpu.memory_space<vmem>>, vector<1x1x128xf32>
    %222 = vector.shape_cast %221 : vector<1x1x128xf32> to vector<1x128xf32>
    %223 = vector.broadcast %222 : vector<1x128xf32> to vector<8x128xf32>
    %224 = arith.addf %220, %223 : vector<8x128xf32>
    %225 = arith.addf %3, %224 : vector<8x128xf32>
    %cst_77 = arith.constant dense<0.000000e+00> : vector<8xf32>
    %226 = vector.multi_reduction <add>, %225, %cst_77 [1] : vector<8x128xf32> to vector<8xf32>
    %227 = vector.shape_cast %226 : vector<8xf32> to vector<8x1xf32>
    %cst_78 = arith.constant 1.280000e+02 : f32
    %228 = vector.broadcast %cst_78 : f32 to vector<8x1xf32>
    %229 = arith.divf %227, %228 : vector<8x1xf32>
    %230 = vector.broadcast %229 : vector<8x1xf32> to vector<8x128xf32>
    %231 = arith.subf %225, %230 : vector<8x128xf32>
    %232 = arith.mulf %231, %231 : vector<8x128xf32>
    %cst_79 = arith.constant dense<0.000000e+00> : vector<8xf32>
    %233 = vector.multi_reduction <add>, %232, %cst_79 [1] : vector<8x128xf32> to vector<8xf32>
    %234 = vector.shape_cast %233 : vector<8xf32> to vector<8x1xf32>
    %cst_80 = arith.constant 1.280000e+02 : f32
    %235 = vector.broadcast %cst_80 : f32 to vector<8x1xf32>
    %236 = arith.divf %234, %235 : vector<8x1xf32>
    %237 = vector.broadcast %229 : vector<8x1xf32> to vector<8x128xf32>
    %238 = arith.subf %225, %237 : vector<8x128xf32>
    %cst_81 = arith.constant 9.99999974E-6 : f32
    %239 = vector.broadcast %cst_81 : f32 to vector<8x1xf32>
    %240 = arith.addf %236, %239 : vector<8x1xf32>
    %241 = math.rsqrt %240 : vector<8x1xf32>
    %242 = vector.broadcast %241 : vector<8x1xf32> to vector<8x128xf32>
    %243 = arith.mulf %238, %242 : vector<8x128xf32>
    %c0_82 = arith.constant 0 : index
    %c0_83 = arith.constant 0 : index
    %c0_84 = arith.constant 0 : index
    %244 = vector.load %arg10[%c0_82, %c0_83, %c0_84] : memref<1x1x128xf32, #tpu.memory_space<vmem>>, vector<1x1x128xf32>
    %245 = vector.shape_cast %244 : vector<1x1x128xf32> to vector<1x128xf32>
    %246 = vector.broadcast %245 : vector<1x128xf32> to vector<8x128xf32>
    %247 = arith.mulf %243, %246 : vector<8x128xf32>
    %c0_85 = arith.constant 0 : index
    %c0_86 = arith.constant 0 : index
    %c0_87 = arith.constant 0 : index
    %248 = vector.load %arg11[%c0_85, %c0_86, %c0_87] : memref<1x1x128xf32, #tpu.memory_space<vmem>>, vector<1x1x128xf32>
    %249 = vector.shape_cast %248 : vector<1x1x128xf32> to vector<1x128xf32>
    %250 = vector.broadcast %249 : vector<1x128xf32> to vector<8x128xf32>
    %251 = arith.addf %247, %250 : vector<8x128xf32>
    %252 = arith.truncf %251 : vector<8x128xf32> to vector<8x128xbf16>
    %cst_88 = arith.constant 0.000000e+00 : f32
    %253 = vector.broadcast %cst_88 : f32 to vector<8x128xf32>
    %c0_89 = arith.constant 0 : index
    %c0_90 = arith.constant 0 : index
    %c0_91 = arith.constant 0 : index
    %254 = vector.load %arg12[%c0_89, %c0_90, %c0_91] : memref<1x128x2048xbf16, #tpu.memory_space<vmem>>, vector<1x128x512xbf16>
    %255 = vector.shape_cast %254 : vector<1x128x512xbf16> to vector<128x512xbf16>
    %cst_92 = arith.constant dense<0.000000e+00> : vector<8x512xf32>
    %256 = tpu.matmul %252, %255, %cst_92 {dimension_numbers = #tpu.dot_dimension_numbers<[1], [0], [0], [1], [0, 0, 1, 1], [], []>} : vector<8x128xbf16>, vector<128x512xbf16>, vector<8x512xf32> -> vector<8x512xf32>
    %c0_93 = arith.constant 0 : index
    %c0_94 = arith.constant 0 : index
    %c0_95 = arith.constant 0 : index
    %257 = vector.load %arg13[%c0_93, %c0_94, %c0_95] : memref<1x1x2048xf32, #tpu.memory_space<vmem>>, vector<1x1x512xf32>
    %258 = vector.shape_cast %257 : vector<1x1x512xf32> to vector<1x512xf32>
    %259 = vector.broadcast %258 : vector<1x512xf32> to vector<8x512xf32>
    %260 = arith.addf %256, %259 : vector<8x512xf32>
    %cst_96 = arith.constant 0.000000e+00 : f32
    %261 = vector.broadcast %cst_96 : f32 to vector<8x512xf32>
    %262 = arith.maximumf %260, %261 : vector<8x512xf32>
    %263 = arith.truncf %262 : vector<8x512xf32> to vector<8x512xbf16>
    %c0_97 = arith.constant 0 : index
    %c0_98 = arith.constant 0 : index
    %c0_99 = arith.constant 0 : index
    %264 = vector.load %arg14[%c0_97, %c0_98, %c0_99] : memref<1x2048x128xbf16, #tpu.memory_space<vmem>>, vector<1x512x128xbf16>
    %265 = vector.shape_cast %264 : vector<1x512x128xbf16> to vector<512x128xbf16>
    %cst_100 = arith.constant dense<0.000000e+00> : vector<8x128xf32>
    %266 = tpu.matmul %263, %265, %cst_100 {dimension_numbers = #tpu.dot_dimension_numbers<[1], [0], [0], [1], [0, 0, 1, 1], [], []>} : vector<8x512xbf16>, vector<512x128xbf16>, vector<8x128xf32> -> vector<8x128xf32>
    %267 = arith.addf %253, %266 : vector<8x128xf32>
    %c0_101 = arith.constant 0 : index
    %c0_102 = arith.constant 0 : index
    %c512 = arith.constant 512 : index
    %268 = vector.load %arg12[%c0_101, %c0_102, %c512] : memref<1x128x2048xbf16, #tpu.memory_space<vmem>>, vector<1x128x512xbf16>
    %269 = vector.shape_cast %268 : vector<1x128x512xbf16> to vector<128x512xbf16>
    %cst_103 = arith.constant dense<0.000000e+00> : vector<8x512xf32>
    %270 = tpu.matmul %252, %269, %cst_103 {dimension_numbers = #tpu.dot_dimension_numbers<[1], [0], [0], [1], [0, 0, 1, 1], [], []>} : vector<8x128xbf16>, vector<128x512xbf16>, vector<8x512xf32> -> vector<8x512xf32>
    %c0_104 = arith.constant 0 : index
    %c0_105 = arith.constant 0 : index
    %c512_106 = arith.constant 512 : index
    %271 = vector.load %arg13[%c0_104, %c0_105, %c512_106] : memref<1x1x2048xf32, #tpu.memory_space<vmem>>, vector<1x1x512xf32>
    %272 = vector.shape_cast %271 : vector<1x1x512xf32> to vector<1x512xf32>
    %273 = vector.broadcast %272 : vector<1x512xf32> to vector<8x512xf32>
    %274 = arith.addf %270, %273 : vector<8x512xf32>
    %cst_107 = arith.constant 0.000000e+00 : f32
    %275 = vector.broadcast %cst_107 : f32 to vector<8x512xf32>
    %276 = arith.maximumf %274, %275 : vector<8x512xf32>
    %277 = arith.truncf %276 : vector<8x512xf32> to vector<8x512xbf16>
    %c0_108 = arith.constant 0 : index
    %c512_109 = arith.constant 512 : index
    %c0_110 = arith.constant 0 : index
    %278 = vector.load %arg14[%c0_108, %c512_109, %c0_110] : memref<1x2048x128xbf16, #tpu.memory_space<vmem>>, vector<1x512x128xbf16>
    %279 = vector.shape_cast %278 : vector<1x512x128xbf16> to vector<512x128xbf16>
    %cst_111 = arith.constant dense<0.000000e+00> : vector<8x128xf32>
    %280 = tpu.matmul %277, %279, %cst_111 {dimension_numbers = #tpu.dot_dimension_numbers<[1], [0], [0], [1], [0, 0, 1, 1], [], []>} : vector<8x512xbf16>, vector<512x128xbf16>, vector<8x128xf32> -> vector<8x128xf32>
    %281 = arith.addf %267, %280 : vector<8x128xf32>
    %c0_112 = arith.constant 0 : index
    %c0_113 = arith.constant 0 : index
    %c1024 = arith.constant 1024 : index
    %282 = vector.load %arg12[%c0_112, %c0_113, %c1024] : memref<1x128x2048xbf16, #tpu.memory_space<vmem>>, vector<1x128x512xbf16>
    %283 = vector.shape_cast %282 : vector<1x128x512xbf16> to vector<128x512xbf16>
    %cst_114 = arith.constant dense<0.000000e+00> : vector<8x512xf32>
    %284 = tpu.matmul %252, %283, %cst_114 {dimension_numbers = #tpu.dot_dimension_numbers<[1], [0], [0], [1], [0, 0, 1, 1], [], []>} : vector<8x128xbf16>, vector<128x512xbf16>, vector<8x512xf32> -> vector<8x512xf32>
    %c0_115 = arith.constant 0 : index
    %c0_116 = arith.constant 0 : index
    %c1024_117 = arith.constant 1024 : index
    %285 = vector.load %arg13[%c0_115, %c0_116, %c1024_117] : memref<1x1x2048xf32, #tpu.memory_space<vmem>>, vector<1x1x512xf32>
    %286 = vector.shape_cast %285 : vector<1x1x512xf32> to vector<1x512xf32>
    %287 = vector.broadcast %286 : vector<1x512xf32> to vector<8x512xf32>
    %288 = arith.addf %284, %287 : vector<8x512xf32>
    %cst_118 = arith.constant 0.000000e+00 : f32
    %289 = vector.broadcast %cst_118 : f32 to vector<8x512xf32>
    %290 = arith.maximumf %288, %289 : vector<8x512xf32>
    %291 = arith.truncf %290 : vector<8x512xf32> to vector<8x512xbf16>
    %c0_119 = arith.constant 0 : index
    %c1024_120 = arith.constant 1024 : index
    %c0_121 = arith.constant 0 : index
    %292 = vector.load %arg14[%c0_119, %c1024_120, %c0_121] : memref<1x2048x128xbf16, #tpu.memory_space<vmem>>, vector<1x512x128xbf16>
    %293 = vector.shape_cast %292 : vector<1x512x128xbf16> to vector<512x128xbf16>
    %cst_122 = arith.constant dense<0.000000e+00> : vector<8x128xf32>
    %294 = tpu.matmul %291, %293, %cst_122 {dimension_numbers = #tpu.dot_dimension_numbers<[1], [0], [0], [1], [0, 0, 1, 1], [], []>} : vector<8x512xbf16>, vector<512x128xbf16>, vector<8x128xf32> -> vector<8x128xf32>
    %295 = arith.addf %281, %294 : vector<8x128xf32>
    %c0_123 = arith.constant 0 : index
    %c0_124 = arith.constant 0 : index
    %c1536 = arith.constant 1536 : index
    %296 = vector.load %arg12[%c0_123, %c0_124, %c1536] : memref<1x128x2048xbf16, #tpu.memory_space<vmem>>, vector<1x128x512xbf16>
    %297 = vector.shape_cast %296 : vector<1x128x512xbf16> to vector<128x512xbf16>
    %cst_125 = arith.constant dense<0.000000e+00> : vector<8x512xf32>
    %298 = tpu.matmul %252, %297, %cst_125 {dimension_numbers = #tpu.dot_dimension_numbers<[1], [0], [0], [1], [0, 0, 1, 1], [], []>} : vector<8x128xbf16>, vector<128x512xbf16>, vector<8x512xf32> -> vector<8x512xf32>
    %c0_126 = arith.constant 0 : index
    %c0_127 = arith.constant 0 : index
    %c1536_128 = arith.constant 1536 : index
    %299 = vector.load %arg13[%c0_126, %c0_127, %c1536_128] : memref<1x1x2048xf32, #tpu.memory_space<vmem>>, vector<1x1x512xf32>
    %300 = vector.shape_cast %299 : vector<1x1x512xf32> to vector<1x512xf32>
    %301 = vector.broadcast %300 : vector<1x512xf32> to vector<8x512xf32>
    %302 = arith.addf %298, %301 : vector<8x512xf32>
    %cst_129 = arith.constant 0.000000e+00 : f32
    %303 = vector.broadcast %cst_129 : f32 to vector<8x512xf32>
    %304 = arith.maximumf %302, %303 : vector<8x512xf32>
    %305 = arith.truncf %304 : vector<8x512xf32> to vector<8x512xbf16>
    %c0_130 = arith.constant 0 : index
    %c1536_131 = arith.constant 1536 : index
    %c0_132 = arith.constant 0 : index
    %306 = vector.load %arg14[%c0_130, %c1536_131, %c0_132] : memref<1x2048x128xbf16, #tpu.memory_space<vmem>>, vector<1x512x128xbf16>
    %307 = vector.shape_cast %306 : vector<1x512x128xbf16> to vector<512x128xbf16>
    %cst_133 = arith.constant dense<0.000000e+00> : vector<8x128xf32>
    %308 = tpu.matmul %305, %307, %cst_133 {dimension_numbers = #tpu.dot_dimension_numbers<[1], [0], [0], [1], [0, 0, 1, 1], [], []>} : vector<8x512xbf16>, vector<512x128xbf16>, vector<8x128xf32> -> vector<8x128xf32>
    %309 = arith.addf %295, %308 : vector<8x128xf32>
    %c0_134 = arith.constant 0 : index
    %c0_135 = arith.constant 0 : index
    %c0_136 = arith.constant 0 : index
    %310 = vector.load %arg15[%c0_134, %c0_135, %c0_136] : memref<1x1x128xf32, #tpu.memory_space<vmem>>, vector<1x1x128xf32>
    %311 = vector.shape_cast %310 : vector<1x1x128xf32> to vector<1x128xf32>
    %312 = vector.broadcast %311 : vector<1x128xf32> to vector<8x128xf32>
    %313 = arith.addf %309, %312 : vector<8x128xf32>
    %314 = arith.addf %251, %313 : vector<8x128xf32>
    %cst_137 = arith.constant dense<0.000000e+00> : vector<8xf32>
    %315 = vector.multi_reduction <add>, %314, %cst_137 [1] : vector<8x128xf32> to vector<8xf32>
    %316 = vector.shape_cast %315 : vector<8xf32> to vector<8x1xf32>
    %cst_138 = arith.constant 1.280000e+02 : f32
    %317 = vector.broadcast %cst_138 : f32 to vector<8x1xf32>
    %318 = arith.divf %316, %317 : vector<8x1xf32>
    %319 = vector.broadcast %318 : vector<8x1xf32> to vector<8x128xf32>
    %320 = arith.subf %314, %319 : vector<8x128xf32>
    %321 = arith.mulf %320, %320 : vector<8x128xf32>
    %cst_139 = arith.constant dense<0.000000e+00> : vector<8xf32>
    %322 = vector.multi_reduction <add>, %321, %cst_139 [1] : vector<8x128xf32> to vector<8xf32>
    %323 = vector.shape_cast %322 : vector<8xf32> to vector<8x1xf32>
    %cst_140 = arith.constant 1.280000e+02 : f32
    %324 = vector.broadcast %cst_140 : f32 to vector<8x1xf32>
    %325 = arith.divf %323, %324 : vector<8x1xf32>
    %326 = vector.broadcast %318 : vector<8x1xf32> to vector<8x128xf32>
    %327 = arith.subf %314, %326 : vector<8x128xf32>
    %cst_141 = arith.constant 9.99999974E-6 : f32
    %328 = vector.broadcast %cst_141 : f32 to vector<8x1xf32>
    %329 = arith.addf %325, %328 : vector<8x1xf32>
    %330 = math.rsqrt %329 : vector<8x1xf32>
    %331 = vector.broadcast %330 : vector<8x1xf32> to vector<8x128xf32>
    %332 = arith.mulf %327, %331 : vector<8x128xf32>
    %c0_142 = arith.constant 0 : index
    %c0_143 = arith.constant 0 : index
    %c0_144 = arith.constant 0 : index
    %333 = vector.load %arg16[%c0_142, %c0_143, %c0_144] : memref<1x1x128xf32, #tpu.memory_space<vmem>>, vector<1x1x128xf32>
    %334 = vector.shape_cast %333 : vector<1x1x128xf32> to vector<1x128xf32>
    %335 = vector.broadcast %334 : vector<1x128xf32> to vector<8x128xf32>
    %336 = arith.mulf %332, %335 : vector<8x128xf32>
    %c0_145 = arith.constant 0 : index
    %c0_146 = arith.constant 0 : index
    %c0_147 = arith.constant 0 : index
    %337 = vector.load %arg17[%c0_145, %c0_146, %c0_147] : memref<1x1x128xf32, #tpu.memory_space<vmem>>, vector<1x1x128xf32>
    %338 = vector.shape_cast %337 : vector<1x1x128xf32> to vector<1x128xf32>
    %339 = vector.broadcast %338 : vector<1x128xf32> to vector<8x128xf32>
    %340 = arith.addf %336, %339 : vector<8x128xf32>
    %c0_148 = arith.constant 0 : index
    %c0_149 = arith.constant 0 : index
    %341 = vector.load %arg20[%c0_148, %c0_149] : memref<8x128xf32, #tpu.memory_space<vmem>>, vector<8x128xf32>
    tpu.vector_store %arg20[%c0_148, %c0_149], %340 {strides = array<i32>} : memref<8x128xf32, #tpu.memory_space<vmem>>, vector<8x128xf32>,
    %c1_i32 = arith.constant 1 : i32
    %342 = arith.cmpi eq, %arg1, %c1_i32 : i32
    %343 = arith.extui %342 : i1 to i32
    %c0_i32_150 = arith.constant 0 : i32
    %344 = arith.cmpi ne, %343, %c0_i32_150 : i32
    scf.if %344 {
      %345 = arith.truncf %340 : vector<8x128xf32> to vector<8x128xbf16>
      %c0_151 = arith.constant 0 : index
      %c0_152 = arith.constant 0 : index
      %346 = vector.load %arg18[%c0_151, %c0_152] : memref<128x256xbf16, #tpu.memory_space<vmem>>, vector<128x256xbf16>
      %cst_153 = arith.constant dense<0.000000e+00> : vector<8x256xf32>
      %347 = tpu.matmul %345, %346, %cst_153 {dimension_numbers = #tpu.dot_dimension_numbers<[1], [0], [0], [1], [0, 0, 1, 1], [], []>} : vector<8x128xbf16>, vector<128x256xbf16>, vector<8x256xf32> -> vector<8x256xf32>
      %c0_154 = arith.constant 0 : index
      %c0_155 = arith.constant 0 : index
      %348 = vector.load %arg19[%c0_154, %c0_155] : memref<1x256xf32, #tpu.memory_space<vmem>>, vector<1x256xf32>
      %349 = vector.broadcast %348 : vector<1x256xf32> to vector<8x256xf32>
      %350 = arith.addf %347, %349 : vector<8x256xf32>
      %c0_156 = arith.constant 0 : index
      %c0_157 = arith.constant 0 : index
      %351 = vector.load %arg21[%c0_156, %c0_157] : memref<8x256xf32, #tpu.memory_space<vmem>>, vector<8x256xf32>
      tpu.vector_store %arg21[%c0_156, %c0_157], %350 {strides = array<i32>} : memref<8x256xf32, #tpu.memory_space<vmem>>, vector<8x256xf32>,
    } else {
    }
    return
  }
  func.func @transform_0(%arg0: i32, %arg1: i32) -> (i32, i32) {
    %c0_i32 = arith.constant 0 : i32
    %c0_i32_0 = arith.constant 0 : i32
    return %arg0, %c0_i32 : i32, i32
  }
  func.func @transform_1(%arg0: i32, %arg1: i32) -> (i32, i32) {
    %c0_i32 = arith.constant 0 : i32
    %c0_i32_0 = arith.constant 0 : i32
    %c0_i32_1 = arith.constant 0 : i32
    return %c0_i32, %c0_i32_0 : i32, i32
  }
  func.func @transform_2(%arg0: i32, %arg1: i32) -> (i32, i32) {
    %c0_i32 = arith.constant 0 : i32
    %c0_i32_0 = arith.constant 0 : i32
    %c0_i32_1 = arith.constant 0 : i32
    return %c0_i32, %c0_i32_0 : i32, i32
  }
  func.func @transform_3(%arg0: i32, %arg1: i32) -> (i32, i32) {
    %c0_i32 = arith.constant 0 : i32
    %c0_i32_0 = arith.constant 0 : i32
    %c0_i32_1 = arith.constant 0 : i32
    return %c0_i32, %c0_i32_0 : i32, i32
  }
  func.func @transform_4(%arg0: i32, %arg1: i32) -> (i32, i32, i32) {
    %c0_i32 = arith.constant 0 : i32
    %c0_i32_0 = arith.constant 0 : i32
    %c0_i32_1 = arith.constant 0 : i32
    return %arg1, %c0_i32, %c0_i32_0 : i32, i32, i32
  }
  func.func @transform_5(%arg0: i32, %arg1: i32) -> (i32, i32, i32) {
    %c0_i32 = arith.constant 0 : i32
    %c0_i32_0 = arith.constant 0 : i32
    %c0_i32_1 = arith.constant 0 : i32
    return %arg1, %c0_i32, %c0_i32_0 : i32, i32, i32
  }
  func.func @transform_6(%arg0: i32, %arg1: i32) -> (i32, i32, i32) {
    %c0_i32 = arith.constant 0 : i32
    %c0_i32_0 = arith.constant 0 : i32
    %c0_i32_1 = arith.constant 0 : i32
    return %arg1, %c0_i32, %c0_i32_0 : i32, i32, i32
  }
  func.func @transform_7(%arg0: i32, %arg1: i32) -> (i32, i32, i32) {
    %c0_i32 = arith.constant 0 : i32
    %c0_i32_0 = arith.constant 0 : i32
    %c0_i32_1 = arith.constant 0 : i32
    return %arg1, %c0_i32, %c0_i32_0 : i32, i32, i32
  }
  func.func @transform_8(%arg0: i32, %arg1: i32) -> (i32, i32, i32) {
    %c0_i32 = arith.constant 0 : i32
    %c0_i32_0 = arith.constant 0 : i32
    %c0_i32_1 = arith.constant 0 : i32
    return %arg1, %c0_i32, %c0_i32_0 : i32, i32, i32
  }
  func.func @transform_9(%arg0: i32, %arg1: i32) -> (i32, i32, i32) {
    %c0_i32 = arith.constant 0 : i32
    %c0_i32_0 = arith.constant 0 : i32
    %c0_i32_1 = arith.constant 0 : i32
    return %arg1, %c0_i32, %c0_i32_0 : i32, i32, i32
  }
  func.func @transform_10(%arg0: i32, %arg1: i32) -> (i32, i32, i32) {
    %c0_i32 = arith.constant 0 : i32
    %c0_i32_0 = arith.constant 0 : i32
    %c0_i32_1 = arith.constant 0 : i32
    return %arg1, %c0_i32, %c0_i32_0 : i32, i32, i32
  }
  func.func @transform_11(%arg0: i32, %arg1: i32) -> (i32, i32, i32) {
    %c0_i32 = arith.constant 0 : i32
    %c0_i32_0 = arith.constant 0 : i32
    %c0_i32_1 = arith.constant 0 : i32
    return %arg1, %c0_i32, %c0_i32_0 : i32, i32, i32
  }
  func.func @transform_12(%arg0: i32, %arg1: i32) -> (i32, i32, i32) {
    %c0_i32 = arith.constant 0 : i32
    %c0_i32_0 = arith.constant 0 : i32
    %c0_i32_1 = arith.constant 0 : i32
    return %arg1, %c0_i32, %c0_i32_0 : i32, i32, i32
  }
  func.func @transform_13(%arg0: i32, %arg1: i32) -> (i32, i32, i32) {
    %c0_i32 = arith.constant 0 : i32
    %c0_i32_0 = arith.constant 0 : i32
    %c0_i32_1 = arith.constant 0 : i32
    return %arg1, %c0_i32, %c0_i32_0 : i32, i32, i32
  }
  func.func @transform_14(%arg0: i32, %arg1: i32) -> (i32, i32, i32) {
    %c0_i32 = arith.constant 0 : i32
    %c0_i32_0 = arith.constant 0 : i32
    %c0_i32_1 = arith.constant 0 : i32
    return %arg1, %c0_i32, %c0_i32_0 : i32, i32, i32
  }
  func.func @transform_15(%arg0: i32, %arg1: i32) -> (i32, i32, i32) {
    %c0_i32 = arith.constant 0 : i32
    %c0_i32_0 = arith.constant 0 : i32
    %c0_i32_1 = arith.constant 0 : i32
    return %arg1, %c0_i32, %c0_i32_0 : i32, i32, i32
  }
  func.func @transform_16(%arg0: i32, %arg1: i32) -> (i32, i32) {
    %c0_i32 = arith.constant 0 : i32
    %c0_i32_0 = arith.constant 0 : i32
    %c0_i32_1 = arith.constant 0 : i32
    return %c0_i32, %c0_i32_0 : i32, i32
  }
  func.func @transform_17(%arg0: i32, %arg1: i32) -> (i32, i32) {
    %c0_i32 = arith.constant 0 : i32
    %c0_i32_0 = arith.constant 0 : i32
    %c0_i32_1 = arith.constant 0 : i32
    return %c0_i32, %c0_i32_0 : i32, i32
  }
  func.func @transform_18(%arg0: i32, %arg1: i32) -> (i32, i32) {
    %c0_i32 = arith.constant 0 : i32
    %c0_i32_0 = arith.constant 0 : i32
    return %arg0, %c0_i32 : i32, i32
  }
  func.func @transform_19(%arg0: i32, %arg1: i32) -> (i32, i32) {
    %c0_i32 = arith.constant 0 : i32
    %c0_i32_0 = arith.constant 0 : i32
    return %arg0, %c0_i32 : i32, i32
  }
}

</mosaic_0001>

<llo_original>
// kernel: vit_encoder_forward.1
$region0: #{vit_encoder_forward.1}
  #allocation0 [shape = 'u32[]', space=smem, size = 0x4, offset = 0x4, fixed_abs, tag = 'smem constant byte address 0x4 - core index']
  #allocation1 [shape = 'u32[144,128]{1,0:T(1,128)}', space=vmem, size = 0x12000, scoped, tag = 'internal scratch']
  %s0 = inlined_call_operand.vmem [shape: f32[16,192], index: 0, kind: input, shape index: {}]
  %s1 = inlined_call_operand.vmem [shape: bf16[192,128], index: 1, kind: input, shape index: {}]
  %s2 = inlined_call_operand.hbm [shape: f32[1,128], index: 2, kind: input, shape index: {}]
  %s3 = inlined_call_operand.vmem [shape: f32[8,128], index: 3, kind: input, shape index: {}]
  %s4 = inlined_call_operand.vmem [shape: bf16[2,128,384], index: 4, kind: input, shape index: {}]
  %s5 = inlined_call_operand.vmem [shape: f32[2,1,384], index: 5, kind: input, shape index: {}]
  %s6 = inlined_call_operand.hbm [shape: bf16[2,128,128], index: 6, kind: input, shape index: {}]
  %s7 = inlined_call_operand.vmem [shape: f32[2,1,128], index: 7, kind: input, shape index: {}]
  %s8 = inlined_call_operand.vmem [shape: f32[2,1,128], index: 8, kind: input, shape index: {}]
  %s9 = inlined_call_operand.vmem [shape: f32[2,1,128], index: 9, kind: input, shape index: {}]
  %s10 = inlined_call_operand.hbm [shape: bf16[2,128,2048], index: 10, kind: input, shape index: {}]
  %s11 = inlined_call_operand.hbm [shape: f32[2,1,2048], index: 11, kind: input, shape index: {}]
  %s12 = inlined_call_operand.hbm [shape: bf16[2,2048,128], index: 12, kind: input, shape index: {}]
  %s13 = inlined_call_operand.vmem [shape: f32[2,1,128], index: 13, kind: input, shape index: {}]
  %s14 = inlined_call_operand.vmem [shape: f32[2,1,128], index: 14, kind: input, shape index: {}]
  %s15 = inlined_call_operand.vmem [shape: f32[2,1,128], index: 15, kind: input, shape index: {}]
  %s16 = inlined_call_operand.hbm [shape: bf16[128,256], index: 16, kind: input, shape index: {}]
  %s17 = inlined_call_operand.hbm [shape: f32[1,256], index: 17, kind: input, shape index: {}]
  %s18 = inlined_call_operand.vmem [shape: f32[16,128], index: 18, kind: output, shape index: {0}]
  %s19 = inlined_call_operand.vmem [shape: f32[16,256], index: 19, kind: output, shape index: {1}]
  %20 = xla_tuple %s18, %s19
  %s21 = sld [smem:[#allocation0]]
  $region149: #{vit_encoder_forward.1} parent=0
    _
  %s23 = ssub.s32 1, %s21
  %s24 = scalar_select 0, %s23, %s21
  $region1: #{vit_encoder_forward.1} parent=0
    #allocation2 [shape = 'u8[512]{0}', space=vmem, size = 0x400, scoped, tag = 'input window, operand 2, single buffered']
    #allocation3 [shape = 's32[2]{0}', space=sflag, size = 0x8, scoped, tag = 'scoped memory for vit_encoder_forward.1']
    #allocation4 [shape = 'u8[65536]{0}', space=vmem, size = 0x10000, scoped, tag = 'input window, operand 6']
    #allocation5 [shape = 's32[2]{0}', space=sflag, size = 0x8, scoped, tag = 'scoped memory for vit_encoder_forward.1']
    #allocation6 [shape = 'u8[1048576]{0}', space=vmem, size = 0x100000, scoped, tag = 'input window, operand 10']
    #allocation7 [shape = 'u8[16384]{0}', space=vmem, size = 0x4000, scoped, tag = 'input window, operand 11']
    #allocation8 [shape = 's32[2]{0}', space=sflag, size = 0x8, scoped, tag = 'scoped memory for vit_encoder_forward.1']
    #allocation9 [shape = 'u8[1048576]{0}', space=vmem, size = 0x100000, scoped, tag = 'input window, operand 12']
    #allocation10 [shape = 'u8[65536]{0}', space=vmem, size = 0x10000, scoped, tag = 'input window, operand 16, single buffered']
    #allocation11 [shape = 's32[1]{0}', space=sflag, size = 0x4, scoped, tag = 'scoped memory for vit_encoder_forward.1']
    #allocation12 [shape = 'u8[1024]{0}', space=vmem, size = 0x400, scoped, tag = 'input window, operand 17, single buffered']
    %25 = vsyncpa [#allocation3], 0
    %26 = vsyncpa [#allocation5], 0
    %s27 = scalar_lea.sflag [#allocation5], 1
    %28 = vsyncpa %s27, 0
    %29 = vsyncpa [#allocation8], 0
    %s30 = scalar_lea.sflag [#allocation8], 1
    %31 = vsyncpa %s30, 0
    %32 = vsyncpa [#allocation11], 0
    loop: start=0, step=1, limit=6
    $region2: #{vit_encoder_forward.1} parent=1 // loop_pre_header
      _
    $region3: #{vit_encoder_forward.1} parent=1 // loop_header
      %s34 = sphi 0, %s38
      %p35 = scmp.ge.s32.totalorder %s34, 6
      %s41 = sphi 0, %s53
      %s42 = sphi 0, %s49
      %s43 = sphi 0, %s41
      %s44 = sphi 0, %s42
      %s45 = sphi 0, %s43
      %s46 = sphi 0, %s44
      %s56 = sphi 0, %s58
      %s59 = sphi 0, %s56
      %s60 = sphi 0, %s59
      %s76 = sphi 0, %s60
      %s80 = sphi 0, %s80
      %s82 = sphi 0, %s80
      %s83 = sphi 0, %s82
      %s97 = sphi 0, %s83
      %s101 = sphi 0, %s101
      %s103 = sphi 0, %s101
      %s104 = sphi 0, %s103
      %s118 = sphi 0, %s104
      %s122 = sphi 0, %s122
      %s124 = sphi 0, %s122
      %s125 = sphi 0, %s124
      %s139 = sphi 0, %s125
      %s145 = sphi 0, %s147
      %s148 = sphi 0, %s145
      %s149 = sphi 0, %s148
      %s165 = sphi 0, %s149
      %s171 = sphi 0, %s173
      %s174 = sphi 0, %s171
      %s175 = sphi 0, %s174
      %s191 = sphi 0, %s175
      %s197 = sphi 0, %s199
      %s200 = sphi 0, %s197
      %s201 = sphi 0, %s200
      %s217 = sphi 0, %s201
      %s223 = sphi 0, %s225
      %s226 = sphi 0, %s223
      %s227 = sphi 0, %s226
      %s243 = sphi 0, %s227
      %s249 = sphi 0, %s251
      %s252 = sphi 0, %s249
      %s253 = sphi 0, %s252
      %s269 = sphi 0, %s253
      %s275 = sphi 0, %s277
      %s278 = sphi 0, %s275
      %s279 = sphi 0, %s278
      %s295 = sphi 0, %s279
      %s301 = sphi 0, %s303
      %s304 = sphi 0, %s301
      %s305 = sphi 0, %s304
      %s321 = sphi 0, %s305
      %s327 = sphi 0, %s329
      %s330 = sphi 0, %s327
      %s331 = sphi 0, %s330
      %s347 = sphi 0, %s331
      %s353 = sphi 0, %s355
      %s356 = sphi 0, %s353
      %s357 = sphi 0, %s356
      %s373 = sphi 0, %s357
      %s379 = sphi 0, %s381
      %s382 = sphi 0, %s379
      %s383 = sphi 0, %s382
      %s399 = sphi 0, %s383
      %s405 = sphi 0, %s407
      %s408 = sphi 0, %s405
      %s409 = sphi 0, %s408
      %s425 = sphi 0, %s409
      %s431 = sphi 0, %s433
      %s434 = sphi 0, %s431
      %s435 = sphi 0, %s434
      %s451 = sphi 0, %s435
      %s455 = sphi 0, %s455
      %s457 = sphi 0, %s455
      %s458 = sphi 0, %s457
      %s472 = sphi 0, %s458
      %s476 = sphi 0, %s476
      %s478 = sphi 0, %s476
      %s479 = sphi 0, %s478
      %s493 = sphi 0, %s479
      %s499 = sphi 0, %s501
      %s502 = sphi 0, %s499
      %s503 = sphi 0, %s502
      %s519 = sphi 0, %s503
      %s525 = sphi 0, %s527
      %s528 = sphi 0, %s525
      %s529 = sphi 0, %s528
      %s545 = sphi 0, %s529
    $region4: #{vit_encoder_forward.1} parent=1 // loop_header_branch
      %37 = sbr.rel (%p35) target = $region8
    $region5: #{vit_encoder_forward.1} parent=1 // loop_body
      %s39 = ssub.s32 %s34, 1
      %s40 = ssub.s32 %s34, 2
      %s47 = sadd.s32 1, %s42
      %p48 = scmp.ge.s32.totalorder %s47, 2
      %s49 = scalar_select %p48, 0, %s47
      %s50 = sadd.s32 1, %s41
      %s51 = scalar_select %p48, %s50, %s41
      %p52 = scmp.ge.s32.totalorder %s51, 2
      %s53 = scalar_select %p52, 0, %s51
      %s54 = ssub.s32 %s41, %s53
      %p55 = scmp.eq.s32.totalorder %s54, 0
      %s57 = sadd.s32 %s56, 1
      %s58 = scalar_select %p55, %s56, %s57
      %p61 = pneg %p55
      %p62 = scmp.eq.s32.totalorder %s34, 3
      %p63 = por %p61, %p62
      %p64 = scmp.ne.s32.totalorder %s56, %s59
      %p65 = scmp.eq.s32.totalorder %s34, 0
      %p66 = por %p64, %p65
      %p67 = scmp.ne.s32.totalorder %s56, %s59
      %p68 = scmp.eq.s32.totalorder %s39, 3
      %p69 = por %p67, %p68
      %p70 = scmp.ne.s32.totalorder %s59, %s60
      %p71 = scmp.eq.s32.totalorder %s39, 0
      %p72 = por %p70, %p71
      %p73 = scmp.ne.s32.totalorder %s59, %s60
      %p74 = scmp.eq.s32.totalorder %s40, 3
      %p75 = por %p73, %p74
      %p77 = scmp.ne.s32.totalorder %s60, %s76
      %p78 = scmp.eq.s32.totalorder %s40, 0
      %p79 = por %p77, %p78
      %s81 = sadd.s32 %s80, 1
      %p84 = scmp.eq.s32.totalorder %s34, 3
      %p85 = scmp.ne.s32.totalorder %s80, %s82
      %p86 = scmp.eq.s32.totalorder %s34, 0
      %p87 = por %p85, %p86
      %p88 = scmp.ne.s32.totalorder %s80, %s82
      %p89 = scmp.eq.s32.totalorder %s39, 3
      %p90 = por %p88, %p89
      %p91 = scmp.ne.s32.totalorder %s82, %s83
      %p92 = scmp.eq.s32.totalorder %s39, 0
      %p93 = por %p91, %p92
      %p94 = scmp.ne.s32.totalorder %s82, %s83
      %p95 = scmp.eq.s32.totalorder %s40, 3
      %p96 = por %p94, %p95
      %p98 = scmp.ne.s32.totalorder %s83, %s97
      %p99 = scmp.eq.s32.totalorder %s40, 0
      %p100 = por %p98, %p99
      %s102 = sadd.s32 %s101, 1
      %p105 = scmp.eq.s32.totalorder %s34, 3
      %p106 = scmp.ne.s32.totalorder %s101, %s103
      %p107 = scmp.eq.s32.totalorder %s34, 0
      %p108 = por %p106, %p107
      %p109 = scmp.ne.s32.totalorder %s101, %s103
      %p110 = scmp.eq.s32.totalorder %s39, 3
      %p111 = por %p109, %p110
      %p112 = scmp.ne.s32.totalorder %s103, %s104
      %p113 = scmp.eq.s32.totalorder %s39, 0
      %p114 = por %p112, %p113
      %p115 = scmp.ne.s32.totalorder %s103, %s104
      %p116 = scmp.eq.s32.totalorder %s40, 3
      %p117 = por %p115, %p116
      %p119 = scmp.ne.s32.totalorder %s104, %s118
      %p120 = scmp.eq.s32.totalorder %s40, 0
      %p121 = por %p119, %p120
      %s123 = sadd.s32 %s122, 1
      %p126 = scmp.eq.s32.totalorder %s34, 3
      %p127 = scmp.ne.s32.totalorder %s122, %s124
      %p128 = scmp.eq.s32.totalorder %s34, 0
      %p129 = por %p127, %p128
      %p130 = scmp.ne.s32.totalorder %s122, %s124
      %p131 = scmp.eq.s32.totalorder %s39, 3
      %p132 = por %p130, %p131
      %p133 = scmp.ne.s32.totalorder %s124, %s125
      %p134 = scmp.eq.s32.totalorder %s39, 0
      %p135 = por %p133, %p134
      %p136 = scmp.ne.s32.totalorder %s124, %s125
      %p137 = scmp.eq.s32.totalorder %s40, 3
      %p138 = por %p136, %p137
      %p140 = scmp.ne.s32.totalorder %s125, %s139
      %p141 = scmp.eq.s32.totalorder %s40, 0
      %p142 = por %p140, %p141
      %s143 = ssub.s32 %s42, %s49
      %p144 = scmp.eq.s32.totalorder %s143, 0
      %s146 = sadd.s32 %s145, 1
      %s147 = scalar_select %p144, %s145, %s146
      %p150 = pneg %p144
      %p151 = scmp.eq.s32.totalorder %s34, 3
      %p152 = por %p150, %p151
      %p153 = scmp.ne.s32.totalorder %s145, %s148
      %p154 = scmp.eq.s32.totalorder %s34, 0
      %p155 = por %p153, %p154
      %p156 = scmp.ne.s32.totalorder %s145, %s148
      %p157 = scmp.eq.s32.totalorder %s39, 3
      %p158 = por %p156, %p157
      %p159 = scmp.ne.s32.totalorder %s148, %s149
      %p160 = scmp.eq.s32.totalorder %s39, 0
      %p161 = por %p159, %p160
      %p162 = scmp.ne.s32.totalorder %s148, %s149
      %p163 = scmp.eq.s32.totalorder %s40, 3
      %p164 = por %p162, %p163
      %p166 = scmp.ne.s32.totalorder %s149, %s165
      %p167 = scmp.eq.s32.totalorder %s40, 0
      %p168 = por %p166, %p167
      %s169 = ssub.s32 %s42, %s49
      %p170 = scmp.eq.s32.totalorder %s169, 0
      %s172 = sadd.s32 %s171, 1
      %s173 = scalar_select %p170, %s171, %s172
      %p176 = pneg %p170
      %p177 = scmp.eq.s32.totalorder %s34, 3
      %p178 = por %p176, %p177
      %p179 = scmp.ne.s32.totalorder %s171, %s174
      %p180 = scmp.eq.s32.totalorder %s34, 0
      %p181 = por %p179, %p180
      %p182 = scmp.ne.s32.totalorder %s171, %s174
      %p183 = scmp.eq.s32.totalorder %s39, 3
      %p184 = por %p182, %p183
      %p185 = scmp.ne.s32.totalorder %s174, %s175
      %p186 = scmp.eq.s32.totalorder %s39, 0
      %p187 = por %p185, %p186
      %p188 = scmp.ne.s32.totalorder %s174, %s175
      %p189 = scmp.eq.s32.totalorder %s40, 3
      %p190 = por %p188, %p189
      %p192 = scmp.ne.s32.totalorder %s175, %s191
      %p193 = scmp.eq.s32.totalorder %s40, 0
      %p194 = por %p192, %p193
      %s195 = ssub.s32 %s42, %s49
      %p196 = scmp.eq.s32.totalorder %s195, 0
      %s198 = sadd.s32 %s197, 1
      %s199 = scalar_select %p196, %s197, %s198
      %p202 = pneg %p196
      %p203 = scmp.eq.s32.totalorder %s34, 3
      %p204 = por %p202, %p203
      %p205 = scmp.ne.s32.totalorder %s197, %s200
      %p206 = scmp.eq.s32.totalorder %s34, 0
      %p207 = por %p205, %p206
      %p208 = scmp.ne.s32.totalorder %s197, %s200
      %p209 = scmp.eq.s32.totalorder %s39, 3
      %p210 = por %p208, %p209
      %p211 = scmp.ne.s32.totalorder %s200, %s201
      %p212 = scmp.eq.s32.totalorder %s39, 0
      %p213 = por %p211, %p212
      %p214 = scmp.ne.s32.totalorder %s200, %s201
      %p215 = scmp.eq.s32.totalorder %s40, 3
      %p216 = por %p214, %p215
      %p218 = scmp.ne.s32.totalorder %s201, %s217
      %p219 = scmp.eq.s32.totalorder %s40, 0
      %p220 = por %p218, %p219
      %s221 = ssub.s32 %s42, %s49
      %p222 = scmp.eq.s32.totalorder %s221, 0
      %s224 = sadd.s32 %s223, 1
      %s225 = scalar_select %p222, %s223, %s224
      %p228 = pneg %p222
      %p229 = scmp.eq.s32.totalorder %s34, 3
      %p230 = por %p228, %p229
      %p231 = scmp.ne.s32.totalorder %s223, %s226
      %p232 = scmp.eq.s32.totalorder %s34, 0
      %p233 = por %p231, %p232
      %p234 = scmp.ne.s32.totalorder %s223, %s226
      %p235 = scmp.eq.s32.totalorder %s39, 3
      %p236 = por %p234, %p235
      %p237 = scmp.ne.s32.totalorder %s226, %s227
      %p238 = scmp.eq.s32.totalorder %s39, 0
      %p239 = por %p237, %p238
      %p240 = scmp.ne.s32.totalorder %s226, %s227
      %p241 = scmp.eq.s32.totalorder %s40, 3
      %p242 = por %p240, %p241
      %p244 = scmp.ne.s32.totalorder %s227, %s243
      %p245 = scmp.eq.s32.totalorder %s40, 0
      %p246 = por %p244, %p245
      %s247 = ssub.s32 %s42, %s49
      %p248 = scmp.eq.s32.totalorder %s247, 0
      %s250 = sadd.s32 %s249, 1
      %s251 = scalar_select %p248, %s249, %s250
      %p254 = pneg %p248
      %p255 = scmp.eq.s32.totalorder %s34, 3
      %p256 = por %p254, %p255
      %p257 = scmp.ne.s32.totalorder %s249, %s252
      %p258 = scmp.eq.s32.totalorder %s34, 0
      %p259 = por %p257, %p258
      %p260 = scmp.ne.s32.totalorder %s249, %s252
      %p261 = scmp.eq.s32.totalorder %s39, 3
      %p262 = por %p260, %p261
      %p263 = scmp.ne.s32.totalorder %s252, %s253
      %p264 = scmp.eq.s32.totalorder %s39, 0
      %p265 = por %p263, %p264
      %p266 = scmp.ne.s32.totalorder %s252, %s253
      %p267 = scmp.eq.s32.totalorder %s40, 3
      %p268 = por %p266, %p267
      %p270 = scmp.ne.s32.totalorder %s253, %s269
      %p271 = scmp.eq.s32.totalorder %s40, 0
      %p272 = por %p270, %p271
      %s273 = ssub.s32 %s42, %s49
      %p274 = scmp.eq.s32.totalorder %s273, 0
      %s276 = sadd.s32 %s275, 1
      %s277 = scalar_select %p274, %s275, %s276
      %p280 = pneg %p274
      %p281 = scmp.eq.s32.totalorder %s34, 3
      %p282 = por %p280, %p281
      %p283 = scmp.ne.s32.totalorder %s275, %s278
      %p284 = scmp.eq.s32.totalorder %s34, 0
      %p285 = por %p283, %p284
      %p286 = scmp.ne.s32.totalorder %s275, %s278
      %p287 = scmp.eq.s32.totalorder %s39, 3
      %p288 = por %p286, %p287
      %p289 = scmp.ne.s32.totalorder %s278, %s279
      %p290 = scmp.eq.s32.totalorder %s39, 0
      %p291 = por %p289, %p290
      %p292 = scmp.ne.s32.totalorder %s278, %s279
      %p293 = scmp.eq.s32.totalorder %s40, 3
      %p294 = por %p292, %p293
      %p296 = scmp.ne.s32.totalorder %s279, %s295
      %p297 = scmp.eq.s32.totalorder %s40, 0
      %p298 = por %p296, %p297
      %s299 = ssub.s32 %s42, %s49
      %p300 = scmp.eq.s32.totalorder %s299, 0
      %s302 = sadd.s32 %s301, 1
      %s303 = scalar_select %p300, %s301, %s302
      %p306 = pneg %p300
      %p307 = scmp.eq.s32.totalorder %s34, 3
      %p308 = por %p306, %p307
      %p309 = scmp.ne.s32.totalorder %s301, %s304
      %p310 = scmp.eq.s32.totalorder %s34, 0
      %p311 = por %p309, %p310
      %p312 = scmp.ne.s32.totalorder %s301, %s304
      %p313 = scmp.eq.s32.totalorder %s39, 3
      %p314 = por %p312, %p313
      %p315 = scmp.ne.s32.totalorder %s304, %s305
      %p316 = scmp.eq.s32.totalorder %s39, 0
      %p317 = por %p315, %p316
      %p318 = scmp.ne.s32.totalorder %s304, %s305
      %p319 = scmp.eq.s32.totalorder %s40, 3
      %p320 = por %p318, %p319
      %p322 = scmp.ne.s32.totalorder %s305, %s321
      %p323 = scmp.eq.s32.totalorder %s40, 0
      %p324 = por %p322, %p323
      %s325 = ssub.s32 %s42, %s49
      %p326 = scmp.eq.s32.totalorder %s325, 0
      %s328 = sadd.s32 %s327, 1
      %s329 = scalar_select %p326, %s327, %s328
      %p332 = pneg %p326
      %p333 = scmp.eq.s32.totalorder %s34, 3
      %p334 = por %p332, %p333
      %p335 = scmp.ne.s32.totalorder %s327, %s330
      %p336 = scmp.eq.s32.totalorder %s34, 0
      %p337 = por %p335, %p336
      %p338 = scmp.ne.s32.totalorder %s327, %s330
      %p339 = scmp.eq.s32.totalorder %s39, 3
      %p340 = por %p338, %p339
      %p341 = scmp.ne.s32.totalorder %s330, %s331
      %p342 = scmp.eq.s32.totalorder %s39, 0
      %p343 = por %p341, %p342
      %p344 = scmp.ne.s32.totalorder %s330, %s331
      %p345 = scmp.eq.s32.totalorder %s40, 3
      %p346 = por %p344, %p345
      %p348 = scmp.ne.s32.totalorder %s331, %s347
      %p349 = scmp.eq.s32.totalorder %s40, 0
      %p350 = por %p348, %p349
      %s351 = ssub.s32 %s42, %s49
      %p352 = scmp.eq.s32.totalorder %s351, 0
      %s354 = sadd.s32 %s353, 1
      %s355 = scalar_select %p352, %s353, %s354
      %p358 = pneg %p352
      %p359 = scmp.eq.s32.totalorder %s34, 3
      %p360 = por %p358, %p359
      %p361 = scmp.ne.s32.totalorder %s353, %s356
      %p362 = scmp.eq.s32.totalorder %s34, 0
      %p363 = por %p361, %p362
      %p364 = scmp.ne.s32.totalorder %s353, %s356
      %p365 = scmp.eq.s32.totalorder %s39, 3
      %p366 = por %p364, %p365
      %p367 = scmp.ne.s32.totalorder %s356, %s357
      %p368 = scmp.eq.s32.totalorder %s39, 0
      %p369 = por %p367, %p368
      %p370 = scmp.ne.s32.totalorder %s356, %s357
      %p371 = scmp.eq.s32.totalorder %s40, 3
      %p372 = por %p370, %p371
      %p374 = scmp.ne.s32.totalorder %s357, %s373
      %p375 = scmp.eq.s32.totalorder %s40, 0
      %p376 = por %p374, %p375
      %s377 = ssub.s32 %s42, %s49
      %p378 = scmp.eq.s32.totalorder %s377, 0
      %s380 = sadd.s32 %s379, 1
      %s381 = scalar_select %p378, %s379, %s380
      %p384 = pneg %p378
      %p385 = scmp.eq.s32.totalorder %s34, 3
      %p386 = por %p384, %p385
      %p387 = scmp.ne.s32.totalorder %s379, %s382
      %p388 = scmp.eq.s32.totalorder %s34, 0
      %p389 = por %p387, %p388
      %p390 = scmp.ne.s32.totalorder %s379, %s382
      %p391 = scmp.eq.s32.totalorder %s39, 3
      %p392 = por %p390, %p391
      %p393 = scmp.ne.s32.totalorder %s382, %s383
      %p394 = scmp.eq.s32.totalorder %s39, 0
      %p395 = por %p393, %p394
      %p396 = scmp.ne.s32.totalorder %s382, %s383
      %p397 = scmp.eq.s32.totalorder %s40, 3
      %p398 = por %p396, %p397
      %p400 = scmp.ne.s32.totalorder %s383, %s399
      %p401 = scmp.eq.s32.totalorder %s40, 0
      %p402 = por %p400, %p401
      %s403 = ssub.s32 %s42, %s49
      %p404 = scmp.eq.s32.totalorder %s403, 0
      %s406 = sadd.s32 %s405, 1
      %s407 = scalar_select %p404, %s405, %s406
      %p410 = pneg %p404
      %p411 = scmp.eq.s32.totalorder %s34, 3
      %p412 = por %p410, %p411
      %p413 = scmp.ne.s32.totalorder %s405, %s408
      %p414 = scmp.eq.s32.totalorder %s34, 0
      %p415 = por %p413, %p414
      %p416 = scmp.ne.s32.totalorder %s405, %s408
      %p417 = scmp.eq.s32.totalorder %s39, 3
      %p418 = por %p416, %p417
      %p419 = scmp.ne.s32.totalorder %s408, %s409
      %p420 = scmp.eq.s32.totalorder %s39, 0
      %p421 = por %p419, %p420
      %p422 = scmp.ne.s32.totalorder %s408, %s409
      %p423 = scmp.eq.s32.totalorder %s40, 3
      %p424 = por %p422, %p423
      %p426 = scmp.ne.s32.totalorder %s409, %s425
      %p427 = scmp.eq.s32.totalorder %s40, 0
      %p428 = por %p426, %p427
      %s429 = ssub.s32 %s42, %s49
      %p430 = scmp.eq.s32.totalorder %s429, 0
      %s432 = sadd.s32 %s431, 1
      %s433 = scalar_select %p430, %s431, %s432
      %p436 = pneg %p430
      %p437 = scmp.eq.s32.totalorder %s34, 3
      %p438 = por %p436, %p437
      %p439 = scmp.ne.s32.totalorder %s431, %s434
      %p440 = scmp.eq.s32.totalorder %s34, 0
      %p441 = por %p439, %p440
      %p442 = scmp.ne.s32.totalorder %s431, %s434
      %p443 = scmp.eq.s32.totalorder %s39, 3
      %p444 = por %p442, %p443
      %p445 = scmp.ne.s32.totalorder %s434, %s435
      %p446 = scmp.eq.s32.totalorder %s39, 0
      %p447 = por %p445, %p446
      %p448 = scmp.ne.s32.totalorder %s434, %s435
      %p449 = scmp.eq.s32.totalorder %s40, 3
      %p450 = por %p448, %p449
      %p452 = scmp.ne.s32.totalorder %s435, %s451
      %p453 = scmp.eq.s32.totalorder %s40, 0
      %p454 = por %p452, %p453
      %s456 = sadd.s32 %s455, 1
      %p459 = scmp.eq.s32.totalorder %s34, 3
      %p460 = scmp.ne.s32.totalorder %s455, %s457
      %p461 = scmp.eq.s32.totalorder %s34, 0
      %p462 = por %p460, %p461
      %p463 = scmp.ne.s32.totalorder %s455, %s457
      %p464 = scmp.eq.s32.totalorder %s39, 3
      %p465 = por %p463, %p464
      %p466 = scmp.ne.s32.totalorder %s457, %s458
      %p467 = scmp.eq.s32.totalorder %s39, 0
      %p468 = por %p466, %p467
      %p469 = scmp.ne.s32.totalorder %s457, %s458
      %p470 = scmp.eq.s32.totalorder %s40, 3
      %p471 = por %p469, %p470
      %p473 = scmp.ne.s32.totalorder %s458, %s472
      %p474 = scmp.eq.s32.totalorder %s40, 0
      %p475 = por %p473, %p474
      %s477 = sadd.s32 %s476, 1
      %p480 = scmp.eq.s32.totalorder %s34, 3
      %p481 = scmp.ne.s32.totalorder %s476, %s478
      %p482 = scmp.eq.s32.totalorder %s34, 0
      %p483 = por %p481, %p482
      %p484 = scmp.ne.s32.totalorder %s476, %s478
      %p485 = scmp.eq.s32.totalorder %s39, 3
      %p486 = por %p484, %p485
      %p487 = scmp.ne.s32.totalorder %s478, %s479
      %p488 = scmp.eq.s32.totalorder %s39, 0
      %p489 = por %p487, %p488
      %p490 = scmp.ne.s32.totalorder %s478, %s479
      %p491 = scmp.eq.s32.totalorder %s40, 3
      %p492 = por %p490, %p491
      %p494 = scmp.ne.s32.totalorder %s479, %s493
      %p495 = scmp.eq.s32.totalorder %s40, 0
      %p496 = por %p494, %p495
      %s497 = ssub.s32 %s41, %s53
      %p498 = scmp.eq.s32.totalorder %s497, 0
      %s500 = sadd.s32 %s499, 1
      %s501 = scalar_select %p498, %s499, %s500
      %p504 = pneg %p498
      %p505 = scmp.eq.s32.totalorder %s34, 3
      %p506 = por %p504, %p505
      %p507 = scmp.ne.s32.totalorder %s499, %s502
      %p508 = scmp.eq.s32.totalorder %s34, 0
      %p509 = por %p507, %p508
      %p510 = scmp.ne.s32.totalorder %s499, %s502
      %p511 = scmp.eq.s32.totalorder %s39, 3
      %p512 = por %p510, %p511
      %p513 = scmp.ne.s32.totalorder %s502, %s503
      %p514 = scmp.eq.s32.totalorder %s39, 0
      %p515 = por %p513, %p514
      %p516 = scmp.ne.s32.totalorder %s502, %s503
      %p517 = scmp.eq.s32.totalorder %s40, 3
      %p518 = por %p516, %p517
      %p520 = scmp.ne.s32.totalorder %s503, %s519
      %p521 = scmp.eq.s32.totalorder %s40, 0
      %p522 = por %p520, %p521
      %s523 = ssub.s32 %s41, %s53
      %p524 = scmp.eq.s32.totalorder %s523, 0
      %s526 = sadd.s32 %s525, 1
      %s527 = scalar_select %p524, %s525, %s526
      %p530 = pneg %p524
      %p531 = scmp.eq.s32.totalorder %s34, 3
      %p532 = por %p530, %p531
      %p533 = scmp.ne.s32.totalorder %s525, %s528
      %p534 = scmp.eq.s32.totalorder %s34, 0
      %p535 = por %p533, %p534
      %p536 = scmp.ne.s32.totalorder %s525, %s528
      %p537 = scmp.eq.s32.totalorder %s39, 3
      %p538 = por %p536, %p537
      %p539 = scmp.ne.s32.totalorder %s528, %s529
      %p540 = scmp.eq.s32.totalorder %s39, 0
      %p541 = por %p539, %p540
      %p542 = scmp.ne.s32.totalorder %s528, %s529
      %p543 = scmp.eq.s32.totalorder %s40, 3
      %p544 = por %p542, %p543
      %p546 = scmp.ne.s32.totalorder %s529, %s545
      %p547 = scmp.eq.s32.totalorder %s40, 0
      %p548 = por %p546, %p547
      %p549 = scmp.le.s32.totalorder 1, %s34
      %p550 = scmp.lt.s32.totalorder %s34, 5
      %p551 = pnand %p549, %p550
      %p552 = pneg %p551
      // Predicated region
      $region9: #{vit_encoder_forward.1} parent=5 // pred_check
        _
      $region10: #{vit_encoder_forward.1} parent=5 // pred_check_branch
        %554 = sbr.rel (%p551) target = $region12
      $region11: #{vit_encoder_forward.1} parent=5 // pred_region
        %s555 = ssub.s32 %s34, 1
        // Predicated region
        $region13: #{vit_encoder_forward.1} parent=11 // pred_check
          %p556 = pneg %p93
        $region14: #{vit_encoder_forward.1} parent=11 // pred_check_branch
          %558 = sbr.rel (%p556) target = $region16
        $region15: #{vit_encoder_forward.1} parent=11 // pred_region
          _
        $region16: #{vit_encoder_forward.1} parent=11 // pred_fallthru
          _
        // Predicated region
        $region17: #{vit_encoder_forward.1} parent=11 // pred_check
          %p559 = pneg %p114
        $region18: #{vit_encoder_forward.1} parent=11 // pred_check_branch
          %561 = sbr.rel (%p559) target = $region20
        $region19: #{vit_encoder_forward.1} parent=11 // pred_region
          %s563 = ssub.s32 16, 16
          %564 = vsyncadd [#allocation3], %s563
          %s566 = sshll.u32 [#allocation2], 4
          %s567 = int_to_ptr.vmem [resolvable:$true] %s566
          %569 = dma.hbm_to_vmem [thread:$0]  %s2, 16, %s567, [#allocation3]
        $region20: #{vit_encoder_forward.1} parent=11 // pred_fallthru
          _
        // Predicated region
        $region21: #{vit_encoder_forward.1} parent=11 // pred_check
          %p570 = pneg %p135
        $region22: #{vit_encoder_forward.1} parent=11 // pred_check_branch
          %572 = sbr.rel (%p570) target = $region24
        $region23: #{vit_encoder_forward.1} parent=11 // pred_region
          _
        $region24: #{vit_encoder_forward.1} parent=11 // pred_fallthru
          _
        // Predicated region
        $region25: #{vit_encoder_forward.1} parent=11 // pred_check
          %p573 = pneg %p468
        $region26: #{vit_encoder_forward.1} parent=11 // pred_check_branch
          %575 = sbr.rel (%p573) target = $region28
        $region27: #{vit_encoder_forward.1} parent=11 // pred_region
          %s577 = ssub.s32 2048, 2048
          %578 = vsyncadd [#allocation11], %s577
          %s579 = sshll.u32 [#allocation10], 4
          %s580 = int_to_ptr.vmem [resolvable:$true] %s579
          %585 = dma.hbm_to_vmem [thread:$0]  %s16, 2048, %s580, [#allocation11], 128, 128, 8
        $region28: #{vit_encoder_forward.1} parent=11 // pred_fallthru
          _
        // Predicated region
        $region29: #{vit_encoder_forward.1} parent=11 // pred_check
          %p586 = pneg %p489
        $region30: #{vit_encoder_forward.1} parent=11 // pred_check_branch
          %588 = sbr.rel (%p586) target = $region32
        $region31: #{vit_encoder_forward.1} parent=11 // pred_region
          %s590 = ssub.s32 32, 32
          %591 = vsyncadd [#allocation11], %s590
          %s593 = sshll.u32 [#allocation12], 4
          %s594 = int_to_ptr.vmem [resolvable:$true] %s593
          %596 = dma.hbm_to_vmem [thread:$0]  %s17, 32, %s594, [#allocation11]
        $region32: #{vit_encoder_forward.1} parent=11 // pred_fallthru
          _
      $region12: #{vit_encoder_forward.1} parent=5 // pred_fallthru
        _
      %p597 = scmp.lt.s32.totalorder %s34, 4
      // Predicated region
      $region33: #{vit_encoder_forward.1} parent=5 // pred_check
        %p598 = pneg %p597
      $region34: #{vit_encoder_forward.1} parent=5 // pred_check_branch
        %600 = sbr.rel (%p598) target = $region36
      $region35: #{vit_encoder_forward.1} parent=5 // pred_region
        // Predicated region
        $region37: #{vit_encoder_forward.1} parent=35 // pred_check
          %p601 = pneg %p66
        $region38: #{vit_encoder_forward.1} parent=35 // pred_check_branch
          %603 = sbr.rel (%p601) target = $region40
        $region39: #{vit_encoder_forward.1} parent=35 // pred_region
          %p604 = scmp.lt.s32.totalorder %s41, 1
          %s605 = scalar_select %p604, %s41, 1
          %s606 = smul.addr %s605, 2
          %s607 = smul.addr %s606, 8
          %s608 = scalar_lea.vmem %s0, %s607
        $region40: #{vit_encoder_forward.1} parent=35 // pred_fallthru
          _
        // Predicated region
        $region41: #{vit_encoder_forward.1} parent=35 // pred_check
          %p609 = pneg %p155
        $region42: #{vit_encoder_forward.1} parent=35 // pred_check_branch
          %611 = sbr.rel (%p609) target = $region44
        $region43: #{vit_encoder_forward.1} parent=35 // pred_region
          %p612 = scmp.lt.s32.totalorder %s42, 1
          %s613 = scalar_select %p612, %s42, 1
          %s614 = smul.addr %s613, 48
          %s615 = smul.addr %s614, 4
          %s616 = scalar_lea.vmem %s4, %s615
        $region44: #{vit_encoder_forward.1} parent=35 // pred_fallthru
          _
        // Predicated region
        $region45: #{vit_encoder_forward.1} parent=35 // pred_check
          %p617 = pneg %p181
        $region46: #{vit_encoder_forward.1} parent=35 // pred_check_branch
          %619 = sbr.rel (%p617) target = $region48
        $region47: #{vit_encoder_forward.1} parent=35 // pred_region
          %p620 = scmp.lt.s32.totalorder %s42, 1
          %s621 = scalar_select %p620, %s42, 1
          %s622 = smul.addr %s621, 3
          %s623 = scalar_lea.vmem %s5, %s622
        $region48: #{vit_encoder_forward.1} parent=35 // pred_fallthru
          _
        // Predicated region
        $region49: #{vit_encoder_forward.1} parent=35 // pred_check
          %p624 = pneg %p207
        $region50: #{vit_encoder_forward.1} parent=35 // pred_check_branch
          %626 = sbr.rel (%p624) target = $region52
        $region51: #{vit_encoder_forward.1} parent=35 // pred_region
          %s627 = sand.u32 %s34, 1
          %s628 = scalar_lea.sflag [#allocation5], %s627
          %s629 = sand.u32 %s197, 1
          %s630 = smul.addr %s629, 64
          %s631 = scalar_lea.vmem [#allocation4], %s630
          %s633 = ssub.s32 1024, 1024
          %634 = vsyncadd %s628, %s633
          %s635 = smul.addr %s42, 16
          %s636 = smul.addr %s635, 64
          %s637 = scalar_lea.hbm %s6, %s636
          %s638 = sshll.u32 %s631, 4
          %s639 = int_to_ptr.vmem [resolvable:$true] %s638
          %644 = dma.hbm_to_vmem [thread:$0]  %s637, 1024, %s639, %s628, 64, 64, 4
        $region52: #{vit_encoder_forward.1} parent=35 // pred_fallthru
          _
        // Predicated region
        $region53: #{vit_encoder_forward.1} parent=35 // pred_check
          %p645 = pneg %p233
        $region54: #{vit_encoder_forward.1} parent=35 // pred_check_branch
          %647 = sbr.rel (%p645) target = $region56
        $region55: #{vit_encoder_forward.1} parent=35 // pred_region
          %p648 = scmp.lt.s32.totalorder %s42, 1
          %s649 = scalar_select %p648, %s42, 1
          %s650 = scalar_lea.vmem %s7, %s649
        $region56: #{vit_encoder_forward.1} parent=35 // pred_fallthru
          _
        // Predicated region
        $region57: #{vit_encoder_forward.1} parent=35 // pred_check
          %p651 = pneg %p259
        $region58: #{vit_encoder_forward.1} parent=35 // pred_check_branch
          %653 = sbr.rel (%p651) target = $region60
        $region59: #{vit_encoder_forward.1} parent=35 // pred_region
          %p654 = scmp.lt.s32.totalorder %s42, 1
          %s655 = scalar_select %p654, %s42, 1
          %s656 = scalar_lea.vmem %s8, %s655
        $region60: #{vit_encoder_forward.1} parent=35 // pred_fallthru
          _
        // Predicated region
        $region61: #{vit_encoder_forward.1} parent=35 // pred_check
          %p657 = pneg %p285
        $region62: #{vit_encoder_forward.1} parent=35 // pred_check_branch
          %659 = sbr.rel (%p657) target = $region64
        $region63: #{vit_encoder_forward.1} parent=35 // pred_region
          %p660 = scmp.lt.s32.totalorder %s42, 1
          %s661 = scalar_select %p660, %s42, 1
          %s662 = scalar_lea.vmem %s9, %s661
        $region64: #{vit_encoder_forward.1} parent=35 // pred_fallthru
          _
        // Predicated region
        $region65: #{vit_encoder_forward.1} parent=35 // pred_check
          %p663 = pneg %p311
        $region66: #{vit_encoder_forward.1} parent=35 // pred_check_branch
          %665 = sbr.rel (%p663) target = $region68
        $region67: #{vit_encoder_forward.1} parent=35 // pred_region
          %s666 = sand.u32 %s34, 1
          %s667 = scalar_lea.sflag [#allocation5], %s666
          %s668 = sand.u32 %s301, 1
          %s669 = smul.addr %s668, 1024
          %s670 = scalar_lea.vmem [#allocation6], %s669
          %s672 = ssub.s32 16384, 16384
          %673 = vsyncadd %s667, %s672
          %s674 = smul.addr %s42, 256
          %s675 = smul.addr %s674, 64
          %s676 = scalar_lea.hbm %s10, %s675
          %s677 = sshll.u32 %s670, 4
          %s678 = int_to_ptr.vmem [resolvable:$true] %s677
          %683 = dma.hbm_to_vmem [thread:$0]  %s676, 16384, %s678, %s667, 1024, 1024, 64
        $region68: #{vit_encoder_forward.1} parent=35 // pred_fallthru
          _
        // Predicated region
        $region69: #{vit_encoder_forward.1} parent=35 // pred_check
          %p684 = pneg %p337
        $region70: #{vit_encoder_forward.1} parent=35 // pred_check_branch
          %686 = sbr.rel (%p684) target = $region72
        $region71: #{vit_encoder_forward.1} parent=35 // pred_region
          %s687 = sand.u32 %s34, 1
          %s688 = scalar_lea.sflag [#allocation8], %s687
          %s689 = sand.u32 %s327, 1
          %s690 = smul.addr %s689, 16
          %s691 = scalar_lea.vmem [#allocation7], %s690
          %s693 = ssub.s32 256, 256
          %694 = vsyncadd %s688, %s693
          %s695 = smul.addr %s42, 16
          %s696 = smul.addr %s695, 16
          %s697 = scalar_lea.hbm %s11, %s696
          %s699 = sshll.u32 %s691, 4
          %s700 = int_to_ptr.vmem [resolvable:$true] %s699
          %702 = dma.hbm_to_vmem [thread:$0]  %s697, 256, %s700, %s688
        $region72: #{vit_encoder_forward.1} parent=35 // pred_fallthru
          _
        // Predicated region
        $region73: #{vit_encoder_forward.1} parent=35 // pred_check
          %p703 = pneg %p363
        $region74: #{vit_encoder_forward.1} parent=35 // pred_check_branch
          %705 = sbr.rel (%p703) target = $region76
        $region75: #{vit_encoder_forward.1} parent=35 // pred_region
          %s706 = sand.u32 %s34, 1
          %s707 = scalar_lea.sflag [#allocation8], %s706
          %s708 = sand.u32 %s353, 1
          %s709 = smul.addr %s708, 1024
          %s710 = scalar_lea.vmem [#allocation9], %s709
          %s712 = ssub.s32 16384, 16384
          %713 = vsyncadd %s707, %s712
          %s714 = smul.addr %s42, 256
          %s715 = smul.addr %s714, 64
          %s716 = scalar_lea.hbm %s12, %s715
          %s717 = sshll.u32 %s710, 4
          %s718 = int_to_ptr.vmem [resolvable:$true] %s717
          %723 = dma.hbm_to_vmem [thread:$0]  %s716, 16384, %s718, %s707, 64, 64, 4
        $region76: #{vit_encoder_forward.1} parent=35 // pred_fallthru
          _
        // Predicated region
        $region77: #{vit_encoder_forward.1} parent=35 // pred_check
          %p724 = pneg %p389
        $region78: #{vit_encoder_forward.1} parent=35 // pred_check_branch
          %726 = sbr.rel (%p724) target = $region80
        $region79: #{vit_encoder_forward.1} parent=35 // pred_region
          %p727 = scmp.lt.s32.totalorder %s42, 1
          %s728 = scalar_select %p727, %s42, 1
          %s729 = scalar_lea.vmem %s13, %s728
        $region80: #{vit_encoder_forward.1} parent=35 // pred_fallthru
          _
        // Predicated region
        $region81: #{vit_encoder_forward.1} parent=35 // pred_check
          %p730 = pneg %p415
        $region82: #{vit_encoder_forward.1} parent=35 // pred_check_branch
          %732 = sbr.rel (%p730) target = $region84
        $region83: #{vit_encoder_forward.1} parent=35 // pred_region
          %p733 = scmp.lt.s32.totalorder %s42, 1
          %s734 = scalar_select %p733, %s42, 1
          %s735 = scalar_lea.vmem %s14, %s734
        $region84: #{vit_encoder_forward.1} parent=35 // pred_fallthru
          _
        // Predicated region
        $region85: #{vit_encoder_forward.1} parent=35 // pred_check
          %p736 = pneg %p441
        $region86: #{vit_encoder_forward.1} parent=35 // pred_check_branch
          %738 = sbr.rel (%p736) target = $region88
        $region87: #{vit_encoder_forward.1} parent=35 // pred_region
          %p739 = scmp.lt.s32.totalorder %s42, 1
          %s740 = scalar_select %p739, %s42, 1
          %s741 = scalar_lea.vmem %s15, %s740
        $region88: #{vit_encoder_forward.1} parent=35 // pred_fallthru
          _
      $region36: #{vit_encoder_forward.1} parent=5 // pred_fallthru
        _
      %p742 = scmp.le.s32.totalorder 1, %s34
      %p743 = scmp.lt.s32.totalorder %s34, 5
      %p744 = pnand %p742, %p743
      %p745 = pneg %p744
      // Predicated region
      $region89: #{vit_encoder_forward.1} parent=5 // pred_check
        _
      $region90: #{vit_encoder_forward.1} parent=5 // pred_check_branch
        %747 = sbr.rel (%p744) target = $region92
      $region91: #{vit_encoder_forward.1} parent=5 // pred_region
        %s748 = ssub.s32 %s34, 1
        // Predicated region
        $region93: #{vit_encoder_forward.1} parent=91 // pred_check
          %p749 = pneg %p114
        $region94: #{vit_encoder_forward.1} parent=91 // pred_check_branch
          %751 = sbr.rel (%p749) target = $region96
        $region95: #{vit_encoder_forward.1} parent=91 // pred_region
          %752 = dma.done [#allocation3], 16
        $region96: #{vit_encoder_forward.1} parent=91 // pred_fallthru
          _
        %s753 = sand.u32 %s39, 1
        %s754 = scalar_lea.sflag [#allocation5], %s753
        %s755 = sand.u32 %s200, 1
        %s756 = smul.addr %s755, 64
        %s757 = scalar_lea.vmem [#allocation4], %s756
        // Predicated region
        $region97: #{vit_encoder_forward.1} parent=91 // pred_check
          %p758 = pneg %p213
        $region98: #{vit_encoder_forward.1} parent=91 // pred_check_branch
          %760 = sbr.rel (%p758) target = $region100
        $region99: #{vit_encoder_forward.1} parent=91 // pred_region
          %761 = dma.done %s754, 1024
        $region100: #{vit_encoder_forward.1} parent=91 // pred_fallthru
          _
        %s762 = sand.u32 %s39, 1
        %s763 = scalar_lea.sflag [#allocation5], %s762
        %s764 = sand.u32 %s304, 1
        %s765 = smul.addr %s764, 1024
        %s766 = scalar_lea.vmem [#allocation6], %s765
        // Predicated region
        $region101: #{vit_encoder_forward.1} parent=91 // pred_check
          %p767 = pneg %p317
        $region102: #{vit_encoder_forward.1} parent=91 // pred_check_branch
          %769 = sbr.rel (%p767) target = $region104
        $region103: #{vit_encoder_forward.1} parent=91 // pred_region
          %770 = dma.done %s763, 16384
        $region104: #{vit_encoder_forward.1} parent=91 // pred_fallthru
          _
        %s771 = sand.u32 %s39, 1
        %s772 = scalar_lea.sflag [#allocation8], %s771
        %s773 = sand.u32 %s330, 1
        %s774 = smul.addr %s773, 16
        %s775 = scalar_lea.vmem [#allocation7], %s774
        // Predicated region
        $region105: #{vit_encoder_forward.1} parent=91 // pred_check
          %p776 = pneg %p343
        $region106: #{vit_encoder_forward.1} parent=91 // pred_check_branch
          %778 = sbr.rel (%p776) target = $region108
        $region107: #{vit_encoder_forward.1} parent=91 // pred_region
          %779 = dma.done %s772, 256
        $region108: #{vit_encoder_forward.1} parent=91 // pred_fallthru
          _
        %s780 = sand.u32 %s39, 1
        %s781 = scalar_lea.sflag [#allocation8], %s780
        %s782 = sand.u32 %s356, 1
        %s783 = smul.addr %s782, 1024
        %s784 = scalar_lea.vmem [#allocation9], %s783
        // Predicated region
        $region109: #{vit_encoder_forward.1} parent=91 // pred_check
          %p785 = pneg %p369
        $region110: #{vit_encoder_forward.1} parent=91 // pred_check_branch
          %787 = sbr.rel (%p785) target = $region112
        $region111: #{vit_encoder_forward.1} parent=91 // pred_region
          %788 = dma.done %s781, 16384
        $region112: #{vit_encoder_forward.1} parent=91 // pred_fallthru
          _
        // Predicated region
        $region113: #{vit_encoder_forward.1} parent=91 // pred_check
          %p789 = pneg %p468
        $region114: #{vit_encoder_forward.1} parent=91 // pred_check_branch
          %791 = sbr.rel (%p789) target = $region116
        $region115: #{vit_encoder_forward.1} parent=91 // pred_region
          %792 = dma.done [#allocation11], 2048
        $region116: #{vit_encoder_forward.1} parent=91 // pred_fallthru
          _
        // Predicated region
        $region117: #{vit_encoder_forward.1} parent=91 // pred_check
          %p793 = pneg %p489
        $region118: #{vit_encoder_forward.1} parent=91 // pred_check_branch
          %795 = sbr.rel (%p793) target = $region120
        $region119: #{vit_encoder_forward.1} parent=91 // pred_region
          %796 = dma.done [#allocation11], 32
        $region120: #{vit_encoder_forward.1} parent=91 // pred_fallthru
          _
        %p797 = scmp.lt.s32.totalorder %s43, 1
        %s798 = scalar_select %p797, %s43, 1
        %s799 = smul.addr %s798, 2
        %s800 = smul.addr %s799, 8
        %s801 = scalar_lea.vmem %s0, %s800
        %p802 = pneg %p72
        %p803 = pneg %p69
        %p804 = pneg %p93
        %p805 = pneg %p90
        %p806 = pneg %p114
        %p807 = pneg %p111
        %p808 = pneg %p135
        %p809 = pneg %p132
        %p810 = scmp.lt.s32.totalorder %s44, 1
        %s811 = scalar_select %p810, %s44, 1
        %s812 = smul.addr %s811, 48
        %s813 = smul.addr %s812, 4
        %s814 = scalar_lea.vmem %s4, %s813
        %p815 = pneg %p161
        %p816 = pneg %p158
        %p817 = scmp.lt.s32.totalorder %s44, 1
        %s818 = scalar_select %p817, %s44, 1
        %s819 = smul.addr %s818, 3
        %s820 = scalar_lea.vmem %s5, %s819
        %p821 = pneg %p187
        %p822 = pneg %p184
        %s823 = sand.u32 %s39, 1
        %s824 = scalar_lea.sflag [#allocation5], %s823
        %s825 = sand.u32 %s200, 1
        %s826 = smul.addr %s825, 64
        %s827 = scalar_lea.vmem [#allocation4], %s826
        %p828 = pneg %p213
        %p829 = pneg %p210
        %p830 = scmp.lt.s32.totalorder %s44, 1
        %s831 = scalar_select %p830, %s44, 1
        %s832 = scalar_lea.vmem %s7, %s831
        %p833 = pneg %p239
        %p834 = pneg %p236
        %p835 = scmp.lt.s32.totalorder %s44, 1
        %s836 = scalar_select %p835, %s44, 1
        %s837 = scalar_lea.vmem %s8, %s836
        %p838 = pneg %p265
        %p839 = pneg %p262
        %p840 = scmp.lt.s32.totalorder %s44, 1
        %s841 = scalar_select %p840, %s44, 1
        %s842 = scalar_lea.vmem %s9, %s841
        %p843 = pneg %p291
        %p844 = pneg %p288
        %s845 = sand.u32 %s39, 1
        %s846 = scalar_lea.sflag [#allocation5], %s845
        %s847 = sand.u32 %s304, 1
        %s848 = smul.addr %s847, 1024
        %s849 = scalar_lea.vmem [#allocation6], %s848
        %p850 = pneg %p317
        %p851 = pneg %p314
        %s852 = sand.u32 %s39, 1
        %s853 = scalar_lea.sflag [#allocation8], %s852
        %s854 = sand.u32 %s330, 1
        %s855 = smul.addr %s854, 16
        %s856 = scalar_lea.vmem [#allocation7], %s855
        %p857 = pneg %p343
        %p858 = pneg %p340
        %s859 = sand.u32 %s39, 1
        %s860 = scalar_lea.sflag [#allocation8], %s859
        %s861 = sand.u32 %s356, 1
        %s862 = smul.addr %s861, 1024
        %s863 = scalar_lea.vmem [#allocation9], %s862
        %p864 = pneg %p369
        %p865 = pneg %p366
        %p866 = scmp.lt.s32.totalorder %s44, 1
        %s867 = scalar_select %p866, %s44, 1
        %s868 = scalar_lea.vmem %s13, %s867
        %p869 = pneg %p395
        %p870 = pneg %p392
        %p871 = scmp.lt.s32.totalorder %s44, 1
        %s872 = scalar_select %p871, %s44, 1
        %s873 = scalar_lea.vmem %s14, %s872
        %p874 = pneg %p421
        %p875 = pneg %p418
        %p876 = scmp.lt.s32.totalorder %s44, 1
        %s877 = scalar_select %p876, %s44, 1
        %s878 = scalar_lea.vmem %s15, %s877
        %p879 = pneg %p447
        %p880 = pneg %p444
        %p881 = pneg %p468
        %p882 = pneg %p465
        %p883 = pneg %p489
        %p884 = pneg %p486
        %p885 = pneg %p515
        %p886 = pneg %p512
        %p887 = scmp.lt.s32.totalorder %s43, 1
        %s888 = scalar_select %p887, %s43, 1
        %s889 = smul.addr %s888, 8
        %s890 = scalar_lea.vmem %s18, %s889
        %p891 = pneg %p541
        %p892 = pneg %p538
        %p893 = scmp.lt.s32.totalorder %s43, 1
        %s894 = scalar_select %p893, %s43, 1
        %s895 = smul.addr %s894, 2
        %s896 = smul.addr %s895, 8
        %s897 = scalar_lea.vmem %s19, %s896
        %p898 = scmp.lt.s32.totalorder %s43, 1
        %s899 = scalar_select %p898, %s43, 1
        %s900 = smul.addr %s899, 2
        %s901 = smul.addr %s900, 8
        %s902 = scalar_lea.vmem %s0, %s901
        %p903 = scmp.lt.s32.totalorder %s44, 1
        %s904 = scalar_select %p903, %s44, 1
        %s905 = smul.addr %s904, 48
        %s906 = smul.addr %s905, 4
        %s907 = scalar_lea.vmem %s4, %s906
        %p908 = scmp.lt.s32.totalorder %s44, 1
        %s909 = scalar_select %p908, %s44, 1
        %s910 = smul.addr %s909, 3
        %s911 = scalar_lea.vmem %s5, %s910
        %p912 = scmp.lt.s32.totalorder %s44, 1
        %s913 = scalar_select %p912, %s44, 1
        %s914 = scalar_lea.vmem %s7, %s913
        %p915 = scmp.lt.s32.totalorder %s44, 1
        %s916 = scalar_select %p915, %s44, 1
        %s917 = scalar_lea.vmem %s8, %s916
        %p918 = scmp.lt.s32.totalorder %s44, 1
        %s919 = scalar_select %p918, %s44, 1
        %s920 = scalar_lea.vmem %s9, %s919
        %p921 = scmp.lt.s32.totalorder %s44, 1
        %s922 = scalar_select %p921, %s44, 1
        %s923 = scalar_lea.vmem %s13, %s922
        %p924 = scmp.lt.s32.totalorder %s44, 1
        %s925 = scalar_select %p924, %s44, 1
        %s926 = scalar_lea.vmem %s14, %s925
        %p927 = scmp.lt.s32.totalorder %s44, 1
        %s928 = scalar_select %p927, %s44, 1
        %s929 = scalar_lea.vmem %s15, %s928
        %p930 = scmp.lt.s32.totalorder %s43, 1
        %s931 = scalar_select %p930, %s43, 1
        %s932 = smul.addr %s931, 8
        %s933 = scalar_lea.vmem %s18, %s932
        %p934 = scmp.lt.s32.totalorder %s43, 1
        %s935 = scalar_select %p934, %s43, 1
        %s936 = smul.addr %s935, 2
        %s937 = smul.addr %s936, 8
        %s938 = scalar_lea.vmem %s19, %s937
        %p940 = scmp.eq.s32.totalorder %s44, 0
        // Predicated region
        $region121: #{vit_encoder_forward.1} parent=91 // pred_check
          %p941 = pneg %p940
        $region122: #{vit_encoder_forward.1} parent=91 // pred_check_branch
          %943 = sbr.rel (%p941) target = $region124
        $region123: #{vit_encoder_forward.1} parent=91 // pred_region
          %v944 = vld [vmem:[%s902] sm:$0xff]
          %v945 = vld [vmem:[%s902 + $0x8] sm:$0xff]
          %v946 = vmax.f32 %v944, 0.0
          %v947 = vmax.f32 %v945, 0.0
          %v948 = vpack.c.bf16 %v946, %v946
          %v949 = vpack.c.bf16 %v947, %v947
          %v950 = vld [vmem:[%s1] sm:$0xf]
          %v951 = vld [vmem:[%s1 + $0x4] sm:$0xf]
          %v952 = vld [vmem:[%s1 + $0x8] sm:$0xf]
          %v953 = vld [vmem:[%s1 + $0xc] sm:$0xf]
          %v954 = vld [vmem:[%s1 + $0x10] sm:$0xf]
          %v955 = vld [vmem:[%s1 + $0x14] sm:$0xf]
          %v956 = vld [vmem:[%s1 + $0x18] sm:$0xf]
          %v957 = vld [vmem:[%s1 + $0x1c] sm:$0xf]
          %v958 = vld [vmem:[%s1 + $0x20] sm:$0xf]
          %v959 = vld [vmem:[%s1 + $0x24] sm:$0xf]
          %v960 = vld [vmem:[%s1 + $0x28] sm:$0xf]
          %v961 = vld [vmem:[%s1 + $0x2c] sm:$0xf]
          %v962 = vld [vmem:[%s1 + $0x30] sm:$0xf]
          %v963 = vld [vmem:[%s1 + $0x34] sm:$0xf]
          %v964 = vld [vmem:[%s1 + $0x38] sm:$0xf]
          %v965 = vld [vmem:[%s1 + $0x3c] sm:$0xf]
          %v966 = vld [vmem:[%s1 + $0x40] sm:$0xf]
          %v967 = vld [vmem:[%s1 + $0x44] sm:$0xf]
          %v968 = vld [vmem:[%s1 + $0x48] sm:$0xf]
          %v969 = vld [vmem:[%s1 + $0x4c] sm:$0xf]
          %v970 = vld [vmem:[%s1 + $0x50] sm:$0xf]
          %v971 = vld [vmem:[%s1 + $0x54] sm:$0xf]
          %v972 = vld [vmem:[%s1 + $0x58] sm:$0xf]
          %v973 = vld [vmem:[%s1 + $0x5c] sm:$0xf]
          %v974 = vld [vmem:[#allocation2] sm:$0x1]
          %v976 = vlaneseq
          %v977 = vshrl.u32 %v976, 7
          %v978 = vsub.s32 0, %v977
          %v979 = vrot.slane %v974, %v978
          %v1005 = vunpack.c.l.b16 %v950
          %v1006 = vunpack.c.l.b16 %v951
          %v1007 = vunpack.c.l.b16 %v952
          %v1008 = vunpack.c.l.b16 %v953
          %v1009 = vunpack.c.l.b16 %v954
          %v1010 = vunpack.c.l.b16 %v955
          %v1011 = vunpack.c.l.b16 %v956
          %v1012 = vunpack.c.l.b16 %v957
          %v1013 = vunpack.c.l.b16 %v958
          %v1014 = vunpack.c.l.b16 %v959
          %v1015 = vunpack.c.l.b16 %v960
          %v1016 = vunpack.c.l.b16 %v961
          %v1017 = vunpack.c.l.b16 %v962
          %v1018 = vunpack.c.l.b16 %v963
          %v1019 = vunpack.c.l.b16 %v964
          %v1020 = vunpack.c.l.b16 %v965
          %v1021 = vunpack.c.l.b16 %v966
          %v1022 = vunpack.c.l.b16 %v967
          %v1023 = vunpack.c.l.b16 %v968
          %v1024 = vunpack.c.l.b16 %v969
          %v1025 = vunpack.c.l.b16 %v970
          %v1026 = vunpack.c.l.b16 %v971
          %v1027 = vunpack.c.l.b16 %v972
          %v1028 = vunpack.c.l.b16 %v973
          %v1029 = vpack.c.b16 %v1006, %v1005
          %v1030 = vpack.c.b16 %v1008, %v1007
          %v1031 = vpack.c.b16 %v1010, %v1009
          %v1032 = vpack.c.b16 %v1012, %v1011
          %v1033 = vpack.c.b16 %v1014, %v1013
          %v1034 = vpack.c.b16 %v1016, %v1015
          %v1035 = vpack.c.b16 %v1018, %v1017
          %v1036 = vpack.c.b16 %v1020, %v1019
          %v1037 = vpack.c.b16 %v1022, %v1021
          %v1038 = vpack.c.b16 %v1024, %v1023
          %v1039 = vpack.c.b16 %v1026, %v1025
          %v1040 = vpack.c.b16 %v1028, %v1027
          %vm1053 = vcmask 523264
          %v1055 = vsel %vm1053, %v949, 0
          %1057 = vmatprep.subr.bf16.mxu0 0
          %1058 = vmatpush1.bf16.msra.mxu0 %v1029
          %1059 = vmatprep.subr.bf16.mxu0 0
          %1060 = vmatpush1.bf16.msra.mxu0 %v1030
          %1061 = vmatprep.subr.bf16.mxu0 0
          %1062 = vmatpush1.bf16.msra.mxu0 %v1031
          %1063 = vmatprep.subr.bf16.mxu0 0
          %1064 = vmatpush1.bf16.msra.mxu0 %v1032
          %1065 = vmatprep.subr.bf16.mxu0 0
          %1066 = vmatpush1.bf16.msra.mxu0 %v1033
          %1067 = vmatprep.subr.bf16.mxu0 0
          %1068 = vmatpush1.bf16.msra.mxu0 %v1034
          %1069 = vmatprep.subr.bf16.mxu0 0
          %1070 = vmatpush1.bf16.msra.mxu0 %v1035
          %1071 = vmatprep.subr.bf16.mxu0 0
          %1072 = vmatpush1.bf16.msra.mxu0 %v1036
          %1073 = vmatprep.subr.bf16.mxu0 0
          %1074 = vmatpush1.bf16.msra.mxu0 %v1037
          %1075 = vmatprep.subr.bf16.mxu0 0
          %1076 = vmatpush1.bf16.msra.mxu0 %v1038
          %1077 = vmatprep.subr.bf16.mxu0 0
          %1078 = vmatpush1.bf16.msra.mxu0 %v1039
          %1079 = vmatprep.subr.bf16.mxu0 0
          %1080 = vmatpush1.bf16.msra.mxu0 %v1040
          %1081 = vmatprep.subr.bf16.mxu0 0
          %1082 = vmatpush1.bf16.msra.mxu0 0
          %1083 = vmatprep.subr.bf16.mxu0 0
          %1084 = vmatpush1.bf16.msra.mxu0 0
          %1085 = vmatprep.subr.bf16.mxu0 0
          %1086 = vmatpush1.bf16.msra.mxu0 0
          %1087 = vmatprep.subr.bf16.mxu0 0
          %1088 = vmatpush1.bf16.msra.mxu0 0
          %1089 = vmatprep.mubr.bf16.mxu0 %v1055
          %1090 = vmatmul.mubr.bf16.gmra.mrb[0].mxu0 %v948
          %v1091 = vpop.f32.mrb[0].mxu0
          %v1092 = vadd.f32 %v979, %v1091
          %v1093 = vpop.f32.mrb[0].mxu0
          %v1094 = vpop.f32.mrb[0].mxu0
          %v1095 = vpop.f32.mrb[0].mxu0
          %1096 = vdwg.mxu0
          %v1097 = vld [vmem:[%s3] sm:$0xff]
          %v1098 = vadd.f32 %v1092, %v1097
          %1099 = vst [vmem:[%s933] sm:$0xff] %v1098
        $region124: #{vit_encoder_forward.1} parent=91 // pred_fallthru
          _
        %v1100 = vld [vmem:[%s933] sm:$0xff]
        %v1101 = vpack.c.bf16 %v1100, %v1100
        %v1102 = vld [vmem:[%s907] sm:$0xff]
        %v1103 = vld [vmem:[%s907 + $0x8] sm:$0xf]
        %v1104 = vld [vmem:[%s907 + $0xc] sm:$0xff]
        %v1105 = vld [vmem:[%s907 + $0x14] sm:$0xf]
        %v1106 = vld [vmem:[%s907 + $0x18] sm:$0xff]
        %v1107 = vld [vmem:[%s907 + $0x20] sm:$0xf]
        %v1108 = vld [vmem:[%s907 + $0x24] sm:$0xff]
        %v1109 = vld [vmem:[%s907 + $0x2c] sm:$0xf]
        %v1110 = vld [vmem:[%s907 + $0x30] sm:$0xff]
        %v1111 = vld [vmem:[%s907 + $0x38] sm:$0xf]
        %v1112 = vld [vmem:[%s907 + $0x3c] sm:$0xff]
        %v1113 = vld [vmem:[%s907 + $0x44] sm:$0xf]
        %v1114 = vld [vmem:[%s907 + $0x48] sm:$0xff]
        %v1115 = vld [vmem:[%s907 + $0x50] sm:$0xf]
        %v1116 = vld [vmem:[%s907 + $0x54] sm:$0xff]
        %v1117 = vld [vmem:[%s907 + $0x5c] sm:$0xf]
        %v1118 = vld [vmem:[%s907 + $0x60] sm:$0xff]
        %v1119 = vld [vmem:[%s907 + $0x68] sm:$0xf]
        %v1120 = vld [vmem:[%s907 + $0x6c] sm:$0xff]
        %v1121 = vld [vmem:[%s907 + $0x74] sm:$0xf]
        %v1122 = vld [vmem:[%s907 + $0x78] sm:$0xff]
        %v1123 = vld [vmem:[%s907 + $0x80] sm:$0xf]
        %v1124 = vld [vmem:[%s907 + $0x84] sm:$0xff]
        %v1125 = vld [vmem:[%s907 + $0x8c] sm:$0xf]
        %v1126 = vld [vmem:[%s907 + $0x90] sm:$0xff]
        %v1127 = vld [vmem:[%s907 + $0x98] sm:$0xf]
        %v1128 = vld [vmem:[%s907 + $0x9c] sm:$0xff]
        %v1129 = vld [vmem:[%s907 + $0xa4] sm:$0xf]
        %v1130 = vld [vmem:[%s907 + $0xa8] sm:$0xff]
        %v1131 = vld [vmem:[%s907 + $0xb0] sm:$0xf]
        %v1132 = vld [vmem:[%s907 + $0xb4] sm:$0xff]
        %v1133 = vld [vmem:[%s907 + $0xbc] sm:$0xf]
        %v1134 = vld [vmem:[%s911] sm:$0x7]
        %v1136 = vlaneseq
        %v1137 = vshrl.u32 %v1136, 7
        %v1138 = vsub.s32 0, %v1137
        %v1139 = vrot.slane %v1134, %v1138
        %v1140 = vlaneseq
        %v1141 = vshrl.u32 %v1140, 7
        %v1142 = vsub.s32 1, %v1141
        %v1143 = vrot.slane %v1134, %v1142
        %v1144 = vlaneseq
        %v1145 = vshrl.u32 %v1144, 7
        %v1146 = vsub.s32 2, %v1145
        %v1147 = vrot.slane %v1134, %v1146
        %v1183 = vunpack.c.l.b16 %v1102
        %v1184 = vunpack.c.h.b16 %v1102
        %v1185 = vunpack.c.l.b16 %v1103
        %v1186 = vunpack.c.l.b16 %v1104
        %v1187 = vunpack.c.h.b16 %v1104
        %v1188 = vunpack.c.l.b16 %v1105
        %v1189 = vunpack.c.l.b16 %v1106
        %v1190 = vunpack.c.h.b16 %v1106
        %v1191 = vunpack.c.l.b16 %v1107
        %v1192 = vunpack.c.l.b16 %v1108
        %v1193 = vunpack.c.h.b16 %v1108
        %v1194 = vunpack.c.l.b16 %v1109
        %v1195 = vunpack.c.l.b16 %v1110
        %v1196 = vunpack.c.h.b16 %v1110
        %v1197 = vunpack.c.l.b16 %v1111
        %v1198 = vunpack.c.l.b16 %v1112
        %v1199 = vunpack.c.h.b16 %v1112
        %v1200 = vunpack.c.l.b16 %v1113
        %v1201 = vunpack.c.l.b16 %v1114
        %v1202 = vunpack.c.h.b16 %v1114
        %v1203 = vunpack.c.l.b16 %v1115
        %v1204 = vunpack.c.l.b16 %v1116
        %v1205 = vunpack.c.h.b16 %v1116
        %v1206 = vunpack.c.l.b16 %v1117
        %v1207 = vunpack.c.l.b16 %v1118
        %v1208 = vunpack.c.h.b16 %v1118
        %v1209 = vunpack.c.l.b16 %v1119
        %v1210 = vunpack.c.l.b16 %v1120
        %v1211 = vunpack.c.h.b16 %v1120
        %v1212 = vunpack.c.l.b16 %v1121
        %v1213 = vunpack.c.l.b16 %v1122
        %v1214 = vunpack.c.h.b16 %v1122
        %v1215 = vunpack.c.l.b16 %v1123
        %v1216 = vunpack.c.l.b16 %v1124
        %v1217 = vunpack.c.h.b16 %v1124
        %v1218 = vunpack.c.l.b16 %v1125
        %v1219 = vunpack.c.l.b16 %v1126
        %v1220 = vunpack.c.h.b16 %v1126
        %v1221 = vunpack.c.l.b16 %v1127
        %v1222 = vunpack.c.l.b16 %v1128
        %v1223 = vunpack.c.h.b16 %v1128
        %v1224 = vunpack.c.l.b16 %v1129
        %v1225 = vunpack.c.l.b16 %v1130
        %v1226 = vunpack.c.h.b16 %v1130
        %v1227 = vunpack.c.l.b16 %v1131
        %v1228 = vunpack.c.l.b16 %v1132
        %v1229 = vunpack.c.h.b16 %v1132
        %v1230 = vunpack.c.l.b16 %v1133
        %v1231 = vpack.c.b16 %v1186, %v1183
        %v1232 = vpack.c.b16 %v1187, %v1184
        %v1233 = vpack.c.b16 %v1188, %v1185
        %v1234 = vpack.c.b16 %v1192, %v1189
        %v1235 = vpack.c.b16 %v1193, %v1190
        %v1236 = vpack.c.b16 %v1194, %v1191
        %v1237 = vpack.c.b16 %v1198, %v1195
        %v1238 = vpack.c.b16 %v1199, %v1196
        %v1239 = vpack.c.b16 %v1200, %v1197
        %v1240 = vpack.c.b16 %v1204, %v1201
        %v1241 = vpack.c.b16 %v1205, %v1202
        %v1242 = vpack.c.b16 %v1206, %v1203
        %v1243 = vpack.c.b16 %v1210, %v1207
        %v1244 = vpack.c.b16 %v1211, %v1208
        %v1245 = vpack.c.b16 %v1212, %v1209
        %v1246 = vpack.c.b16 %v1216, %v1213
        %v1247 = vpack.c.b16 %v1217, %v1214
        %v1248 = vpack.c.b16 %v1218, %v1215
        %v1249 = vpack.c.b16 %v1222, %v1219
        %v1250 = vpack.c.b16 %v1223, %v1220
        %v1251 = vpack.c.b16 %v1224, %v1221
        %v1252 = vpack.c.b16 %v1228, %v1225
        %v1253 = vpack.c.b16 %v1229, %v1226
        %v1254 = vpack.c.b16 %v1230, %v1227
        %1279 = vmatprep.subr.bf16.mxu0 %v1232
        %1280 = vmatpush1.bf16.msra.mxu0 %v1231
        %1281 = vmatprep.subr.bf16.mxu0 %v1235
        %1282 = vmatpush1.bf16.msra.mxu0 %v1234
        %1283 = vmatprep.subr.bf16.mxu0 %v1238
        %1284 = vmatpush1.bf16.msra.mxu0 %v1237
        %1285 = vmatprep.subr.bf16.mxu0 %v1241
        %1286 = vmatpush1.bf16.msra.mxu0 %v1240
        %1287 = vmatprep.subr.bf16.mxu0 %v1244
        %1288 = vmatpush1.bf16.msra.mxu0 %v1243
        %1289 = vmatprep.subr.bf16.mxu0 %v1247
        %1290 = vmatpush1.bf16.msra.mxu0 %v1246
        %1291 = vmatprep.subr.bf16.mxu0 %v1250
        %1292 = vmatpush1.bf16.msra.mxu0 %v1249
        %1293 = vmatprep.subr.bf16.mxu0 %v1253
        %1294 = vmatpush1.bf16.msra.mxu0 %v1252
        %1295 = vmatprep.subr.bf16.mxu0 0
        %1296 = vmatpush1.bf16.msra.mxu0 0
        %1297 = vmatprep.subr.bf16.mxu0 0
        %1298 = vmatpush1.bf16.msra.mxu0 0
        %1299 = vmatprep.subr.bf16.mxu0 0
        %1300 = vmatpush1.bf16.msra.mxu0 0
        %1301 = vmatprep.subr.bf16.mxu0 0
        %1302 = vmatpush1.bf16.msra.mxu0 0
        %1303 = vmatprep.subr.bf16.mxu0 0
        %1304 = vmatpush1.bf16.msra.mxu0 0
        %1305 = vmatprep.subr.bf16.mxu0 0
        %1306 = vmatpush1.bf16.msra.mxu0 0
        %1307 = vmatprep.subr.bf16.mxu0 0
        %1308 = vmatpush1.bf16.msra.mxu0 0
        %1309 = vmatprep.subr.bf16.mxu0 0
        %1310 = vmatpush1.bf16.msra.mxu0 0
        %1311 = vmatprep.mubr.bf16.mxu0 0
        %1312 = vmatmul.mubr.bf16.gmra.mrb[0].mxu0 %v1101
        %v1313 = vpop.f32.mrb[0].mxu0
        %v1314 = vadd.f32 %v1139, %v1313
        %v1315 = vpop.f32.mrb[0].mxu0
        %v1316 = vadd.f32 %v1143, %v1315
        %v1317 = vpop.f32.mrb[0].mxu0
        %v1318 = vpop.f32.mrb[0].mxu0
        %1319 = vdwg.mxu0
        %1320 = vmatprep.subr.bf16.mxu0 0
        %1321 = vmatpush1.bf16.msra.mxu0 %v1233
        %1322 = vmatprep.subr.bf16.mxu0 0
        %1323 = vmatpush1.bf16.msra.mxu0 %v1236
        %1324 = vmatprep.subr.bf16.mxu0 0
        %1325 = vmatpush1.bf16.msra.mxu0 %v1239
        %1326 = vmatprep.subr.bf16.mxu0 0
        %1327 = vmatpush1.bf16.msra.mxu0 %v1242
        %1328 = vmatprep.subr.bf16.mxu0 0
        %1329 = vmatpush1.bf16.msra.mxu0 %v1245
        %1330 = vmatprep.subr.bf16.mxu0 0
        %1331 = vmatpush1.bf16.msra.mxu0 %v1248
        %1332 = vmatprep.subr.bf16.mxu0 0
        %1333 = vmatpush1.bf16.msra.mxu0 %v1251
        %1334 = vmatprep.subr.bf16.mxu0 0
        %1335 = vmatpush1.bf16.msra.mxu0 %v1254
        %1336 = vmatprep.subr.bf16.mxu0 0
        %1337 = vmatpush1.bf16.msra.mxu0 0
        %1338 = vmatprep.subr.bf16.mxu0 0
        %1339 = vmatpush1.bf16.msra.mxu0 0
        %1340 = vmatprep.subr.bf16.mxu0 0
        %1341 = vmatpush1.bf16.msra.mxu0 0
        %1342 = vmatprep.subr.bf16.mxu0 0
        %1343 = vmatpush1.bf16.msra.mxu0 0
        %1344 = vmatprep.subr.bf16.mxu0 0
        %1345 = vmatpush1.bf16.msra.mxu0 0
        %1346 = vmatprep.subr.bf16.mxu0 0
        %1347 = vmatpush1.bf16.msra.mxu0 0
        %1348 = vmatprep.subr.bf16.mxu0 0
        %1349 = vmatpush1.bf16.msra.mxu0 0
        %1350 = vmatprep.subr.bf16.mxu0 0
        %1351 = vmatpush1.bf16.msra.mxu0 0
        %1352 = vmatprep.mubr.bf16.mxu0 0
        %1353 = vmatmul.mubr.bf16.gmra.mrb[0].mxu0 %v1101
        %v1354 = vpop.f32.mrb[0].mxu0
        %v1355 = vadd.f32 %v1147, %v1354
        %v1356 = vpop.f32.mrb[0].mxu0
        %v1357 = vpop.f32.mrb[0].mxu0
        %v1358 = vpop.f32.mrb[0].mxu0
        %1359 = vdwg.mxu0
        %v1360 = vpack.c.bf16 %v1314, %v1314
        %v1361 = vpack.c.bf16 %v1316, %v1316
        %v1362 = vpack.c.bf16 %v1355, %v1355
        %vm1363 = vcmask 130048
        %v1365 = vsel %vm1363, %v1360, 0
        %v1368 = vsel %vm1363, %v1361, 0
        %1370 = vmatprep.subr.bf16.mxu0 0
        %1371 = vmatpush1.bf16.xpose.msra.mxu0 %v1368
        %1372 = vmatprep.subr.bf16.mxu0 0
        %1373 = vmatpush1.bf16.xpose.msra.mxu0 0
        %1374 = vmatprep.subr.bf16.mxu0 0
        %1375 = vmatpush1.bf16.xpose.msra.mxu0 0
        %1376 = vmatprep.subr.bf16.mxu0 0
        %1377 = vmatpush1.bf16.xpose.msra.mxu0 0
        %1378 = vmatprep.subr.bf16.mxu0 0
        %1379 = vmatpush1.bf16.xpose.msra.mxu0 0
        %1380 = vmatprep.subr.bf16.mxu0 0
        %1381 = vmatpush1.bf16.xpose.msra.mxu0 0
        %1382 = vmatprep.subr.bf16.mxu0 0
        %1383 = vmatpush1.bf16.xpose.msra.mxu0 0
        %1384 = vmatprep.subr.bf16.mxu0 0
        %1385 = vmatpush1.bf16.xpose.msra.mxu0 0
        %1386 = vmatprep.subr.bf16.mxu0 0
        %1387 = vmatpush1.bf16.xpose.msra.mxu0 0
        %1388 = vmatprep.subr.bf16.mxu0 0
        %1389 = vmatpush1.bf16.xpose.msra.mxu0 0
        %1390 = vmatprep.subr.bf16.mxu0 0
        %1391 = vmatpush1.bf16.xpose.msra.mxu0 0
        %1392 = vmatprep.subr.bf16.mxu0 0
        %1393 = vmatpush1.bf16.xpose.msra.mxu0 0
        %1394 = vmatprep.subr.bf16.mxu0 0
        %1395 = vmatpush1.bf16.xpose.msra.mxu0 0
        %1396 = vmatprep.subr.bf16.mxu0 0
        %1397 = vmatpush1.bf16.xpose.msra.mxu0 0
        %1398 = vmatprep.subr.bf16.mxu0 0
        %1399 = vmatpush1.bf16.xpose.msra.mxu0 0
        %1400 = vmatprep.subr.bf16.mxu0 0
        %1401 = vmatpush1.bf16.xpose.msra.mxu0 0
        %1402 = vmatprep.mubr.bf16.mxu0 0
        %1403 = vmatmul.mubr.bf16.gmra.mrb[0].mxu0 %v1365
        %v1404 = vpop.f32.mrb[0].mxu0
        %v1405 = vadd.f32 0.0, %v1404
        %v1406 = vpop.f32.mrb[0].mxu0
        %v1407 = vpop.f32.mrb[0].mxu0
        %v1408 = vpop.f32.mrb[0].mxu0
        %1409 = vdwg.mxu0
        %v1410 = vmul.f32 %v1405, 0.25
        %vm1411 = vcmask 64512
        %v1412 = vsel %vm1411, %v1410, -inf
        %1413 = vmax.xlane.f32.xlu0 %v1412
        %v1414 = vpop.xlane.xlu0 %1413
        %v1415 = vsub.f32 %v1410, %v1414
        %v1416 = vmul.f32 %v1415, 1.442695
        %v1417 = vpow.pop %v1416
        %v1418 = vsel %vm1411, %v1417, 0.0
        %1419 = vadd.xlane.f32.xlu0 %v1418
        %v1420 = vpop.xlane.xlu0 %1419
        %v1421 = vrcp.pop %v1420
        %v1422 = vmul.f32 %v1417, %v1421
        %v1423 = vpack.c.bf16 %v1422, %v1422
        %v1425 = vsel %vm1411, %v1423, 0
        %vm1427 = vcmask 1043456
        %v1429 = vsel %vm1427, %v1362, 0
        %1431 = vmatprep.subr.bf16.mxu0 0
        %1432 = vmatpush1.bf16.msra.mxu0 %v1429
        %1433 = vmatprep.subr.bf16.mxu0 0
        %1434 = vmatpush1.bf16.msra.mxu0 0
        %1435 = vmatprep.subr.bf16.mxu0 0
        %1436 = vmatpush1.bf16.msra.mxu0 0
        %1437 = vmatprep.subr.bf16.mxu0 0
        %1438 = vmatpush1.bf16.msra.mxu0 0
        %1439 = vmatprep.subr.bf16.mxu0 0
        %1440 = vmatpush1.bf16.msra.mxu0 0
        %1441 = vmatprep.subr.bf16.mxu0 0
        %1442 = vmatpush1.bf16.msra.mxu0 0
        %1443 = vmatprep.subr.bf16.mxu0 0
        %1444 = vmatpush1.bf16.msra.mxu0 0
        %1445 = vmatprep.subr.bf16.mxu0 0
        %1446 = vmatpush1.bf16.msra.mxu0 0
        %1447 = vmatprep.subr.bf16.mxu0 0
        %1448 = vmatpush1.bf16.msra.mxu0 0
        %1449 = vmatprep.subr.bf16.mxu0 0
        %1450 = vmatpush1.bf16.msra.mxu0 0
        %1451 = vmatprep.subr.bf16.mxu0 0
        %1452 = vmatpush1.bf16.msra.mxu0 0
        %1453 = vmatprep.subr.bf16.mxu0 0
        %1454 = vmatpush1.bf16.msra.mxu0 0
        %1455 = vmatprep.subr.bf16.mxu0 0
        %1456 = vmatpush1.bf16.msra.mxu0 0
        %1457 = vmatprep.subr.bf16.mxu0 0
        %1458 = vmatpush1.bf16.msra.mxu0 0
        %1459 = vmatprep.subr.bf16.mxu0 0
        %1460 = vmatpush1.bf16.msra.mxu0 0
        %1461 = vmatprep.subr.bf16.mxu0 0
        %1462 = vmatpush1.bf16.msra.mxu0 0
        %1463 = vmatprep.mubr.bf16.mxu0 0
        %1464 = vmatmul.mubr.bf16.gmra.mrb[0].mxu0 %v1425
        %v1465 = vpop.f32.mrb[0].mxu0
        %v1466 = vadd.f32 0.0, %v1465
        %v1467 = vpop.f32.mrb[0].mxu0
        %v1468 = vpop.f32.mrb[0].mxu0
        %v1469 = vpop.f32.mrb[0].mxu0
        %1470 = vdwg.mxu0
        %v1471 = vpack.c.bf16 %v1466, %v1466
        %v1472 = vld [vmem:[%s757] sm:$0xf]
        %v1473 = vld [vmem:[%s757 + $0x4] sm:$0xf]
        %1475 = vrot.lane.b32.xlu0 %v1360, 112
        %v1476 = vpop.permute.xlu0 %1475
        %1478 = vrot.lane.b32.xlu0 %v1361, 112
        %v1479 = vpop.permute.xlu0 %1478
        %v1481 = vsel %vm1363, %v1476, 0
        %v1484 = vsel %vm1363, %v1479, 0
        %1486 = vmatprep.subr.bf16.mxu0 0
        %1487 = vmatpush1.bf16.xpose.msra.mxu0 %v1484
        %1488 = vmatprep.subr.bf16.mxu0 0
        %1489 = vmatpush1.bf16.xpose.msra.mxu0 0
        %1490 = vmatprep.subr.bf16.mxu0 0
        %1491 = vmatpush1.bf16.xpose.msra.mxu0 0
        %1492 = vmatprep.subr.bf16.mxu0 0
        %1493 = vmatpush1.bf16.xpose.msra.mxu0 0
        %1494 = vmatprep.subr.bf16.mxu0 0
        %1495 = vmatpush1.bf16.xpose.msra.mxu0 0
        %1496 = vmatprep.subr.bf16.mxu0 0
        %1497 = vmatpush1.bf16.xpose.msra.mxu0 0
        %1498 = vmatprep.subr.bf16.mxu0 0
        %1499 = vmatpush1.bf16.xpose.msra.mxu0 0
        %1500 = vmatprep.subr.bf16.mxu0 0
        %1501 = vmatpush1.bf16.xpose.msra.mxu0 0
        %1502 = vmatprep.subr.bf16.mxu0 0
        %1503 = vmatpush1.bf16.xpose.msra.mxu0 0
        %1504 = vmatprep.subr.bf16.mxu0 0
        %1505 = vmatpush1.bf16.xpose.msra.mxu0 0
        %1506 = vmatprep.subr.bf16.mxu0 0
        %1507 = vmatpush1.bf16.xpose.msra.mxu0 0
        %1508 = vmatprep.subr.bf16.mxu0 0
        %1509 = vmatpush1.bf16.xpose.msra.mxu0 0
        %1510 = vmatprep.subr.bf16.mxu0 0
        %1511 = vmatpush1.bf16.xpose.msra.mxu0 0
        %1512 = vmatprep.subr.bf16.mxu0 0
        %1513 = vmatpush1.bf16.xpose.msra.mxu0 0
        %1514 = vmatprep.subr.bf16.mxu0 0
        %1515 = vmatpush1.bf16.xpose.msra.mxu0 0
        %1516 = vmatprep.subr.bf16.mxu0 0
        %1517 = vmatpush1.bf16.xpose.msra.mxu0 0
        %1518 = vmatprep.mubr.bf16.mxu0 0
        %1519 = vmatmul.mubr.bf16.gmra.mrb[0].mxu0 %v1481
        %v1520 = vpop.f32.mrb[0].mxu0
        %v1521 = vadd.f32 0.0, %v1520
        %v1522 = vpop.f32.mrb[0].mxu0
        %v1523 = vpop.f32.mrb[0].mxu0
        %v1524 = vpop.f32.mrb[0].mxu0
        %1525 = vdwg.mxu0
        %v1526 = vmul.f32 %v1521, 0.25
        %v1527 = vsel %vm1411, %v1526, -inf
        %1528 = vmax.xlane.f32.xlu0 %v1527
        %v1529 = vpop.xlane.xlu0 %1528
        %v1530 = vsub.f32 %v1526, %v1529
        %v1531 = vmul.f32 %v1530, 1.442695
        %v1532 = vpow.pop %v1531
        %v1533 = vsel %vm1411, %v1532, 0.0
        %1534 = vadd.xlane.f32.xlu0 %v1533
        %v1535 = vpop.xlane.xlu0 %1534
        %v1536 = vrcp.pop %v1535
        %v1537 = vmul.f32 %v1532, %v1536
        %v1538 = vpack.c.bf16 %v1537, %v1537
        %1540 = vrot.lane.b32.xlu0 %v1362, 112
        %v1541 = vpop.permute.xlu0 %1540
        %v1543 = vsel %vm1411, %v1538, 0
        %v1546 = vsel %vm1427, %v1541, 0
        %1548 = vmatprep.subr.bf16.mxu0 0
        %1549 = vmatpush1.bf16.msra.mxu0 %v1546
        %1550 = vmatprep.subr.bf16.mxu0 0
        %1551 = vmatpush1.bf16.msra.mxu0 0
        %1552 = vmatprep.subr.bf16.mxu0 0
        %1553 = vmatpush1.bf16.msra.mxu0 0
        %1554 = vmatprep.subr.bf16.mxu0 0
        %1555 = vmatpush1.bf16.msra.mxu0 0
        %1556 = vmatprep.subr.bf16.mxu0 0
        %1557 = vmatpush1.bf16.msra.mxu0 0
        %1558 = vmatprep.subr.bf16.mxu0 0
        %1559 = vmatpush1.bf16.msra.mxu0 0
        %1560 = vmatprep.subr.bf16.mxu0 0
        %1561 = vmatpush1.bf16.msra.mxu0 0
        %1562 = vmatprep.subr.bf16.mxu0 0
        %1563 = vmatpush1.bf16.msra.mxu0 0
        %1564 = vmatprep.subr.bf16.mxu0 0
        %1565 = vmatpush1.bf16.msra.mxu0 0
        %1566 = vmatprep.subr.bf16.mxu0 0
        %1567 = vmatpush1.bf16.msra.mxu0 0
        %1568 = vmatprep.subr.bf16.mxu0 0
        %1569 = vmatpush1.bf16.msra.mxu0 0
        %1570 = vmatprep.subr.bf16.mxu0 0
        %1571 = vmatpush1.bf16.msra.mxu0 0
        %1572 = vmatprep.subr.bf16.mxu0 0
        %1573 = vmatpush1.bf16.msra.mxu0 0
        %1574 = vmatprep.subr.bf16.mxu0 0
        %1575 = vmatpush1.bf16.msra.mxu0 0
        %1576 = vmatprep.subr.bf16.mxu0 0
        %1577 = vmatpush1.bf16.msra.mxu0 0
        %1578 = vmatprep.subr.bf16.mxu0 0
        %1579 = vmatpush1.bf16.msra.mxu0 0
        %1580 = vmatprep.mubr.bf16.mxu0 0
        %1581 = vmatmul.mubr.bf16.gmra.mrb[0].mxu0 %v1543
        %v1582 = vpop.f32.mrb[0].mxu0
        %v1583 = vadd.f32 0.0, %v1582
        %v1584 = vpop.f32.mrb[0].mxu0
        %v1585 = vpop.f32.mrb[0].mxu0
        %v1586 = vpop.f32.mrb[0].mxu0
        %1587 = vdwg.mxu0
        %v1588 = vpack.c.bf16 %v1583, %v1583
        %v1589 = vld [vmem:[%s757 + $0x8] sm:$0xf]
        %v1590 = vld [vmem:[%s757 + $0xc] sm:$0xf]
        %v1593 = vunpack.c.l.b16 %v1589
        %v1594 = vunpack.c.l.b16 %v1590
        %v1595 = vpack.c.b16 %v1594, %v1593
        %v1598 = vsel %vm1363, %v1588, 0
        %1600 = vmatprep.subr.bf16.mxu0 0
        %1601 = vmatpush1.bf16.msra.mxu0 %v1595
        %1602 = vmatprep.subr.bf16.mxu0 0
        %1603 = vmatpush1.bf16.msra.mxu0 0
        %1604 = vmatprep.subr.bf16.mxu0 0
        %1605 = vmatpush1.bf16.msra.mxu0 0
        %1606 = vmatprep.subr.bf16.mxu0 0
        %1607 = vmatpush1.bf16.msra.mxu0 0
        %1608 = vmatprep.subr.bf16.mxu0 0
        %1609 = vmatpush1.bf16.msra.mxu0 0
        %1610 = vmatprep.subr.bf16.mxu0 0
        %1611 = vmatpush1.bf16.msra.mxu0 0
        %1612 = vmatprep.subr.bf16.mxu0 0
        %1613 = vmatpush1.bf16.msra.mxu0 0
        %1614 = vmatprep.subr.bf16.mxu0 0
        %1615 = vmatpush1.bf16.msra.mxu0 0
        %1616 = vmatprep.subr.bf16.mxu0 0
        %1617 = vmatpush1.bf16.msra.mxu0 0
        %1618 = vmatprep.subr.bf16.mxu0 0
        %1619 = vmatpush1.bf16.msra.mxu0 0
        %1620 = vmatprep.subr.bf16.mxu0 0
        %1621 = vmatpush1.bf16.msra.mxu0 0
        %1622 = vmatprep.subr.bf16.mxu0 0
        %1623 = vmatpush1.bf16.msra.mxu0 0
        %1624 = vmatprep.subr.bf16.mxu0 0
        %1625 = vmatpush1.bf16.msra.mxu0 0
        %1626 = vmatprep.subr.bf16.mxu0 0
        %1627 = vmatpush1.bf16.msra.mxu0 0
        %1628 = vmatprep.subr.bf16.mxu0 0
        %1629 = vmatpush1.bf16.msra.mxu0 0
        %1630 = vmatprep.subr.bf16.mxu0 0
        %1631 = vmatpush1.bf16.msra.mxu0 0
        %1632 = vmatprep.mubr.bf16.mxu0 0
        %1633 = vmatmul.mubr.bf16.gmra.mrb[0].mxu0 %v1598
        %v1634 = vpop.f32.mrb[0].mxu0
        %v1635 = vadd.f32 0.0, %v1634
        %v1636 = vpop.f32.mrb[0].mxu0
        %v1637 = vpop.f32.mrb[0].mxu0
        %v1638 = vpop.f32.mrb[0].mxu0
        %1639 = vdwg.mxu0
        %v1642 = vunpack.c.l.b16 %v1472
        %v1643 = vunpack.c.l.b16 %v1473
        %v1644 = vpack.c.b16 %v1643, %v1642
        %v1647 = vsel %vm1363, %v1471, 0
        %1649 = vmatprep.subr.bf16.mxu0 0
        %1650 = vmatpush1.bf16.msra.mxu0 %v1644
        %1651 = vmatprep.subr.bf16.mxu0 0
        %1652 = vmatpush1.bf16.msra.mxu0 0
        %1653 = vmatprep.subr.bf16.mxu0 0
        %1654 = vmatpush1.bf16.msra.mxu0 0
        %1655 = vmatprep.subr.bf16.mxu0 0
        %1656 = vmatpush1.bf16.msra.mxu0 0
        %1657 = vmatprep.subr.bf16.mxu0 0
        %1658 = vmatpush1.bf16.msra.mxu0 0
        %1659 = vmatprep.subr.bf16.mxu0 0
        %1660 = vmatpush1.bf16.msra.mxu0 0
        %1661 = vmatprep.subr.bf16.mxu0 0
        %1662 = vmatpush1.bf16.msra.mxu0 0
        %1663 = vmatprep.subr.bf16.mxu0 0
        %1664 = vmatpush1.bf16.msra.mxu0 0
        %1665 = vmatprep.subr.bf16.mxu0 0
        %1666 = vmatpush1.bf16.msra.mxu0 0
        %1667 = vmatprep.subr.bf16.mxu0 0
        %1668 = vmatpush1.bf16.msra.mxu0 0
        %1669 = vmatprep.subr.bf16.mxu0 0
        %1670 = vmatpush1.bf16.msra.mxu0 0
        %1671 = vmatprep.subr.bf16.mxu0 0
        %1672 = vmatpush1.bf16.msra.mxu0 0
        %1673 = vmatprep.subr.bf16.mxu0 0
        %1674 = vmatpush1.bf16.msra.mxu0 0
        %1675 = vmatprep.subr.bf16.mxu0 0
        %1676 = vmatpush1.bf16.msra.mxu0 0
        %1677 = vmatprep.subr.bf16.mxu0 0
        %1678 = vmatpush1.bf16.msra.mxu0 0
        %1679 = vmatprep.subr.bf16.mxu0 0
        %1680 = vmatpush1.bf16.msra.mxu0 0
        %1681 = vmatprep.mubr.bf16.mxu0 0
        %1682 = vmatmul.mubr.bf16.gmra.mrb[0].mxu0 %v1647
        %v1683 = vpop.f32.mrb[0].mxu0
        %v1684 = vadd.f32 %v1635, %v1683
        %v1685 = vpop.f32.mrb[0].mxu0
        %v1686 = vpop.f32.mrb[0].mxu0
        %v1687 = vpop.f32.mrb[0].mxu0
        %1688 = vdwg.mxu0
        %1689 = vrot.lane.b32.xlu0 %v1360, 96
        %v1690 = vpop.permute.xlu0 %1689
        %1691 = vrot.lane.b32.xlu0 %v1361, 96
        %v1692 = vpop.permute.xlu0 %1691
        %v1694 = vsel %vm1363, %v1690, 0
        %v1697 = vsel %vm1363, %v1692, 0
        %1699 = vmatprep.subr.bf16.mxu0 0
        %1700 = vmatpush1.bf16.xpose.msra.mxu0 %v1697
        %1701 = vmatprep.subr.bf16.mxu0 0
        %1702 = vmatpush1.bf16.xpose.msra.mxu0 0
        %1703 = vmatprep.subr.bf16.mxu0 0
        %1704 = vmatpush1.bf16.xpose.msra.mxu0 0
        %1705 = vmatprep.subr.bf16.mxu0 0
        %1706 = vmatpush1.bf16.xpose.msra.mxu0 0
        %1707 = vmatprep.subr.bf16.mxu0 0
        %1708 = vmatpush1.bf16.xpose.msra.mxu0 0
        %1709 = vmatprep.subr.bf16.mxu0 0
        %1710 = vmatpush1.bf16.xpose.msra.mxu0 0
        %1711 = vmatprep.subr.bf16.mxu0 0
        %1712 = vmatpush1.bf16.xpose.msra.mxu0 0
        %1713 = vmatprep.subr.bf16.mxu0 0
        %1714 = vmatpush1.bf16.xpose.msra.mxu0 0
        %1715 = vmatprep.subr.bf16.mxu0 0
        %1716 = vmatpush1.bf16.xpose.msra.mxu0 0
        %1717 = vmatprep.subr.bf16.mxu0 0
        %1718 = vmatpush1.bf16.xpose.msra.mxu0 0
        %1719 = vmatprep.subr.bf16.mxu0 0
        %1720 = vmatpush1.bf16.xpose.msra.mxu0 0
        %1721 = vmatprep.subr.bf16.mxu0 0
        %1722 = vmatpush1.bf16.xpose.msra.mxu0 0
        %1723 = vmatprep.subr.bf16.mxu0 0
        %1724 = vmatpush1.bf16.xpose.msra.mxu0 0
        %1725 = vmatprep.subr.bf16.mxu0 0
        %1726 = vmatpush1.bf16.xpose.msra.mxu0 0
        %1727 = vmatprep.subr.bf16.mxu0 0
        %1728 = vmatpush1.bf16.xpose.msra.mxu0 0
        %1729 = vmatprep.subr.bf16.mxu0 0
        %1730 = vmatpush1.bf16.xpose.msra.mxu0 0
        %1731 = vmatprep.mubr.bf16.mxu0 0
        %1732 = vmatmul.mubr.bf16.gmra.mrb[0].mxu0 %v1694
        %v1733 = vpop.f32.mrb[0].mxu0
        %v1734 = vadd.f32 0.0, %v1733
        %v1735 = vpop.f32.mrb[0].mxu0
        %v1736 = vpop.f32.mrb[0].mxu0
        %v1737 = vpop.f32.mrb[0].mxu0
        %1738 = vdwg.mxu0
        %v1739 = vmul.f32 %v1734, 0.25
        %v1740 = vsel %vm1411, %v1739, -inf
        %1741 = vmax.xlane.f32.xlu0 %v1740
        %v1742 = vpop.xlane.xlu0 %1741
        %v1743 = vsub.f32 %v1739, %v1742
        %v1744 = vmul.f32 %v1743, 1.442695
        %v1745 = vpow.pop %v1744
        %v1746 = vsel %vm1411, %v1745, 0.0
        %1747 = vadd.xlane.f32.xlu0 %v1746
        %v1748 = vpop.xlane.xlu0 %1747
        %v1749 = vrcp.pop %v1748
        %v1750 = vmul.f32 %v1745, %v1749
        %v1751 = vpack.c.bf16 %v1750, %v1750
        %1752 = vrot.lane.b32.xlu0 %v1362, 96
        %v1753 = vpop.permute.xlu0 %1752
        %v1755 = vsel %vm1411, %v1751, 0
        %v1758 = vsel %vm1427, %v1753, 0
        %1760 = vmatprep.subr.bf16.mxu0 0
        %1761 = vmatpush1.bf16.msra.mxu0 %v1758
        %1762 = vmatprep.subr.bf16.mxu0 0
        %1763 = vmatpush1.bf16.msra.mxu0 0
        %1764 = vmatprep.subr.bf16.mxu0 0
        %1765 = vmatpush1.bf16.msra.mxu0 0
        %1766 = vmatprep.subr.bf16.mxu0 0
        %1767 = vmatpush1.bf16.msra.mxu0 0
        %1768 = vmatprep.subr.bf16.mxu0 0
        %1769 = vmatpush1.bf16.msra.mxu0 0
        %1770 = vmatprep.subr.bf16.mxu0 0
        %1771 = vmatpush1.bf16.msra.mxu0 0
        %1772 = vmatprep.subr.bf16.mxu0 0
        %1773 = vmatpush1.bf16.msra.mxu0 0
        %1774 = vmatprep.subr.bf16.mxu0 0
        %1775 = vmatpush1.bf16.msra.mxu0 0
        %1776 = vmatprep.subr.bf16.mxu0 0
        %1777 = vmatpush1.bf16.msra.mxu0 0
        %1778 = vmatprep.subr.bf16.mxu0 0
        %1779 = vmatpush1.bf16.msra.mxu0 0
        %1780 = vmatprep.subr.bf16.mxu0 0
        %1781 = vmatpush1.bf16.msra.mxu0 0
        %1782 = vmatprep.subr.bf16.mxu0 0
        %1783 = vmatpush1.bf16.msra.mxu0 0
        %1784 = vmatprep.subr.bf16.mxu0 0
        %1785 = vmatpush1.bf16.msra.mxu0 0
        %1786 = vmatprep.subr.bf16.mxu0 0
        %1787 = vmatpush1.bf16.msra.mxu0 0
        %1788 = vmatprep.subr.bf16.mxu0 0
        %1789 = vmatpush1.bf16.msra.mxu0 0
        %1790 = vmatprep.subr.bf16.mxu0 0
        %1791 = vmatpush1.bf16.msra.mxu0 0
        %1792 = vmatprep.mubr.bf16.mxu0 0
        %1793 = vmatmul.mubr.bf16.gmra.mrb[0].mxu0 %v1755
        %v1794 = vpop.f32.mrb[0].mxu0
        %v1795 = vadd.f32 0.0, %v1794
        %v1796 = vpop.f32.mrb[0].mxu0
        %v1797 = vpop.f32.mrb[0].mxu0
        %v1798 = vpop.f32.mrb[0].mxu0
        %1799 = vdwg.mxu0
        %v1800 = vpack.c.bf16 %v1795, %v1795
        %v1801 = vld [vmem:[%s757 + $0x10] sm:$0xf]
        %v1802 = vld [vmem:[%s757 + $0x14] sm:$0xf]
        %v1805 = vunpack.c.l.b16 %v1801
        %v1806 = vunpack.c.l.b16 %v1802
        %v1807 = vpack.c.b16 %v1806, %v1805
        %v1810 = vsel %vm1363, %v1800, 0
        %1812 = vmatprep.subr.bf16.mxu0 0
        %1813 = vmatpush1.bf16.msra.mxu0 %v1807
        %1814 = vmatprep.subr.bf16.mxu0 0
        %1815 = vmatpush1.bf16.msra.mxu0 0
        %1816 = vmatprep.subr.bf16.mxu0 0
        %1817 = vmatpush1.bf16.msra.mxu0 0
        %1818 = vmatprep.subr.bf16.mxu0 0
        %1819 = vmatpush1.bf16.msra.mxu0 0
        %1820 = vmatprep.subr.bf16.mxu0 0
        %1821 = vmatpush1.bf16.msra.mxu0 0
        %1822 = vmatprep.subr.bf16.mxu0 0
        %1823 = vmatpush1.bf16.msra.mxu0 0
        %1824 = vmatprep.subr.bf16.mxu0 0
        %1825 = vmatpush1.bf16.msra.mxu0 0
        %1826 = vmatprep.subr.bf16.mxu0 0
        %1827 = vmatpush1.bf16.msra.mxu0 0
        %1828 = vmatprep.subr.bf16.mxu0 0
        %1829 = vmatpush1.bf16.msra.mxu0 0
        %1830 = vmatprep.subr.bf16.mxu0 0
        %1831 = vmatpush1.bf16.msra.mxu0 0
        %1832 = vmatprep.subr.bf16.mxu0 0
        %1833 = vmatpush1.bf16.msra.mxu0 0
        %1834 = vmatprep.subr.bf16.mxu0 0
        %1835 = vmatpush1.bf16.msra.mxu0 0
        %1836 = vmatprep.subr.bf16.mxu0 0
        %1837 = vmatpush1.bf16.msra.mxu0 0
        %1838 = vmatprep.subr.bf16.mxu0 0
        %1839 = vmatpush1.bf16.msra.mxu0 0
        %1840 = vmatprep.subr.bf16.mxu0 0
        %1841 = vmatpush1.bf16.msra.mxu0 0
        %1842 = vmatprep.subr.bf16.mxu0 0
        %1843 = vmatpush1.bf16.msra.mxu0 0
        %1844 = vmatprep.mubr.bf16.mxu0 0
        %1845 = vmatmul.mubr.bf16.gmra.mrb[0].mxu0 %v1810
        %v1846 = vpop.f32.mrb[0].mxu0
        %v1847 = vadd.f32 0.0, %v1846
        %v1848 = vpop.f32.mrb[0].mxu0
        %v1849 = vpop.f32.mrb[0].mxu0
        %v1850 = vpop.f32.mrb[0].mxu0
        %1851 = vdwg.mxu0
        %v1852 = vadd.f32 %v1684, %v1847
        %1853 = vrot.lane.b32.xlu0 %v1360, 80
        %v1854 = vpop.permute.xlu0 %1853
        %1855 = vrot.lane.b32.xlu0 %v1361, 80
        %v1856 = vpop.permute.xlu0 %1855
        %v1858 = vsel %vm1363, %v1854, 0
        %v1861 = vsel %vm1363, %v1856, 0
        %1863 = vmatprep.subr.bf16.mxu0 0
        %1864 = vmatpush1.bf16.xpose.msra.mxu0 %v1861
        %1865 = vmatprep.subr.bf16.mxu0 0
        %1866 = vmatpush1.bf16.xpose.msra.mxu0 0
        %1867 = vmatprep.subr.bf16.mxu0 0
        %1868 = vmatpush1.bf16.xpose.msra.mxu0 0
        %1869 = vmatprep.subr.bf16.mxu0 0
        %1870 = vmatpush1.bf16.xpose.msra.mxu0 0
        %1871 = vmatprep.subr.bf16.mxu0 0
        %1872 = vmatpush1.bf16.xpose.msra.mxu0 0
        %1873 = vmatprep.subr.bf16.mxu0 0
        %1874 = vmatpush1.bf16.xpose.msra.mxu0 0
        %1875 = vmatprep.subr.bf16.mxu0 0
        %1876 = vmatpush1.bf16.xpose.msra.mxu0 0
        %1877 = vmatprep.subr.bf16.mxu0 0
        %1878 = vmatpush1.bf16.xpose.msra.mxu0 0
        %1879 = vmatprep.subr.bf16.mxu0 0
        %1880 = vmatpush1.bf16.xpose.msra.mxu0 0
        %1881 = vmatprep.subr.bf16.mxu0 0
        %1882 = vmatpush1.bf16.xpose.msra.mxu0 0
        %1883 = vmatprep.subr.bf16.mxu0 0
        %1884 = vmatpush1.bf16.xpose.msra.mxu0 0
        %1885 = vmatprep.subr.bf16.mxu0 0
        %1886 = vmatpush1.bf16.xpose.msra.mxu0 0
        %1887 = vmatprep.subr.bf16.mxu0 0
        %1888 = vmatpush1.bf16.xpose.msra.mxu0 0
        %1889 = vmatprep.subr.bf16.mxu0 0
        %1890 = vmatpush1.bf16.xpose.msra.mxu0 0
        %1891 = vmatprep.subr.bf16.mxu0 0
        %1892 = vmatpush1.bf16.xpose.msra.mxu0 0
        %1893 = vmatprep.subr.bf16.mxu0 0
        %1894 = vmatpush1.bf16.xpose.msra.mxu0 0
        %1895 = vmatprep.mubr.bf16.mxu0 0
        %1896 = vmatmul.mubr.bf16.gmra.mrb[0].mxu0 %v1858
        %v1897 = vpop.f32.mrb[0].mxu0
        %v1898 = vadd.f32 0.0, %v1897
        %v1899 = vpop.f32.mrb[0].mxu0
        %v1900 = vpop.f32.mrb[0].mxu0
        %v1901 = vpop.f32.mrb[0].mxu0
        %1902 = vdwg.mxu0
        %v1903 = vmul.f32 %v1898, 0.25
        %v1904 = vsel %vm1411, %v1903, -inf
        %1905 = vmax.xlane.f32.xlu0 %v1904
        %v1906 = vpop.xlane.xlu0 %1905
        %v1907 = vsub.f32 %v1903, %v1906
        %v1908 = vmul.f32 %v1907, 1.442695
        %v1909 = vpow.pop %v1908
        %v1910 = vsel %vm1411, %v1909, 0.0
        %1911 = vadd.xlane.f32.xlu0 %v1910
        %v1912 = vpop.xlane.xlu0 %1911
        %v1913 = vrcp.pop %v1912
        %v1914 = vmul.f32 %v1909, %v1913
        %v1915 = vpack.c.bf16 %v1914, %v1914
        %1916 = vrot.lane.b32.xlu0 %v1362, 80
        %v1917 = vpop.permute.xlu0 %1916
        %v1919 = vsel %vm1411, %v1915, 0
        %v1922 = vsel %vm1427, %v1917, 0
        %1924 = vmatprep.subr.bf16.mxu0 0
        %1925 = vmatpush1.bf16.msra.mxu0 %v1922
        %1926 = vmatprep.subr.bf16.mxu0 0
        %1927 = vmatpush1.bf16.msra.mxu0 0
        %1928 = vmatprep.subr.bf16.mxu0 0
        %1929 = vmatpush1.bf16.msra.mxu0 0
        %1930 = vmatprep.subr.bf16.mxu0 0
        %1931 = vmatpush1.bf16.msra.mxu0 0
        %1932 = vmatprep.subr.bf16.mxu0 0
        %1933 = vmatpush1.bf16.msra.mxu0 0
        %1934 = vmatprep.subr.bf16.mxu0 0
        %1935 = vmatpush1.bf16.msra.mxu0 0
        %1936 = vmatprep.subr.bf16.mxu0 0
        %1937 = vmatpush1.bf16.msra.mxu0 0
        %1938 = vmatprep.subr.bf16.mxu0 0
        %1939 = vmatpush1.bf16.msra.mxu0 0
        %1940 = vmatprep.subr.bf16.mxu0 0
        %1941 = vmatpush1.bf16.msra.mxu0 0
        %1942 = vmatprep.subr.bf16.mxu0 0
        %1943 = vmatpush1.bf16.msra.mxu0 0
        %1944 = vmatprep.subr.bf16.mxu0 0
        %1945 = vmatpush1.bf16.msra.mxu0 0
        %1946 = vmatprep.subr.bf16.mxu0 0
        %1947 = vmatpush1.bf16.msra.mxu0 0
        %1948 = vmatprep.subr.bf16.mxu0 0
        %1949 = vmatpush1.bf16.msra.mxu0 0
        %1950 = vmatprep.subr.bf16.mxu0 0
        %1951 = vmatpush1.bf16.msra.mxu0 0
        %1952 = vmatprep.subr.bf16.mxu0 0
        %1953 = vmatpush1.bf16.msra.mxu0 0
        %1954 = vmatprep.subr.bf16.mxu0 0
        %1955 = vmatpush1.bf16.msra.mxu0 0
        %1956 = vmatprep.mubr.bf16.mxu0 0
        %1957 = vmatmul.mubr.bf16.gmra.mrb[0].mxu0 %v1919
        %v1958 = vpop.f32.mrb[0].mxu0
        %v1959 = vadd.f32 0.0, %v1958
        %v1960 = vpop.f32.mrb[0].mxu0
        %v1961 = vpop.f32.mrb[0].mxu0
        %v1962 = vpop.f32.mrb[0].mxu0
        %1963 = vdwg.mxu0
        %v1964 = vpack.c.bf16 %v1959, %v1959
        %v1965 = vld [vmem:[%s757 + $0x18] sm:$0xf]
        %v1966 = vld [vmem:[%s757 + $0x1c] sm:$0xf]
        %v1969 = vunpack.c.l.b16 %v1965
        %v1970 = vunpack.c.l.b16 %v1966
        %v1971 = vpack.c.b16 %v1970, %v1969
        %v1974 = vsel %vm1363, %v1964, 0
        %1976 = vmatprep.subr.bf16.mxu0 0
        %1977 = vmatpush1.bf16.msra.mxu0 %v1971
        %1978 = vmatprep.subr.bf16.mxu0 0
        %1979 = vmatpush1.bf16.msra.mxu0 0
        %1980 = vmatprep.subr.bf16.mxu0 0
        %1981 = vmatpush1.bf16.msra.mxu0 0
        %1982 = vmatprep.subr.bf16.mxu0 0
        %1983 = vmatpush1.bf16.msra.mxu0 0
        %1984 = vmatprep.subr.bf16.mxu0 0
        %1985 = vmatpush1.bf16.msra.mxu0 0
        %1986 = vmatprep.subr.bf16.mxu0 0
        %1987 = vmatpush1.bf16.msra.mxu0 0
        %1988 = vmatprep.subr.bf16.mxu0 0
        %1989 = vmatpush1.bf16.msra.mxu0 0
        %1990 = vmatprep.subr.bf16.mxu0 0
        %1991 = vmatpush1.bf16.msra.mxu0 0
        %1992 = vmatprep.subr.bf16.mxu0 0
        %1993 = vmatpush1.bf16.msra.mxu0 0
        %1994 = vmatprep.subr.bf16.mxu0 0
        %1995 = vmatpush1.bf16.msra.mxu0 0
        %1996 = vmatprep.subr.bf16.mxu0 0
        %1997 = vmatpush1.bf16.msra.mxu0 0
        %1998 = vmatprep.subr.bf16.mxu0 0
        %1999 = vmatpush1.bf16.msra.mxu0 0
        %2000 = vmatprep.subr.bf16.mxu0 0
        %2001 = vmatpush1.bf16.msra.mxu0 0
        %2002 = vmatprep.subr.bf16.mxu0 0
        %2003 = vmatpush1.bf16.msra.mxu0 0
        %2004 = vmatprep.subr.bf16.mxu0 0
        %2005 = vmatpush1.bf16.msra.mxu0 0
        %2006 = vmatprep.subr.bf16.mxu0 0
        %2007 = vmatpush1.bf16.msra.mxu0 0
        %2008 = vmatprep.mubr.bf16.mxu0 0
        %2009 = vmatmul.mubr.bf16.gmra.mrb[0].mxu0 %v1974
        %v2010 = vpop.f32.mrb[0].mxu0
        %v2011 = vadd.f32 0.0, %v2010
        %v2012 = vpop.f32.mrb[0].mxu0
        %v2013 = vpop.f32.mrb[0].mxu0
        %v2014 = vpop.f32.mrb[0].mxu0
        %2015 = vdwg.mxu0
        %v2016 = vadd.f32 %v1852, %v2011
        %2017 = vrot.lane.b32.xlu0 %v1360, 64
        %v2018 = vpop.permute.xlu0 %2017
        %2019 = vrot.lane.b32.xlu0 %v1361, 64
        %v2020 = vpop.permute.xlu0 %2019
        %v2022 = vsel %vm1363, %v2018, 0
        %v2025 = vsel %vm1363, %v2020, 0
        %2027 = vmatprep.subr.bf16.mxu0 0
        %2028 = vmatpush1.bf16.xpose.msra.mxu0 %v2025
        %2029 = vmatprep.subr.bf16.mxu0 0
        %2030 = vmatpush1.bf16.xpose.msra.mxu0 0
        %2031 = vmatprep.subr.bf16.mxu0 0
        %2032 = vmatpush1.bf16.xpose.msra.mxu0 0
        %2033 = vmatprep.subr.bf16.mxu0 0
        %2034 = vmatpush1.bf16.xpose.msra.mxu0 0
        %2035 = vmatprep.subr.bf16.mxu0 0
        %2036 = vmatpush1.bf16.xpose.msra.mxu0 0
        %2037 = vmatprep.subr.bf16.mxu0 0
        %2038 = vmatpush1.bf16.xpose.msra.mxu0 0
        %2039 = vmatprep.subr.bf16.mxu0 0
        %2040 = vmatpush1.bf16.xpose.msra.mxu0 0
        %2041 = vmatprep.subr.bf16.mxu0 0
        %2042 = vmatpush1.bf16.xpose.msra.mxu0 0
        %2043 = vmatprep.subr.bf16.mxu0 0
        %2044 = vmatpush1.bf16.xpose.msra.mxu0 0
        %2045 = vmatprep.subr.bf16.mxu0 0
        %2046 = vmatpush1.bf16.xpose.msra.mxu0 0
        %2047 = vmatprep.subr.bf16.mxu0 0
        %2048 = vmatpush1.bf16.xpose.msra.mxu0 0
        %2049 = vmatprep.subr.bf16.mxu0 0
        %2050 = vmatpush1.bf16.xpose.msra.mxu0 0
        %2051 = vmatprep.subr.bf16.mxu0 0
        %2052 = vmatpush1.bf16.xpose.msra.mxu0 0
        %2053 = vmatprep.subr.bf16.mxu0 0
        %2054 = vmatpush1.bf16.xpose.msra.mxu0 0
        %2055 = vmatprep.subr.bf16.mxu0 0
        %2056 = vmatpush1.bf16.xpose.msra.mxu0 0
        %2057 = vmatprep.subr.bf16.mxu0 0
        %2058 = vmatpush1.bf16.xpose.msra.mxu0 0
        %2059 = vmatprep.mubr.bf16.mxu0 0
        %2060 = vmatmul.mubr.bf16.gmra.mrb[0].mxu0 %v2022
        %v2061 = vpop.f32.mrb[0].mxu0
        %v2062 = vadd.f32 0.0, %v2061
        %v2063 = vpop.f32.mrb[0].mxu0
        %v2064 = vpop.f32.mrb[0].mxu0
        %v2065 = vpop.f32.mrb[0].mxu0
        %2066 = vdwg.mxu0
        %v2067 = vmul.f32 %v2062, 0.25
        %v2068 = vsel %vm1411, %v2067, -inf
        %2069 = vmax.xlane.f32.xlu0 %v2068
        %v2070 = vpop.xlane.xlu0 %2069
        %v2071 = vsub.f32 %v2067, %v2070
        %v2072 = vmul.f32 %v2071, 1.442695
        %v2073 = vpow.pop %v2072
        %v2074 = vsel %vm1411, %v2073, 0.0
        %2075 = vadd.xlane.f32.xlu0 %v2074
        %v2076 = vpop.xlane.xlu0 %2075
        %v2077 = vrcp.pop %v2076
        %v2078 = vmul.f32 %v2073, %v2077
        %v2079 = vpack.c.bf16 %v2078, %v2078
        %2080 = vrot.lane.b32.xlu0 %v1362, 64
        %v2081 = vpop.permute.xlu0 %2080
        %v2083 = vsel %vm1411, %v2079, 0
        %v2086 = vsel %vm1427, %v2081, 0
        %2088 = vmatprep.subr.bf16.mxu0 0
        %2089 = vmatpush1.bf16.msra.mxu0 %v2086
        %2090 = vmatprep.subr.bf16.mxu0 0
        %2091 = vmatpush1.bf16.msra.mxu0 0
        %2092 = vmatprep.subr.bf16.mxu0 0
        %2093 = vmatpush1.bf16.msra.mxu0 0
        %2094 = vmatprep.subr.bf16.mxu0 0
        %2095 = vmatpush1.bf16.msra.mxu0 0
        %2096 = vmatprep.subr.bf16.mxu0 0
        %2097 = vmatpush1.bf16.msra.mxu0 0
        %2098 = vmatprep.subr.bf16.mxu0 0
        %2099 = vmatpush1.bf16.msra.mxu0 0
        %2100 = vmatprep.subr.bf16.mxu0 0
        %2101 = vmatpush1.bf16.msra.mxu0 0
        %2102 = vmatprep.subr.bf16.mxu0 0
        %2103 = vmatpush1.bf16.msra.mxu0 0
        %2104 = vmatprep.subr.bf16.mxu0 0
        %2105 = vmatpush1.bf16.msra.mxu0 0
        %2106 = vmatprep.subr.bf16.mxu0 0
        %2107 = vmatpush1.bf16.msra.mxu0 0
        %2108 = vmatprep.subr.bf16.mxu0 0
        %2109 = vmatpush1.bf16.msra.mxu0 0
        %2110 = vmatprep.subr.bf16.mxu0 0
        %2111 = vmatpush1.bf16.msra.mxu0 0
        %2112 = vmatprep.subr.bf16.mxu0 0
        %2113 = vmatpush1.bf16.msra.mxu0 0
        %2114 = vmatprep.subr.bf16.mxu0 0
        %2115 = vmatpush1.bf16.msra.mxu0 0
        %2116 = vmatprep.subr.bf16.mxu0 0
        %2117 = vmatpush1.bf16.msra.mxu0 0
        %2118 = vmatprep.subr.bf16.mxu0 0
        %2119 = vmatpush1.bf16.msra.mxu0 0
        %2120 = vmatprep.mubr.bf16.mxu0 0
        %2121 = vmatmul.mubr.bf16.gmra.mrb[0].mxu0 %v2083
        %v2122 = vpop.f32.mrb[0].mxu0
        %v2123 = vadd.f32 0.0, %v2122
        %v2124 = vpop.f32.mrb[0].mxu0
        %v2125 = vpop.f32.mrb[0].mxu0
        %v2126 = vpop.f32.mrb[0].mxu0
        %2127 = vdwg.mxu0
        %v2128 = vpack.c.bf16 %v2123, %v2123
        %v2129 = vld [vmem:[%s757 + $0x20] sm:$0xf]
        %v2130 = vld [vmem:[%s757 + $0x24] sm:$0xf]
        %v2133 = vunpack.c.l.b16 %v2129
        %v2134 = vunpack.c.l.b16 %v2130
        %v2135 = vpack.c.b16 %v2134, %v2133
        %v2138 = vsel %vm1363, %v2128, 0
        %2140 = vmatprep.subr.bf16.mxu0 0
        %2141 = vmatpush1.bf16.msra.mxu0 %v2135
        %2142 = vmatprep.subr.bf16.mxu0 0
        %2143 = vmatpush1.bf16.msra.mxu0 0
        %2144 = vmatprep.subr.bf16.mxu0 0
        %2145 = vmatpush1.bf16.msra.mxu0 0
        %2146 = vmatprep.subr.bf16.mxu0 0
        %2147 = vmatpush1.bf16.msra.mxu0 0
        %2148 = vmatprep.subr.bf16.mxu0 0
        %2149 = vmatpush1.bf16.msra.mxu0 0
        %2150 = vmatprep.subr.bf16.mxu0 0
        %2151 = vmatpush1.bf16.msra.mxu0 0
        %2152 = vmatprep.subr.bf16.mxu0 0
        %2153 = vmatpush1.bf16.msra.mxu0 0
        %2154 = vmatprep.subr.bf16.mxu0 0
        %2155 = vmatpush1.bf16.msra.mxu0 0
        %2156 = vmatprep.subr.bf16.mxu0 0
        %2157 = vmatpush1.bf16.msra.mxu0 0
        %2158 = vmatprep.subr.bf16.mxu0 0
        %2159 = vmatpush1.bf16.msra.mxu0 0
        %2160 = vmatprep.subr.bf16.mxu0 0
        %2161 = vmatpush1.bf16.msra.mxu0 0
        %2162 = vmatprep.subr.bf16.mxu0 0
        %2163 = vmatpush1.bf16.msra.mxu0 0
        %2164 = vmatprep.subr.bf16.mxu0 0
        %2165 = vmatpush1.bf16.msra.mxu0 0
        %2166 = vmatprep.subr.bf16.mxu0 0
        %2167 = vmatpush1.bf16.msra.mxu0 0
        %2168 = vmatprep.subr.bf16.mxu0 0
        %2169 = vmatpush1.bf16.msra.mxu0 0
        %2170 = vmatprep.subr.bf16.mxu0 0
        %2171 = vmatpush1.bf16.msra.mxu0 0
        %2172 = vmatprep.mubr.bf16.mxu0 0
        %2173 = vmatmul.mubr.bf16.gmra.mrb[0].mxu0 %v2138
        %v2174 = vpop.f32.mrb[0].mxu0
        %v2175 = vadd.f32 0.0, %v2174
        %v2176 = vpop.f32.mrb[0].mxu0
        %v2177 = vpop.f32.mrb[0].mxu0
        %v2178 = vpop.f32.mrb[0].mxu0
        %2179 = vdwg.mxu0
        %v2180 = vadd.f32 %v2016, %v2175
        %2181 = vrot.lane.b32.xlu0 %v1360, 48
        %v2182 = vpop.permute.xlu0 %2181
        %2183 = vrot.lane.b32.xlu0 %v1361, 48
        %v2184 = vpop.permute.xlu0 %2183
        %v2186 = vsel %vm1363, %v2182, 0
        %v2189 = vsel %vm1363, %v2184, 0
        %2191 = vmatprep.subr.bf16.mxu0 0
        %2192 = vmatpush1.bf16.xpose.msra.mxu0 %v2189
        %2193 = vmatprep.subr.bf16.mxu0 0
        %2194 = vmatpush1.bf16.xpose.msra.mxu0 0
        %2195 = vmatprep.subr.bf16.mxu0 0
        %2196 = vmatpush1.bf16.xpose.msra.mxu0 0
        %2197 = vmatprep.subr.bf16.mxu0 0
        %2198 = vmatpush1.bf16.xpose.msra.mxu0 0
        %2199 = vmatprep.subr.bf16.mxu0 0
        %2200 = vmatpush1.bf16.xpose.msra.mxu0 0
        %2201 = vmatprep.subr.bf16.mxu0 0
        %2202 = vmatpush1.bf16.xpose.msra.mxu0 0
        %2203 = vmatprep.subr.bf16.mxu0 0
        %2204 = vmatpush1.bf16.xpose.msra.mxu0 0
        %2205 = vmatprep.subr.bf16.mxu0 0
        %2206 = vmatpush1.bf16.xpose.msra.mxu0 0
        %2207 = vmatprep.subr.bf16.mxu0 0
        %2208 = vmatpush1.bf16.xpose.msra.mxu0 0
        %2209 = vmatprep.subr.bf16.mxu0 0
        %2210 = vmatpush1.bf16.xpose.msra.mxu0 0
        %2211 = vmatprep.subr.bf16.mxu0 0
        %2212 = vmatpush1.bf16.xpose.msra.mxu0 0
        %2213 = vmatprep.subr.bf16.mxu0 0
        %2214 = vmatpush1.bf16.xpose.msra.mxu0 0
        %2215 = vmatprep.subr.bf16.mxu0 0
        %2216 = vmatpush1.bf16.xpose.msra.mxu0 0
        %2217 = vmatprep.subr.bf16.mxu0 0
        %2218 = vmatpush1.bf16.xpose.msra.mxu0 0
        %2219 = vmatprep.subr.bf16.mxu0 0
        %2220 = vmatpush1.bf16.xpose.msra.mxu0 0
        %2221 = vmatprep.subr.bf16.mxu0 0
        %2222 = vmatpush1.bf16.xpose.msra.mxu0 0
        %2223 = vmatprep.mubr.bf16.mxu0 0
        %2224 = vmatmul.mubr.bf16.gmra.mrb[0].mxu0 %v2186
        %v2225 = vpop.f32.mrb[0].mxu0
        %v2226 = vadd.f32 0.0, %v2225
        %v2227 = vpop.f32.mrb[0].mxu0
        %v2228 = vpop.f32.mrb[0].mxu0
        %v2229 = vpop.f32.mrb[0].mxu0
        %2230 = vdwg.mxu0
        %v2231 = vmul.f32 %v2226, 0.25
        %v2232 = vsel %vm1411, %v2231, -inf
        %2233 = vmax.xlane.f32.xlu0 %v2232
        %v2234 = vpop.xlane.xlu0 %2233
        %v2235 = vsub.f32 %v2231, %v2234
        %v2236 = vmul.f32 %v2235, 1.442695
        %v2237 = vpow.pop %v2236
        %v2238 = vsel %vm1411, %v2237, 0.0
        %2239 = vadd.xlane.f32.xlu0 %v2238
        %v2240 = vpop.xlane.xlu0 %2239
        %v2241 = vrcp.pop %v2240
        %v2242 = vmul.f32 %v2237, %v2241
        %v2243 = vpack.c.bf16 %v2242, %v2242
        %2244 = vrot.lane.b32.xlu0 %v1362, 48
        %v2245 = vpop.permute.xlu0 %2244
        %v2247 = vsel %vm1411, %v2243, 0
        %v2250 = vsel %vm1427, %v2245, 0
        %2252 = vmatprep.subr.bf16.mxu0 0
        %2253 = vmatpush1.bf16.msra.mxu0 %v2250
        %2254 = vmatprep.subr.bf16.mxu0 0
        %2255 = vmatpush1.bf16.msra.mxu0 0
        %2256 = vmatprep.subr.bf16.mxu0 0
        %2257 = vmatpush1.bf16.msra.mxu0 0
        %2258 = vmatprep.subr.bf16.mxu0 0
        %2259 = vmatpush1.bf16.msra.mxu0 0
        %2260 = vmatprep.subr.bf16.mxu0 0
        %2261 = vmatpush1.bf16.msra.mxu0 0
        %2262 = vmatprep.subr.bf16.mxu0 0
        %2263 = vmatpush1.bf16.msra.mxu0 0
        %2264 = vmatprep.subr.bf16.mxu0 0
        %2265 = vmatpush1.bf16.msra.mxu0 0
        %2266 = vmatprep.subr.bf16.mxu0 0
        %2267 = vmatpush1.bf16.msra.mxu0 0
        %2268 = vmatprep.subr.bf16.mxu0 0
        %2269 = vmatpush1.bf16.msra.mxu0 0
        %2270 = vmatprep.subr.bf16.mxu0 0
        %2271 = vmatpush1.bf16.msra.mxu0 0
        %2272 = vmatprep.subr.bf16.mxu0 0
        %2273 = vmatpush1.bf16.msra.mxu0 0
        %2274 = vmatprep.subr.bf16.mxu0 0
        %2275 = vmatpush1.bf16.msra.mxu0 0
        %2276 = vmatprep.subr.bf16.mxu0 0
        %2277 = vmatpush1.bf16.msra.mxu0 0
        %2278 = vmatprep.subr.bf16.mxu0 0
        %2279 = vmatpush1.bf16.msra.mxu0 0
        %2280 = vmatprep.subr.bf16.mxu0 0
        %2281 = vmatpush1.bf16.msra.mxu0 0
        %2282 = vmatprep.subr.bf16.mxu0 0
        %2283 = vmatpush1.bf16.msra.mxu0 0
        %2284 = vmatprep.mubr.bf16.mxu0 0
        %2285 = vmatmul.mubr.bf16.gmra.mrb[0].mxu0 %v2247
        %v2286 = vpop.f32.mrb[0].mxu0
        %v2287 = vadd.f32 0.0, %v2286
        %v2288 = vpop.f32.mrb[0].mxu0
        %v2289 = vpop.f32.mrb[0].mxu0
        %v2290 = vpop.f32.mrb[0].mxu0
        %2291 = vdwg.mxu0
        %v2292 = vpack.c.bf16 %v2287, %v2287
        %v2293 = vld [vmem:[%s757 + $0x28] sm:$0xf]
        %v2294 = vld [vmem:[%s757 + $0x2c] sm:$0xf]
        %v2297 = vunpack.c.l.b16 %v2293
        %v2298 = vunpack.c.l.b16 %v2294
        %v2299 = vpack.c.b16 %v2298, %v2297
        %v2302 = vsel %vm1363, %v2292, 0
        %2304 = vmatprep.subr.bf16.mxu0 0
        %2305 = vmatpush1.bf16.msra.mxu0 %v2299
        %2306 = vmatprep.subr.bf16.mxu0 0
        %2307 = vmatpush1.bf16.msra.mxu0 0
        %2308 = vmatprep.subr.bf16.mxu0 0
        %2309 = vmatpush1.bf16.msra.mxu0 0
        %2310 = vmatprep.subr.bf16.mxu0 0
        %2311 = vmatpush1.bf16.msra.mxu0 0
        %2312 = vmatprep.subr.bf16.mxu0 0
        %2313 = vmatpush1.bf16.msra.mxu0 0
        %2314 = vmatprep.subr.bf16.mxu0 0
        %2315 = vmatpush1.bf16.msra.mxu0 0
        %2316 = vmatprep.subr.bf16.mxu0 0
        %2317 = vmatpush1.bf16.msra.mxu0 0
        %2318 = vmatprep.subr.bf16.mxu0 0
        %2319 = vmatpush1.bf16.msra.mxu0 0
        %2320 = vmatprep.subr.bf16.mxu0 0
        %2321 = vmatpush1.bf16.msra.mxu0 0
        %2322 = vmatprep.subr.bf16.mxu0 0
        %2323 = vmatpush1.bf16.msra.mxu0 0
        %2324 = vmatprep.subr.bf16.mxu0 0
        %2325 = vmatpush1.bf16.msra.mxu0 0
        %2326 = vmatprep.subr.bf16.mxu0 0
        %2327 = vmatpush1.bf16.msra.mxu0 0
        %2328 = vmatprep.subr.bf16.mxu0 0
        %2329 = vmatpush1.bf16.msra.mxu0 0
        %2330 = vmatprep.subr.bf16.mxu0 0
        %2331 = vmatpush1.bf16.msra.mxu0 0
        %2332 = vmatprep.subr.bf16.mxu0 0
        %2333 = vmatpush1.bf16.msra.mxu0 0
        %2334 = vmatprep.subr.bf16.mxu0 0
        %2335 = vmatpush1.bf16.msra.mxu0 0
        %2336 = vmatprep.mubr.bf16.mxu0 0
        %2337 = vmatmul.mubr.bf16.gmra.mrb[0].mxu0 %v2302
        %v2338 = vpop.f32.mrb[0].mxu0
        %v2339 = vadd.f32 0.0, %v2338
        %v2340 = vpop.f32.mrb[0].mxu0
        %v2341 = vpop.f32.mrb[0].mxu0
        %v2342 = vpop.f32.mrb[0].mxu0
        %2343 = vdwg.mxu0
        %v2344 = vadd.f32 %v2180, %v2339
        %2345 = vrot.lane.b32.xlu0 %v1360, 32
        %v2346 = vpop.permute.xlu0 %2345
        %2347 = vrot.lane.b32.xlu0 %v1361, 32
        %v2348 = vpop.permute.xlu0 %2347
        %v2350 = vsel %vm1363, %v2346, 0
        %v2353 = vsel %vm1363, %v2348, 0
        %2355 = vmatprep.subr.bf16.mxu0 0
        %2356 = vmatpush1.bf16.xpose.msra.mxu0 %v2353
        %2357 = vmatprep.subr.bf16.mxu0 0
        %2358 = vmatpush1.bf16.xpose.msra.mxu0 0
        %2359 = vmatprep.subr.bf16.mxu0 0
        %2360 = vmatpush1.bf16.xpose.msra.mxu0 0
        %2361 = vmatprep.subr.bf16.mxu0 0
        %2362 = vmatpush1.bf16.xpose.msra.mxu0 0
        %2363 = vmatprep.subr.bf16.mxu0 0
        %2364 = vmatpush1.bf16.xpose.msra.mxu0 0
        %2365 = vmatprep.subr.bf16.mxu0 0
        %2366 = vmatpush1.bf16.xpose.msra.mxu0 0
        %2367 = vmatprep.subr.bf16.mxu0 0
        %2368 = vmatpush1.bf16.xpose.msra.mxu0 0
        %2369 = vmatprep.subr.bf16.mxu0 0
        %2370 = vmatpush1.bf16.xpose.msra.mxu0 0
        %2371 = vmatprep.subr.bf16.mxu0 0
        %2372 = vmatpush1.bf16.xpose.msra.mxu0 0
        %2373 = vmatprep.subr.bf16.mxu0 0
        %2374 = vmatpush1.bf16.xpose.msra.mxu0 0
        %2375 = vmatprep.subr.bf16.mxu0 0
        %2376 = vmatpush1.bf16.xpose.msra.mxu0 0
        %2377 = vmatprep.subr.bf16.mxu0 0
        %2378 = vmatpush1.bf16.xpose.msra.mxu0 0
        %2379 = vmatprep.subr.bf16.mxu0 0
        %2380 = vmatpush1.bf16.xpose.msra.mxu0 0
        %2381 = vmatprep.subr.bf16.mxu0 0
        %2382 = vmatpush1.bf16.xpose.msra.mxu0 0
        %2383 = vmatprep.subr.bf16.mxu0 0
        %2384 = vmatpush1.bf16.xpose.msra.mxu0 0
        %2385 = vmatprep.subr.bf16.mxu0 0
        %2386 = vmatpush1.bf16.xpose.msra.mxu0 0
        %2387 = vmatprep.mubr.bf16.mxu0 0
        %2388 = vmatmul.mubr.bf16.gmra.mrb[0].mxu0 %v2350
        %v2389 = vpop.f32.mrb[0].mxu0
        %v2390 = vadd.f32 0.0, %v2389
        %v2391 = vpop.f32.mrb[0].mxu0
        %v2392 = vpop.f32.mrb[0].mxu0
        %v2393 = vpop.f32.mrb[0].mxu0
        %2394 = vdwg.mxu0
        %v2395 = vmul.f32 %v2390, 0.25
        %v2396 = vsel %vm1411, %v2395, -inf
        %2397 = vmax.xlane.f32.xlu0 %v2396
        %v2398 = vpop.xlane.xlu0 %2397
        %v2399 = vsub.f32 %v2395, %v2398
        %v2400 = vmul.f32 %v2399, 1.442695
        %v2401 = vpow.pop %v2400
        %v2402 = vsel %vm1411, %v2401, 0.0
        %2403 = vadd.xlane.f32.xlu0 %v2402
        %v2404 = vpop.xlane.xlu0 %2403
        %v2405 = vrcp.pop %v2404
        %v2406 = vmul.f32 %v2401, %v2405
        %v2407 = vpack.c.bf16 %v2406, %v2406
        %2408 = vrot.lane.b32.xlu0 %v1362, 32
        %v2409 = vpop.permute.xlu0 %2408
        %v2411 = vsel %vm1411, %v2407, 0
        %v2414 = vsel %vm1427, %v2409, 0
        %2416 = vmatprep.subr.bf16.mxu0 0
        %2417 = vmatpush1.bf16.msra.mxu0 %v2414
        %2418 = vmatprep.subr.bf16.mxu0 0
        %2419 = vmatpush1.bf16.msra.mxu0 0
        %2420 = vmatprep.subr.bf16.mxu0 0
        %2421 = vmatpush1.bf16.msra.mxu0 0
        %2422 = vmatprep.subr.bf16.mxu0 0
        %2423 = vmatpush1.bf16.msra.mxu0 0
        %2424 = vmatprep.subr.bf16.mxu0 0
        %2425 = vmatpush1.bf16.msra.mxu0 0
        %2426 = vmatprep.subr.bf16.mxu0 0
        %2427 = vmatpush1.bf16.msra.mxu0 0
        %2428 = vmatprep.subr.bf16.mxu0 0
        %2429 = vmatpush1.bf16.msra.mxu0 0
        %2430 = vmatprep.subr.bf16.mxu0 0
        %2431 = vmatpush1.bf16.msra.mxu0 0
        %2432 = vmatprep.subr.bf16.mxu0 0
        %2433 = vmatpush1.bf16.msra.mxu0 0
        %2434 = vmatprep.subr.bf16.mxu0 0
        %2435 = vmatpush1.bf16.msra.mxu0 0
        %2436 = vmatprep.subr.bf16.mxu0 0
        %2437 = vmatpush1.bf16.msra.mxu0 0
        %2438 = vmatprep.subr.bf16.mxu0 0
        %2439 = vmatpush1.bf16.msra.mxu0 0
        %2440 = vmatprep.subr.bf16.mxu0 0
        %2441 = vmatpush1.bf16.msra.mxu0 0
        %2442 = vmatprep.subr.bf16.mxu0 0
        %2443 = vmatpush1.bf16.msra.mxu0 0
        %2444 = vmatprep.subr.bf16.mxu0 0
        %2445 = vmatpush1.bf16.msra.mxu0 0
        %2446 = vmatprep.subr.bf16.mxu0 0
        %2447 = vmatpush1.bf16.msra.mxu0 0
        %2448 = vmatprep.mubr.bf16.mxu0 0
        %2449 = vmatmul.mubr.bf16.gmra.mrb[0].mxu0 %v2411
        %v2450 = vpop.f32.mrb[0].mxu0
        %v2451 = vadd.f32 0.0, %v2450
        %v2452 = vpop.f32.mrb[0].mxu0
        %v2453 = vpop.f32.mrb[0].mxu0
        %v2454 = vpop.f32.mrb[0].mxu0
        %2455 = vdwg.mxu0
        %v2456 = vpack.c.bf16 %v2451, %v2451
        %v2457 = vld [vmem:[%s757 + $0x30] sm:$0xf]
        %v2458 = vld [vmem:[%s757 + $0x34] sm:$0xf]
        %v2461 = vunpack.c.l.b16 %v2457
        %v2462 = vunpack.c.l.b16 %v2458
        %v2463 = vpack.c.b16 %v2462, %v2461
        %v2466 = vsel %vm1363, %v2456, 0
        %2468 = vmatprep.subr.bf16.mxu0 0
        %2469 = vmatpush1.bf16.msra.mxu0 %v2463
        %2470 = vmatprep.subr.bf16.mxu0 0
        %2471 = vmatpush1.bf16.msra.mxu0 0
        %2472 = vmatprep.subr.bf16.mxu0 0
        %2473 = vmatpush1.bf16.msra.mxu0 0
        %2474 = vmatprep.subr.bf16.mxu0 0
        %2475 = vmatpush1.bf16.msra.mxu0 0
        %2476 = vmatprep.subr.bf16.mxu0 0
        %2477 = vmatpush1.bf16.msra.mxu0 0
        %2478 = vmatprep.subr.bf16.mxu0 0
        %2479 = vmatpush1.bf16.msra.mxu0 0
        %2480 = vmatprep.subr.bf16.mxu0 0
        %2481 = vmatpush1.bf16.msra.mxu0 0
        %2482 = vmatprep.subr.bf16.mxu0 0
        %2483 = vmatpush1.bf16.msra.mxu0 0
        %2484 = vmatprep.subr.bf16.mxu0 0
        %2485 = vmatpush1.bf16.msra.mxu0 0
        %2486 = vmatprep.subr.bf16.mxu0 0
        %2487 = vmatpush1.bf16.msra.mxu0 0
        %2488 = vmatprep.subr.bf16.mxu0 0
        %2489 = vmatpush1.bf16.msra.mxu0 0
        %2490 = vmatprep.subr.bf16.mxu0 0
        %2491 = vmatpush1.bf16.msra.mxu0 0
        %2492 = vmatprep.subr.bf16.mxu0 0
        %2493 = vmatpush1.bf16.msra.mxu0 0
        %2494 = vmatprep.subr.bf16.mxu0 0
        %2495 = vmatpush1.bf16.msra.mxu0 0
        %2496 = vmatprep.subr.bf16.mxu0 0
        %2497 = vmatpush1.bf16.msra.mxu0 0
        %2498 = vmatprep.subr.bf16.mxu0 0
        %2499 = vmatpush1.bf16.msra.mxu0 0
        %2500 = vmatprep.mubr.bf16.mxu0 0
        %2501 = vmatmul.mubr.bf16.gmra.mrb[0].mxu0 %v2466
        %v2502 = vpop.f32.mrb[0].mxu0
        %v2503 = vadd.f32 0.0, %v2502
        %v2504 = vpop.f32.mrb[0].mxu0
        %v2505 = vpop.f32.mrb[0].mxu0
        %v2506 = vpop.f32.mrb[0].mxu0
        %2507 = vdwg.mxu0
        %v2508 = vadd.f32 %v2344, %v2503
        %2509 = vrot.lane.b32.xlu0 %v1360, 16
        %v2510 = vpop.permute.xlu0 %2509
        %2511 = vrot.lane.b32.xlu0 %v1361, 16
        %v2512 = vpop.permute.xlu0 %2511
        %v2514 = vsel %vm1363, %v2510, 0
        %v2517 = vsel %vm1363, %v2512, 0
        %2519 = vmatprep.subr.bf16.mxu0 0
        %2520 = vmatpush1.bf16.xpose.msra.mxu0 %v2517
        %2521 = vmatprep.subr.bf16.mxu0 0
        %2522 = vmatpush1.bf16.xpose.msra.mxu0 0
        %2523 = vmatprep.subr.bf16.mxu0 0
        %2524 = vmatpush1.bf16.xpose.msra.mxu0 0
        %2525 = vmatprep.subr.bf16.mxu0 0
        %2526 = vmatpush1.bf16.xpose.msra.mxu0 0
        %2527 = vmatprep.subr.bf16.mxu0 0
        %2528 = vmatpush1.bf16.xpose.msra.mxu0 0
        %2529 = vmatprep.subr.bf16.mxu0 0
        %2530 = vmatpush1.bf16.xpose.msra.mxu0 0
        %2531 = vmatprep.subr.bf16.mxu0 0
        %2532 = vmatpush1.bf16.xpose.msra.mxu0 0
        %2533 = vmatprep.subr.bf16.mxu0 0
        %2534 = vmatpush1.bf16.xpose.msra.mxu0 0
        %2535 = vmatprep.subr.bf16.mxu0 0
        %2536 = vmatpush1.bf16.xpose.msra.mxu0 0
        %2537 = vmatprep.subr.bf16.mxu0 0
        %2538 = vmatpush1.bf16.xpose.msra.mxu0 0
        %2539 = vmatprep.subr.bf16.mxu0 0
        %2540 = vmatpush1.bf16.xpose.msra.mxu0 0
        %2541 = vmatprep.subr.bf16.mxu0 0
        %2542 = vmatpush1.bf16.xpose.msra.mxu0 0
        %2543 = vmatprep.subr.bf16.mxu0 0
        %2544 = vmatpush1.bf16.xpose.msra.mxu0 0
        %2545 = vmatprep.subr.bf16.mxu0 0
        %2546 = vmatpush1.bf16.xpose.msra.mxu0 0
        %2547 = vmatprep.subr.bf16.mxu0 0
        %2548 = vmatpush1.bf16.xpose.msra.mxu0 0
        %2549 = vmatprep.subr.bf16.mxu0 0
        %2550 = vmatpush1.bf16.xpose.msra.mxu0 0
        %2551 = vmatprep.mubr.bf16.mxu0 0
        %2552 = vmatmul.mubr.bf16.gmra.mrb[0].mxu0 %v2514
        %v2553 = vpop.f32.mrb[0].mxu0
        %v2554 = vadd.f32 0.0, %v2553
        %v2555 = vpop.f32.mrb[0].mxu0
        %v2556 = vpop.f32.mrb[0].mxu0
        %v2557 = vpop.f32.mrb[0].mxu0
        %2558 = vdwg.mxu0
        %v2559 = vmul.f32 %v2554, 0.25
        %v2560 = vsel %vm1411, %v2559, -inf
        %2561 = vmax.xlane.f32.xlu0 %v2560
        %v2562 = vpop.xlane.xlu0 %2561
        %v2563 = vsub.f32 %v2559, %v2562
        %v2564 = vmul.f32 %v2563, 1.442695
        %v2565 = vpow.pop %v2564
        %v2566 = vsel %vm1411, %v2565, 0.0
        %2567 = vadd.xlane.f32.xlu0 %v2566
        %v2568 = vpop.xlane.xlu0 %2567
        %v2569 = vrcp.pop %v2568
        %v2570 = vmul.f32 %v2565, %v2569
        %v2571 = vpack.c.bf16 %v2570, %v2570
        %2572 = vrot.lane.b32.xlu0 %v1362, 16
        %v2573 = vpop.permute.xlu0 %2572
        %v2575 = vsel %vm1411, %v2571, 0
        %v2578 = vsel %vm1427, %v2573, 0
        %2580 = vmatprep.subr.bf16.mxu0 0
        %2581 = vmatpush1.bf16.msra.mxu0 %v2578
        %2582 = vmatprep.subr.bf16.mxu0 0
        %2583 = vmatpush1.bf16.msra.mxu0 0
        %2584 = vmatprep.subr.bf16.mxu0 0
        %2585 = vmatpush1.bf16.msra.mxu0 0
        %2586 = vmatprep.subr.bf16.mxu0 0
        %2587 = vmatpush1.bf16.msra.mxu0 0
        %2588 = vmatprep.subr.bf16.mxu0 0
        %2589 = vmatpush1.bf16.msra.mxu0 0
        %2590 = vmatprep.subr.bf16.mxu0 0
        %2591 = vmatpush1.bf16.msra.mxu0 0
        %2592 = vmatprep.subr.bf16.mxu0 0
        %2593 = vmatpush1.bf16.msra.mxu0 0
        %2594 = vmatprep.subr.bf16.mxu0 0
        %2595 = vmatpush1.bf16.msra.mxu0 0
        %2596 = vmatprep.subr.bf16.mxu0 0
        %2597 = vmatpush1.bf16.msra.mxu0 0
        %2598 = vmatprep.subr.bf16.mxu0 0
        %2599 = vmatpush1.bf16.msra.mxu0 0
        %2600 = vmatprep.subr.bf16.mxu0 0
        %2601 = vmatpush1.bf16.msra.mxu0 0
        %2602 = vmatprep.subr.bf16.mxu0 0
        %2603 = vmatpush1.bf16.msra.mxu0 0
        %2604 = vmatprep.subr.bf16.mxu0 0
        %2605 = vmatpush1.bf16.msra.mxu0 0
        %2606 = vmatprep.subr.bf16.mxu0 0
        %2607 = vmatpush1.bf16.msra.mxu0 0
        %2608 = vmatprep.subr.bf16.mxu0 0
        %2609 = vmatpush1.bf16.msra.mxu0 0
        %2610 = vmatprep.subr.bf16.mxu0 0
        %2611 = vmatpush1.bf16.msra.mxu0 0
        %2612 = vmatprep.mubr.bf16.mxu0 0
        %2613 = vmatmul.mubr.bf16.gmra.mrb[0].mxu0 %v2575
        %v2614 = vpop.f32.mrb[0].mxu0
        %v2615 = vadd.f32 0.0, %v2614
        %v2616 = vpop.f32.mrb[0].mxu0
        %v2617 = vpop.f32.mrb[0].mxu0
        %v2618 = vpop.f32.mrb[0].mxu0
        %2619 = vdwg.mxu0
        %v2620 = vpack.c.bf16 %v2615, %v2615
        %v2621 = vld [vmem:[%s757 + $0x38] sm:$0xf]
        %v2622 = vld [vmem:[%s757 + $0x3c] sm:$0xf]
        %v2625 = vunpack.c.l.b16 %v2621
        %v2626 = vunpack.c.l.b16 %v2622
        %v2627 = vpack.c.b16 %v2626, %v2625
        %v2630 = vsel %vm1363, %v2620, 0
        %2632 = vmatprep.subr.bf16.mxu0 0
        %2633 = vmatpush1.bf16.msra.mxu0 %v2627
        %2634 = vmatprep.subr.bf16.mxu0 0
        %2635 = vmatpush1.bf16.msra.mxu0 0
        %2636 = vmatprep.subr.bf16.mxu0 0
        %2637 = vmatpush1.bf16.msra.mxu0 0
        %2638 = vmatprep.subr.bf16.mxu0 0
        %2639 = vmatpush1.bf16.msra.mxu0 0
        %2640 = vmatprep.subr.bf16.mxu0 0
        %2641 = vmatpush1.bf16.msra.mxu0 0
        %2642 = vmatprep.subr.bf16.mxu0 0
        %2643 = vmatpush1.bf16.msra.mxu0 0
        %2644 = vmatprep.subr.bf16.mxu0 0
        %2645 = vmatpush1.bf16.msra.mxu0 0
        %2646 = vmatprep.subr.bf16.mxu0 0
        %2647 = vmatpush1.bf16.msra.mxu0 0
        %2648 = vmatprep.subr.bf16.mxu0 0
        %2649 = vmatpush1.bf16.msra.mxu0 0
        %2650 = vmatprep.subr.bf16.mxu0 0
        %2651 = vmatpush1.bf16.msra.mxu0 0
        %2652 = vmatprep.subr.bf16.mxu0 0
        %2653 = vmatpush1.bf16.msra.mxu0 0
        %2654 = vmatprep.subr.bf16.mxu0 0
        %2655 = vmatpush1.bf16.msra.mxu0 0
        %2656 = vmatprep.subr.bf16.mxu0 0
        %2657 = vmatpush1.bf16.msra.mxu0 0
        %2658 = vmatprep.subr.bf16.mxu0 0
        %2659 = vmatpush1.bf16.msra.mxu0 0
        %2660 = vmatprep.subr.bf16.mxu0 0
        %2661 = vmatpush1.bf16.msra.mxu0 0
        %2662 = vmatprep.subr.bf16.mxu0 0
        %2663 = vmatpush1.bf16.msra.mxu0 0
        %2664 = vmatprep.mubr.bf16.mxu0 0
        %2665 = vmatmul.mubr.bf16.gmra.mrb[0].mxu0 %v2630
        %v2666 = vpop.f32.mrb[0].mxu0
        %v2667 = vadd.f32 0.0, %v2666
        %v2668 = vpop.f32.mrb[0].mxu0
        %v2669 = vpop.f32.mrb[0].mxu0
        %v2670 = vpop.f32.mrb[0].mxu0
        %2671 = vdwg.mxu0
        %v2672 = vadd.f32 %v2508, %v2667
        %v2673 = vld [vmem:[%s914] sm:$0x1]
        %v2675 = vlaneseq
        %v2676 = vshrl.u32 %v2675, 7
        %v2677 = vsub.s32 0, %v2676
        %v2678 = vrot.slane %v2673, %v2677
        %v2680 = vadd.f32 %v2672, %v2678
        %v2681 = vadd.f32 %v1100, %v2680
        %2682 = vadd.xlane.f32.xlu0 %v2681
        %v2683 = vpop.xlane.xlu0 %2682
        %v2684 = vrcp.pop 128.0
        %v2685 = vmul.f32 %v2683, %v2684
        %v2686 = vsub.f32 %v2681, %v2685
        %v2687 = vmul.f32 %v2686, %v2686
        %2688 = vadd.xlane.f32.xlu0 %v2687
        %v2689 = vpop.xlane.xlu0 %2688
        %v2690 = vmul.f32 %v2689, %v2684
        %v2691 = vadd.f32 %v2690, 1e-05
        %v2692 = vrsqrt.pop %v2691
        %v2693 = vmul.f32 %v2686, %v2692
        %v2694 = vld [vmem:[%s917] sm:$0x1]
        %v2696 = vlaneseq
        %v2697 = vshrl.u32 %v2696, 7
        %v2698 = vsub.s32 0, %v2697
        %v2699 = vrot.slane %v2694, %v2698
        %v2701 = vmul.f32 %v2693, %v2699
        %v2702 = vld [vmem:[%s920] sm:$0x1]
        %v2704 = vlaneseq
        %v2705 = vshrl.u32 %v2704, 7
        %v2706 = vsub.s32 0, %v2705
        %v2707 = vrot.slane %v2702, %v2706
        %v2709 = vadd.f32 %v2701, %v2707
        %v2710 = vpack.c.bf16 %v2709, %v2709
        %v2711 = vld [vmem:[%s766] sm:$0xff]
        %v2712 = vld [vmem:[%s766 + $0x8] sm:$0xff]
        %v2713 = vld [vmem:[%s766 + $0x40] sm:$0xff]
        %v2714 = vld [vmem:[%s766 + $0x48] sm:$0xff]
        %v2715 = vld [vmem:[%s766 + $0x80] sm:$0xff]
        %v2716 = vld [vmem:[%s766 + $0x88] sm:$0xff]
        %v2717 = vld [vmem:[%s766 + $0xc0] sm:$0xff]
        %v2718 = vld [vmem:[%s766 + $0xc8] sm:$0xff]
        %v2719 = vld [vmem:[%s766 + $0x100] sm:$0xff]
        %v2720 = vld [vmem:[%s766 + $0x108] sm:$0xff]
        %v2721 = vld [vmem:[%s766 + $0x140] sm:$0xff]
        %v2722 = vld [vmem:[%s766 + $0x148] sm:$0xff]
        %v2723 = vld [vmem:[%s766 + $0x180] sm:$0xff]
        %v2724 = vld [vmem:[%s766 + $0x188] sm:$0xff]
        %v2725 = vld [vmem:[%s766 + $0x1c0] sm:$0xff]
        %v2726 = vld [vmem:[%s766 + $0x1c8] sm:$0xff]
        %v2727 = vld [vmem:[%s766 + $0x200] sm:$0xff]
        %v2728 = vld [vmem:[%s766 + $0x208] sm:$0xff]
        %v2729 = vld [vmem:[%s766 + $0x240] sm:$0xff]
        %v2730 = vld [vmem:[%s766 + $0x248] sm:$0xff]
        %v2731 = vld [vmem:[%s766 + $0x280] sm:$0xff]
        %v2732 = vld [vmem:[%s766 + $0x288] sm:$0xff]
        %v2733 = vld [vmem:[%s766 + $0x2c0] sm:$0xff]
        %v2734 = vld [vmem:[%s766 + $0x2c8] sm:$0xff]
        %v2735 = vld [vmem:[%s766 + $0x300] sm:$0xff]
        %v2736 = vld [vmem:[%s766 + $0x308] sm:$0xff]
        %v2737 = vld [vmem:[%s766 + $0x340] sm:$0xff]
        %v2738 = vld [vmem:[%s766 + $0x348] sm:$0xff]
        %v2739 = vld [vmem:[%s766 + $0x380] sm:$0xff]
        %v2740 = vld [vmem:[%s766 + $0x388] sm:$0xff]
        %v2741 = vld [vmem:[%s766 + $0x3c0] sm:$0xff]
        %v2742 = vld [vmem:[%s766 + $0x3c8] sm:$0xff]
        %v2743 = vld [vmem:[%s775] sm:$0xf]
        %v2745 = vlaneseq
        %v2746 = vshrl.u32 %v2745, 7
        %v2747 = vsub.s32 0, %v2746
        %v2748 = vrot.slane %v2743, %v2747
        %v2749 = vlaneseq
        %v2750 = vshrl.u32 %v2749, 7
        %v2751 = vsub.s32 1, %v2750
        %v2752 = vrot.slane %v2743, %v2751
        %v2753 = vlaneseq
        %v2754 = vshrl.u32 %v2753, 7
        %v2755 = vsub.s32 2, %v2754
        %v2756 = vrot.slane %v2743, %v2755
        %v2757 = vlaneseq
        %v2758 = vshrl.u32 %v2757, 7
        %v2759 = vsub.s32 3, %v2758
        %v2760 = vrot.slane %v2743, %v2759
        %v2797 = vunpack.c.l.b16 %v2711
        %v2798 = vunpack.c.h.b16 %v2711
        %v2799 = vunpack.c.l.b16 %v2712
        %v2800 = vunpack.c.h.b16 %v2712
        %v2801 = vunpack.c.l.b16 %v2713
        %v2802 = vunpack.c.h.b16 %v2713
        %v2803 = vunpack.c.l.b16 %v2714
        %v2804 = vunpack.c.h.b16 %v2714
        %v2805 = vunpack.c.l.b16 %v2715
        %v2806 = vunpack.c.h.b16 %v2715
        %v2807 = vunpack.c.l.b16 %v2716
        %v2808 = vunpack.c.h.b16 %v2716
        %v2809 = vunpack.c.l.b16 %v2717
        %v2810 = vunpack.c.h.b16 %v2717
        %v2811 = vunpack.c.l.b16 %v2718
        %v2812 = vunpack.c.h.b16 %v2718
        %v2813 = vunpack.c.l.b16 %v2719
        %v2814 = vunpack.c.h.b16 %v2719
        %v2815 = vunpack.c.l.b16 %v2720
        %v2816 = vunpack.c.h.b16 %v2720
        %v2817 = vunpack.c.l.b16 %v2721
        %v2818 = vunpack.c.h.b16 %v2721
        %v2819 = vunpack.c.l.b16 %v2722
        %v2820 = vunpack.c.h.b16 %v2722
        %v2821 = vunpack.c.l.b16 %v2723
        %v2822 = vunpack.c.h.b16 %v2723
        %v2823 = vunpack.c.l.b16 %v2724
        %v2824 = vunpack.c.h.b16 %v2724
        %v2825 = vunpack.c.l.b16 %v2725
        %v2826 = vunpack.c.h.b16 %v2725
        %v2827 = vunpack.c.l.b16 %v2726
        %v2828 = vunpack.c.h.b16 %v2726
        %v2829 = vunpack.c.l.b16 %v2727
        %v2830 = vunpack.c.h.b16 %v2727
        %v2831 = vunpack.c.l.b16 %v2728
        %v2832 = vunpack.c.h.b16 %v2728
        %v2833 = vunpack.c.l.b16 %v2729
        %v2834 = vunpack.c.h.b16 %v2729
        %v2835 = vunpack.c.l.b16 %v2730
        %v2836 = vunpack.c.h.b16 %v2730
        %v2837 = vunpack.c.l.b16 %v2731
        %v2838 = vunpack.c.h.b16 %v2731
        %v2839 = vunpack.c.l.b16 %v2732
        %v2840 = vunpack.c.h.b16 %v2732
        %v2841 = vunpack.c.l.b16 %v2733
        %v2842 = vunpack.c.h.b16 %v2733
        %v2843 = vunpack.c.l.b16 %v2734
        %v2844 = vunpack.c.h.b16 %v2734
        %v2845 = vunpack.c.l.b16 %v2735
        %v2846 = vunpack.c.h.b16 %v2735
        %v2847 = vunpack.c.l.b16 %v2736
        %v2848 = vunpack.c.h.b16 %v2736
        %v2849 = vunpack.c.l.b16 %v2737
        %v2850 = vunpack.c.h.b16 %v2737
        %v2851 = vunpack.c.l.b16 %v2738
        %v2852 = vunpack.c.h.b16 %v2738
        %v2853 = vunpack.c.l.b16 %v2739
        %v2854 = vunpack.c.h.b16 %v2739
        %v2855 = vunpack.c.l.b16 %v2740
        %v2856 = vunpack.c.h.b16 %v2740
        %v2857 = vunpack.c.l.b16 %v2741
        %v2858 = vunpack.c.h.b16 %v2741
        %v2859 = vunpack.c.l.b16 %v2742
        %v2860 = vunpack.c.h.b16 %v2742
        %v2861 = vpack.c.b16 %v2801, %v2797
        %v2862 = vpack.c.b16 %v2802, %v2798
        %v2863 = vpack.c.b16 %v2803, %v2799
        %v2864 = vpack.c.b16 %v2804, %v2800
        %v2865 = vpack.c.b16 %v2809, %v2805
        %v2866 = vpack.c.b16 %v2810, %v2806
        %v2867 = vpack.c.b16 %v2811, %v2807
        %v2868 = vpack.c.b16 %v2812, %v2808
        %v2869 = vpack.c.b16 %v2817, %v2813
        %v2870 = vpack.c.b16 %v2818, %v2814
        %v2871 = vpack.c.b16 %v2819, %v2815
        %v2872 = vpack.c.b16 %v2820, %v2816
        %v2873 = vpack.c.b16 %v2825, %v2821
        %v2874 = vpack.c.b16 %v2826, %v2822
        %v2875 = vpack.c.b16 %v2827, %v2823
        %v2876 = vpack.c.b16 %v2828, %v2824
        %v2877 = vpack.c.b16 %v2833, %v2829
        %v2878 = vpack.c.b16 %v2834, %v2830
        %v2879 = vpack.c.b16 %v2835, %v2831
        %v2880 = vpack.c.b16 %v2836, %v2832
        %v2881 = vpack.c.b16 %v2841, %v2837
        %v2882 = vpack.c.b16 %v2842, %v2838
        %v2883 = vpack.c.b16 %v2843, %v2839
        %v2884 = vpack.c.b16 %v2844, %v2840
        %v2885 = vpack.c.b16 %v2849, %v2845
        %v2886 = vpack.c.b16 %v2850, %v2846
        %v2887 = vpack.c.b16 %v2851, %v2847
        %v2888 = vpack.c.b16 %v2852, %v2848
        %v2889 = vpack.c.b16 %v2857, %v2853
        %v2890 = vpack.c.b16 %v2858, %v2854
        %v2891 = vpack.c.b16 %v2859, %v2855
        %v2892 = vpack.c.b16 %v2860, %v2856
        %2925 = vmatprep.subr.bf16.mxu0 %v2862
        %2926 = vmatpush1.bf16.msra.mxu0 %v2861
        %2927 = vmatprep.subr.bf16.mxu0 %v2866
        %2928 = vmatpush1.bf16.msra.mxu0 %v2865
        %2929 = vmatprep.subr.bf16.mxu0 %v2870
        %2930 = vmatpush1.bf16.msra.mxu0 %v2869
        %2931 = vmatprep.subr.bf16.mxu0 %v2874
        %2932 = vmatpush1.bf16.msra.mxu0 %v2873
        %2933 = vmatprep.subr.bf16.mxu0 %v2878
        %2934 = vmatpush1.bf16.msra.mxu0 %v2877
        %2935 = vmatprep.subr.bf16.mxu0 %v2882
        %2936 = vmatpush1.bf16.msra.mxu0 %v2881
        %2937 = vmatprep.subr.bf16.mxu0 %v2886
        %2938 = vmatpush1.bf16.msra.mxu0 %v2885
        %2939 = vmatprep.subr.bf16.mxu0 %v2890
        %2940 = vmatpush1.bf16.msra.mxu0 %v2889
        %2941 = vmatprep.subr.bf16.mxu0 0
        %2942 = vmatpush1.bf16.msra.mxu0 0
        %2943 = vmatprep.subr.bf16.mxu0 0
        %2944 = vmatpush1.bf16.msra.mxu0 0
        %2945 = vmatprep.subr.bf16.mxu0 0
        %2946 = vmatpush1.bf16.msra.mxu0 0
        %2947 = vmatprep.subr.bf16.mxu0 0
        %2948 = vmatpush1.bf16.msra.mxu0 0
        %2949 = vmatprep.subr.bf16.mxu0 0
        %2950 = vmatpush1.bf16.msra.mxu0 0
        %2951 = vmatprep.subr.bf16.mxu0 0
        %2952 = vmatpush1.bf16.msra.mxu0 0
        %2953 = vmatprep.subr.bf16.mxu0 0
        %2954 = vmatpush1.bf16.msra.mxu0 0
        %2955 = vmatprep.subr.bf16.mxu0 0
        %2956 = vmatpush1.bf16.msra.mxu0 0
        %2957 = vmatprep.mubr.bf16.mxu0 0
        %2958 = vmatmul.mubr.bf16.gmra.mrb[0].mxu0 %v2710
        %v2959 = vpop.f32.mrb[0].mxu0
        %v2960 = vadd.f32 %v2748, %v2959
        %v2961 = vpop.f32.mrb[0].mxu0
        %v2962 = vadd.f32 %v2752, %v2961
        %v2963 = vpop.f32.mrb[0].mxu0
        %v2964 = vpop.f32.mrb[0].mxu0
        %2965 = vdwg.mxu0
        %2966 = vmatprep.subr.bf16.mxu0 %v2864
        %2967 = vmatpush1.bf16.msra.mxu0 %v2863
        %2968 = vmatprep.subr.bf16.mxu0 %v2868
        %2969 = vmatpush1.bf16.msra.mxu0 %v2867
        %2970 = vmatprep.subr.bf16.mxu0 %v2872
        %2971 = vmatpush1.bf16.msra.mxu0 %v2871
        %2972 = vmatprep.subr.bf16.mxu0 %v2876
        %2973 = vmatpush1.bf16.msra.mxu0 %v2875
        %2974 = vmatprep.subr.bf16.mxu0 %v2880
        %2975 = vmatpush1.bf16.msra.mxu0 %v2879
        %2976 = vmatprep.subr.bf16.mxu0 %v2884
        %2977 = vmatpush1.bf16.msra.mxu0 %v2883
        %2978 = vmatprep.subr.bf16.mxu0 %v2888
        %2979 = vmatpush1.bf16.msra.mxu0 %v2887
        %2980 = vmatprep.subr.bf16.mxu0 %v2892
        %2981 = vmatpush1.bf16.msra.mxu0 %v2891
        %2982 = vmatprep.subr.bf16.mxu0 0
        %2983 = vmatpush1.bf16.msra.mxu0 0
        %2984 = vmatprep.subr.bf16.mxu0 0
        %2985 = vmatpush1.bf16.msra.mxu0 0
        %2986 = vmatprep.subr.bf16.mxu0 0
        %2987 = vmatpush1.bf16.msra.mxu0 0
        %2988 = vmatprep.subr.bf16.mxu0 0
        %2989 = vmatpush1.bf16.msra.mxu0 0
        %2990 = vmatprep.subr.bf16.mxu0 0
        %2991 = vmatpush1.bf16.msra.mxu0 0
        %2992 = vmatprep.subr.bf16.mxu0 0
        %2993 = vmatpush1.bf16.msra.mxu0 0
        %2994 = vmatprep.subr.bf16.mxu0 0
        %2995 = vmatpush1.bf16.msra.mxu0 0
        %2996 = vmatprep.subr.bf16.mxu0 0
        %2997 = vmatpush1.bf16.msra.mxu0 0
        %2998 = vmatprep.mubr.bf16.mxu0 0
        %2999 = vmatmul.mubr.bf16.gmra.mrb[0].mxu0 %v2710
        %v3000 = vpop.f32.mrb[0].mxu0
        %v3001 = vadd.f32 %v2756, %v3000
        %v3002 = vpop.f32.mrb[0].mxu0
        %v3003 = vadd.f32 %v2760, %v3002
        %v3004 = vpop.f32.mrb[0].mxu0
        %v3005 = vpop.f32.mrb[0].mxu0
        %3006 = vdwg.mxu0
        %v3007 = vmax.f32 %v2960, 0.0
        %v3008 = vmax.f32 %v2962, 0.0
        %v3009 = vmax.f32 %v3001, 0.0
        %v3010 = vmax.f32 %v3003, 0.0
        %v3011 = vpack.c.bf16 %v3007, %v3007
        %v3012 = vpack.c.bf16 %v3008, %v3008
        %v3013 = vpack.c.bf16 %v3009, %v3009
        %v3014 = vpack.c.bf16 %v3010, %v3010
        %v3015 = vld [vmem:[%s784] sm:$0xf]
        %v3016 = vld [vmem:[%s784 + $0x4] sm:$0xf]
        %v3017 = vld [vmem:[%s784 + $0x8] sm:$0xf]
        %v3018 = vld [vmem:[%s784 + $0xc] sm:$0xf]
        %v3019 = vld [vmem:[%s784 + $0x10] sm:$0xf]
        %v3020 = vld [vmem:[%s784 + $0x14] sm:$0xf]
        %v3021 = vld [vmem:[%s784 + $0x18] sm:$0xf]
        %v3022 = vld [vmem:[%s784 + $0x1c] sm:$0xf]
        %v3023 = vld [vmem:[%s784 + $0x20] sm:$0xf]
        %v3024 = vld [vmem:[%s784 + $0x24] sm:$0xf]
        %v3025 = vld [vmem:[%s784 + $0x28] sm:$0xf]
        %v3026 = vld [vmem:[%s784 + $0x2c] sm:$0xf]
        %v3027 = vld [vmem:[%s784 + $0x30] sm:$0xf]
        %v3028 = vld [vmem:[%s784 + $0x34] sm:$0xf]
        %v3029 = vld [vmem:[%s784 + $0x38] sm:$0xf]
        %v3030 = vld [vmem:[%s784 + $0x3c] sm:$0xf]
        %v3031 = vld [vmem:[%s784 + $0x40] sm:$0xf]
        %v3032 = vld [vmem:[%s784 + $0x44] sm:$0xf]
        %v3033 = vld [vmem:[%s784 + $0x48] sm:$0xf]
        %v3034 = vld [vmem:[%s784 + $0x4c] sm:$0xf]
        %v3035 = vld [vmem:[%s784 + $0x50] sm:$0xf]
        %v3036 = vld [vmem:[%s784 + $0x54] sm:$0xf]
        %v3037 = vld [vmem:[%s784 + $0x58] sm:$0xf]
        %v3038 = vld [vmem:[%s784 + $0x5c] sm:$0xf]
        %v3039 = vld [vmem:[%s784 + $0x60] sm:$0xf]
        %v3040 = vld [vmem:[%s784 + $0x64] sm:$0xf]
        %v3041 = vld [vmem:[%s784 + $0x68] sm:$0xf]
        %v3042 = vld [vmem:[%s784 + $0x6c] sm:$0xf]
        %v3043 = vld [vmem:[%s784 + $0x70] sm:$0xf]
        %v3044 = vld [vmem:[%s784 + $0x74] sm:$0xf]
        %v3045 = vld [vmem:[%s784 + $0x78] sm:$0xf]
        %v3046 = vld [vmem:[%s784 + $0x7c] sm:$0xf]
        %v3047 = vld [vmem:[%s784 + $0x80] sm:$0xf]
        %v3048 = vld [vmem:[%s784 + $0x84] sm:$0xf]
        %v3049 = vld [vmem:[%s784 + $0x88] sm:$0xf]
        %v3050 = vld [vmem:[%s784 + $0x8c] sm:$0xf]
        %v3051 = vld [vmem:[%s784 + $0x90] sm:$0xf]
        %v3052 = vld [vmem:[%s784 + $0x94] sm:$0xf]
        %v3053 = vld [vmem:[%s784 + $0x98] sm:$0xf]
        %v3054 = vld [vmem:[%s784 + $0x9c] sm:$0xf]
        %v3055 = vld [vmem:[%s784 + $0xa0] sm:$0xf]
        %v3056 = vld [vmem:[%s784 + $0xa4] sm:$0xf]
        %v3057 = vld [vmem:[%s784 + $0xa8] sm:$0xf]
        %v3058 = vld [vmem:[%s784 + $0xac] sm:$0xf]
        %v3059 = vld [vmem:[%s784 + $0xb0] sm:$0xf]
        %v3060 = vld [vmem:[%s784 + $0xb4] sm:$0xf]
        %v3061 = vld [vmem:[%s784 + $0xb8] sm:$0xf]
        %v3062 = vld [vmem:[%s784 + $0xbc] sm:$0xf]
        %v3063 = vld [vmem:[%s784 + $0xc0] sm:$0xf]
        %v3064 = vld [vmem:[%s784 + $0xc4] sm:$0xf]
        %v3065 = vld [vmem:[%s784 + $0xc8] sm:$0xf]
        %v3066 = vld [vmem:[%s784 + $0xcc] sm:$0xf]
        %v3067 = vld [vmem:[%s784 + $0xd0] sm:$0xf]
        %v3068 = vld [vmem:[%s784 + $0xd4] sm:$0xf]
        %v3069 = vld [vmem:[%s784 + $0xd8] sm:$0xf]
        %v3070 = vld [vmem:[%s784 + $0xdc] sm:$0xf]
        %v3071 = vld [vmem:[%s784 + $0xe0] sm:$0xf]
        %v3072 = vld [vmem:[%s784 + $0xe4] sm:$0xf]
        %v3073 = vld [vmem:[%s784 + $0xe8] sm:$0xf]
        %v3074 = vld [vmem:[%s784 + $0xec] sm:$0xf]
        %v3075 = vld [vmem:[%s784 + $0xf0] sm:$0xf]
        %v3076 = vld [vmem:[%s784 + $0xf4] sm:$0xf]
        %v3077 = vld [vmem:[%s784 + $0xf8] sm:$0xf]
        %v3078 = vld [vmem:[%s784 + $0xfc] sm:$0xf]
        %v3079 = vld [vmem:[%s766 + $0x10] sm:$0xff]
        %v3080 = vld [vmem:[%s766 + $0x18] sm:$0xff]
        %v3081 = vld [vmem:[%s766 + $0x50] sm:$0xff]
        %v3082 = vld [vmem:[%s766 + $0x58] sm:$0xff]
        %v3083 = vld [vmem:[%s766 + $0x90] sm:$0xff]
        %v3084 = vld [vmem:[%s766 + $0x98] sm:$0xff]
        %v3085 = vld [vmem:[%s766 + $0xd0] sm:$0xff]
        %v3086 = vld [vmem:[%s766 + $0xd8] sm:$0xff]
        %v3087 = vld [vmem:[%s766 + $0x110] sm:$0xff]
        %v3088 = vld [vmem:[%s766 + $0x118] sm:$0xff]
        %v3089 = vld [vmem:[%s766 + $0x150] sm:$0xff]
        %v3090 = vld [vmem:[%s766 + $0x158] sm:$0xff]
        %v3091 = vld [vmem:[%s766 + $0x190] sm:$0xff]
        %v3092 = vld [vmem:[%s766 + $0x198] sm:$0xff]
        %v3093 = vld [vmem:[%s766 + $0x1d0] sm:$0xff]
        %v3094 = vld [vmem:[%s766 + $0x1d8] sm:$0xff]
        %v3095 = vld [vmem:[%s766 + $0x210] sm:$0xff]
        %v3096 = vld [vmem:[%s766 + $0x218] sm:$0xff]
        %v3097 = vld [vmem:[%s766 + $0x250] sm:$0xff]
        %v3098 = vld [vmem:[%s766 + $0x258] sm:$0xff]
        %v3099 = vld [vmem:[%s766 + $0x290] sm:$0xff]
        %v3100 = vld [vmem:[%s766 + $0x298] sm:$0xff]
        %v3101 = vld [vmem:[%s766 + $0x2d0] sm:$0xff]
        %v3102 = vld [vmem:[%s766 + $0x2d8] sm:$0xff]
        %v3103 = vld [vmem:[%s766 + $0x310] sm:$0xff]
        %v3104 = vld [vmem:[%s766 + $0x318] sm:$0xff]
        %v3105 = vld [vmem:[%s766 + $0x350] sm:$0xff]
        %v3106 = vld [vmem:[%s766 + $0x358] sm:$0xff]
        %v3107 = vld [vmem:[%s766 + $0x390] sm:$0xff]
        %v3108 = vld [vmem:[%s766 + $0x398] sm:$0xff]
        %v3109 = vld [vmem:[%s766 + $0x3d0] sm:$0xff]
        %v3110 = vld [vmem:[%s766 + $0x3d8] sm:$0xff]
        %v3111 = vld [vmem:[%s775 + $0x4] sm:$0xf]
        %v3113 = vlaneseq
        %v3114 = vshrl.u32 %v3113, 7
        %v3115 = vsub.s32 0, %v3114
        %v3116 = vrot.slane %v3111, %v3115
        %v3117 = vlaneseq
        %v3118 = vshrl.u32 %v3117, 7
        %v3119 = vsub.s32 1, %v3118
        %v3120 = vrot.slane %v3111, %v3119
        %v3121 = vlaneseq
        %v3122 = vshrl.u32 %v3121, 7
        %v3123 = vsub.s32 2, %v3122
        %v3124 = vrot.slane %v3111, %v3123
        %v3125 = vlaneseq
        %v3126 = vshrl.u32 %v3125, 7
        %v3127 = vsub.s32 3, %v3126
        %v3128 = vrot.slane %v3111, %v3127
        %v3165 = vunpack.c.l.b16 %v3079
        %v3166 = vunpack.c.h.b16 %v3079
        %v3167 = vunpack.c.l.b16 %v3080
        %v3168 = vunpack.c.h.b16 %v3080
        %v3169 = vunpack.c.l.b16 %v3081
        %v3170 = vunpack.c.h.b16 %v3081
        %v3171 = vunpack.c.l.b16 %v3082
        %v3172 = vunpack.c.h.b16 %v3082
        %v3173 = vunpack.c.l.b16 %v3083
        %v3174 = vunpack.c.h.b16 %v3083
        %v3175 = vunpack.c.l.b16 %v3084
        %v3176 = vunpack.c.h.b16 %v3084
        %v3177 = vunpack.c.l.b16 %v3085
        %v3178 = vunpack.c.h.b16 %v3085
        %v3179 = vunpack.c.l.b16 %v3086
        %v3180 = vunpack.c.h.b16 %v3086
        %v3181 = vunpack.c.l.b16 %v3087
        %v3182 = vunpack.c.h.b16 %v3087
        %v3183 = vunpack.c.l.b16 %v3088
        %v3184 = vunpack.c.h.b16 %v3088
        %v3185 = vunpack.c.l.b16 %v3089
        %v3186 = vunpack.c.h.b16 %v3089
        %v3187 = vunpack.c.l.b16 %v3090
        %v3188 = vunpack.c.h.b16 %v3090
        %v3189 = vunpack.c.l.b16 %v3091
        %v3190 = vunpack.c.h.b16 %v3091
        %v3191 = vunpack.c.l.b16 %v3092
        %v3192 = vunpack.c.h.b16 %v3092
        %v3193 = vunpack.c.l.b16 %v3093
        %v3194 = vunpack.c.h.b16 %v3093
        %v3195 = vunpack.c.l.b16 %v3094
        %v3196 = vunpack.c.h.b16 %v3094
        %v3197 = vunpack.c.l.b16 %v3095
        %v3198 = vunpack.c.h.b16 %v3095
        %v3199 = vunpack.c.l.b16 %v3096
        %v3200 = vunpack.c.h.b16 %v3096
        %v3201 = vunpack.c.l.b16 %v3097
        %v3202 = vunpack.c.h.b16 %v3097
        %v3203 = vunpack.c.l.b16 %v3098
        %v3204 = vunpack.c.h.b16 %v3098
        %v3205 = vunpack.c.l.b16 %v3099
        %v3206 = vunpack.c.h.b16 %v3099
        %v3207 = vunpack.c.l.b16 %v3100
        %v3208 = vunpack.c.h.b16 %v3100
        %v3209 = vunpack.c.l.b16 %v3101
        %v3210 = vunpack.c.h.b16 %v3101
        %v3211 = vunpack.c.l.b16 %v3102
        %v3212 = vunpack.c.h.b16 %v3102
        %v3213 = vunpack.c.l.b16 %v3103
        %v3214 = vunpack.c.h.b16 %v3103
        %v3215 = vunpack.c.l.b16 %v3104
        %v3216 = vunpack.c.h.b16 %v3104
        %v3217 = vunpack.c.l.b16 %v3105
        %v3218 = vunpack.c.h.b16 %v3105
        %v3219 = vunpack.c.l.b16 %v3106
        %v3220 = vunpack.c.h.b16 %v3106
        %v3221 = vunpack.c.l.b16 %v3107
        %v3222 = vunpack.c.h.b16 %v3107
        %v3223 = vunpack.c.l.b16 %v3108
        %v3224 = vunpack.c.h.b16 %v3108
        %v3225 = vunpack.c.l.b16 %v3109
        %v3226 = vunpack.c.h.b16 %v3109
        %v3227 = vunpack.c.l.b16 %v3110
        %v3228 = vunpack.c.h.b16 %v3110
        %v3229 = vpack.c.b16 %v3169, %v3165
        %v3230 = vpack.c.b16 %v3170, %v3166
        %v3231 = vpack.c.b16 %v3171, %v3167
        %v3232 = vpack.c.b16 %v3172, %v3168
        %v3233 = vpack.c.b16 %v3177, %v3173
        %v3234 = vpack.c.b16 %v3178, %v3174
        %v3235 = vpack.c.b16 %v3179, %v3175
        %v3236 = vpack.c.b16 %v3180, %v3176
        %v3237 = vpack.c.b16 %v3185, %v3181
        %v3238 = vpack.c.b16 %v3186, %v3182
        %v3239 = vpack.c.b16 %v3187, %v3183
        %v3240 = vpack.c.b16 %v3188, %v3184
        %v3241 = vpack.c.b16 %v3193, %v3189
        %v3242 = vpack.c.b16 %v3194, %v3190
        %v3243 = vpack.c.b16 %v3195, %v3191
        %v3244 = vpack.c.b16 %v3196, %v3192
        %v3245 = vpack.c.b16 %v3201, %v3197
        %v3246 = vpack.c.b16 %v3202, %v3198
        %v3247 = vpack.c.b16 %v3203, %v3199
        %v3248 = vpack.c.b16 %v3204, %v3200
        %v3249 = vpack.c.b16 %v3209, %v3205
        %v3250 = vpack.c.b16 %v3210, %v3206
        %v3251 = vpack.c.b16 %v3211, %v3207
        %v3252 = vpack.c.b16 %v3212, %v3208
        %v3253 = vpack.c.b16 %v3217, %v3213
        %v3254 = vpack.c.b16 %v3218, %v3214
        %v3255 = vpack.c.b16 %v3219, %v3215
        %v3256 = vpack.c.b16 %v3220, %v3216
        %v3257 = vpack.c.b16 %v3225, %v3221
        %v3258 = vpack.c.b16 %v3226, %v3222
        %v3259 = vpack.c.b16 %v3227, %v3223
        %v3260 = vpack.c.b16 %v3228, %v3224
        %3293 = vmatprep.subr.bf16.mxu0 %v3230
        %3294 = vmatpush1.bf16.msra.mxu0 %v3229
        %3295 = vmatprep.subr.bf16.mxu0 %v3234
        %3296 = vmatpush1.bf16.msra.mxu0 %v3233
        %3297 = vmatprep.subr.bf16.mxu0 %v3238
        %3298 = vmatpush1.bf16.msra.mxu0 %v3237
        %3299 = vmatprep.subr.bf16.mxu0 %v3242
        %3300 = vmatpush1.bf16.msra.mxu0 %v3241
        %3301 = vmatprep.subr.bf16.mxu0 %v3246
        %3302 = vmatpush1.bf16.msra.mxu0 %v3245
        %3303 = vmatprep.subr.bf16.mxu0 %v3250
        %3304 = vmatpush1.bf16.msra.mxu0 %v3249
        %3305 = vmatprep.subr.bf16.mxu0 %v3254
        %3306 = vmatpush1.bf16.msra.mxu0 %v3253
        %3307 = vmatprep.subr.bf16.mxu0 %v3258
        %3308 = vmatpush1.bf16.msra.mxu0 %v3257
        %3309 = vmatprep.subr.bf16.mxu0 0
        %3310 = vmatpush1.bf16.msra.mxu0 0
        %3311 = vmatprep.subr.bf16.mxu0 0
        %3312 = vmatpush1.bf16.msra.mxu0 0
        %3313 = vmatprep.subr.bf16.mxu0 0
        %3314 = vmatpush1.bf16.msra.mxu0 0
        %3315 = vmatprep.subr.bf16.mxu0 0
        %3316 = vmatpush1.bf16.msra.mxu0 0
        %3317 = vmatprep.subr.bf16.mxu0 0
        %3318 = vmatpush1.bf16.msra.mxu0 0
        %3319 = vmatprep.subr.bf16.mxu0 0
        %3320 = vmatpush1.bf16.msra.mxu0 0
        %3321 = vmatprep.subr.bf16.mxu0 0
        %3322 = vmatpush1.bf16.msra.mxu0 0
        %3323 = vmatprep.subr.bf16.mxu0 0
        %3324 = vmatpush1.bf16.msra.mxu0 0
        %3325 = vmatprep.mubr.bf16.mxu0 0
        %3326 = vmatmul.mubr.bf16.gmra.mrb[0].mxu0 %v2710
        %v3327 = vpop.f32.mrb[0].mxu0
        %v3328 = vadd.f32 %v3116, %v3327
        %v3329 = vpop.f32.mrb[0].mxu0
        %v3330 = vadd.f32 %v3120, %v3329
        %v3331 = vpop.f32.mrb[0].mxu0
        %v3332 = vpop.f32.mrb[0].mxu0
        %3333 = vdwg.mxu0
        %3334 = vmatprep.subr.bf16.mxu0 %v3232
        %3335 = vmatpush1.bf16.msra.mxu0 %v3231
        %3336 = vmatprep.subr.bf16.mxu0 %v3236
        %3337 = vmatpush1.bf16.msra.mxu0 %v3235
        %3338 = vmatprep.subr.bf16.mxu0 %v3240
        %3339 = vmatpush1.bf16.msra.mxu0 %v3239
        %3340 = vmatprep.subr.bf16.mxu0 %v3244
        %3341 = vmatpush1.bf16.msra.mxu0 %v3243
        %3342 = vmatprep.subr.bf16.mxu0 %v3248
        %3343 = vmatpush1.bf16.msra.mxu0 %v3247
        %3344 = vmatprep.subr.bf16.mxu0 %v3252
        %3345 = vmatpush1.bf16.msra.mxu0 %v3251
        %3346 = vmatprep.subr.bf16.mxu0 %v3256
        %3347 = vmatpush1.bf16.msra.mxu0 %v3255
        %3348 = vmatprep.subr.bf16.mxu0 %v3260
        %3349 = vmatpush1.bf16.msra.mxu0 %v3259
        %3350 = vmatprep.subr.bf16.mxu0 0
        %3351 = vmatpush1.bf16.msra.mxu0 0
        %3352 = vmatprep.subr.bf16.mxu0 0
        %3353 = vmatpush1.bf16.msra.mxu0 0
        %3354 = vmatprep.subr.bf16.mxu0 0
        %3355 = vmatpush1.bf16.msra.mxu0 0
        %3356 = vmatprep.subr.bf16.mxu0 0
        %3357 = vmatpush1.bf16.msra.mxu0 0
        %3358 = vmatprep.subr.bf16.mxu0 0
        %3359 = vmatpush1.bf16.msra.mxu0 0
        %3360 = vmatprep.subr.bf16.mxu0 0
        %3361 = vmatpush1.bf16.msra.mxu0 0
        %3362 = vmatprep.subr.bf16.mxu0 0
        %3363 = vmatpush1.bf16.msra.mxu0 0
        %3364 = vmatprep.subr.bf16.mxu0 0
        %3365 = vmatpush1.bf16.msra.mxu0 0
        %3366 = vmatprep.mubr.bf16.mxu0 0
        %3367 = vmatmul.mubr.bf16.gmra.mrb[0].mxu0 %v2710
        %v3368 = vpop.f32.mrb[0].mxu0
        %v3369 = vadd.f32 %v3124, %v3368
        %v3370 = vpop.f32.mrb[0].mxu0
        %v3371 = vadd.f32 %v3128, %v3370
        %v3372 = vpop.f32.mrb[0].mxu0
        %v3373 = vpop.f32.mrb[0].mxu0
        %3374 = vdwg.mxu0
        %v3375 = vmax.f32 %v3328, 0.0
        %v3376 = vmax.f32 %v3330, 0.0
        %v3377 = vmax.f32 %v3369, 0.0
        %v3378 = vmax.f32 %v3371, 0.0
        %v3379 = vpack.c.bf16 %v3375, %v3375
        %v3380 = vpack.c.bf16 %v3376, %v3376
        %v3381 = vpack.c.bf16 %v3377, %v3377
        %v3382 = vpack.c.bf16 %v3378, %v3378
        %v3383 = vld [vmem:[%s784 + $0x100] sm:$0xf]
        %v3384 = vld [vmem:[%s784 + $0x104] sm:$0xf]
        %v3385 = vld [vmem:[%s784 + $0x108] sm:$0xf]
        %v3386 = vld [vmem:[%s784 + $0x10c] sm:$0xf]
        %v3387 = vld [vmem:[%s784 + $0x110] sm:$0xf]
        %v3388 = vld [vmem:[%s784 + $0x114] sm:$0xf]
        %v3389 = vld [vmem:[%s784 + $0x118] sm:$0xf]
        %v3390 = vld [vmem:[%s784 + $0x11c] sm:$0xf]
        %v3391 = vld [vmem:[%s784 + $0x120] sm:$0xf]
        %v3392 = vld [vmem:[%s784 + $0x124] sm:$0xf]
        %v3393 = vld [vmem:[%s784 + $0x128] sm:$0xf]
        %v3394 = vld [vmem:[%s784 + $0x12c] sm:$0xf]
        %v3395 = vld [vmem:[%s784 + $0x130] sm:$0xf]
        %v3396 = vld [vmem:[%s784 + $0x134] sm:$0xf]
        %v3397 = vld [vmem:[%s784 + $0x138] sm:$0xf]
        %v3398 = vld [vmem:[%s784 + $0x13c] sm:$0xf]
        %v3399 = vld [vmem:[%s784 + $0x140] sm:$0xf]
        %v3400 = vld [vmem:[%s784 + $0x144] sm:$0xf]
        %v3401 = vld [vmem:[%s784 + $0x148] sm:$0xf]
        %v3402 = vld [vmem:[%s784 + $0x14c] sm:$0xf]
        %v3403 = vld [vmem:[%s784 + $0x150] sm:$0xf]
        %v3404 = vld [vmem:[%s784 + $0x154] sm:$0xf]
        %v3405 = vld [vmem:[%s784 + $0x158] sm:$0xf]
        %v3406 = vld [vmem:[%s784 + $0x15c] sm:$0xf]
        %v3407 = vld [vmem:[%s784 + $0x160] sm:$0xf]
        %v3408 = vld [vmem:[%s784 + $0x164] sm:$0xf]
        %v3409 = vld [vmem:[%s784 + $0x168] sm:$0xf]
        %v3410 = vld [vmem:[%s784 + $0x16c] sm:$0xf]
        %v3411 = vld [vmem:[%s784 + $0x170] sm:$0xf]
        %v3412 = vld [vmem:[%s784 + $0x174] sm:$0xf]
        %v3413 = vld [vmem:[%s784 + $0x178] sm:$0xf]
        %v3414 = vld [vmem:[%s784 + $0x17c] sm:$0xf]
        %v3415 = vld [vmem:[%s784 + $0x180] sm:$0xf]
        %v3416 = vld [vmem:[%s784 + $0x184] sm:$0xf]
        %v3417 = vld [vmem:[%s784 + $0x188] sm:$0xf]
        %v3418 = vld [vmem:[%s784 + $0x18c] sm:$0xf]
        %v3419 = vld [vmem:[%s784 + $0x190] sm:$0xf]
        %v3420 = vld [vmem:[%s784 + $0x194] sm:$0xf]
        %v3421 = vld [vmem:[%s784 + $0x198] sm:$0xf]
        %v3422 = vld [vmem:[%s784 + $0x19c] sm:$0xf]
        %v3423 = vld [vmem:[%s784 + $0x1a0] sm:$0xf]
        %v3424 = vld [vmem:[%s784 + $0x1a4] sm:$0xf]
        %v3425 = vld [vmem:[%s784 + $0x1a8] sm:$0xf]
        %v3426 = vld [vmem:[%s784 + $0x1ac] sm:$0xf]
        %v3427 = vld [vmem:[%s784 + $0x1b0] sm:$0xf]
        %v3428 = vld [vmem:[%s784 + $0x1b4] sm:$0xf]
        %v3429 = vld [vmem:[%s784 + $0x1b8] sm:$0xf]
        %v3430 = vld [vmem:[%s784 + $0x1bc] sm:$0xf]
        %v3431 = vld [vmem:[%s784 + $0x1c0] sm:$0xf]
        %v3432 = vld [vmem:[%s784 + $0x1c4] sm:$0xf]
        %v3433 = vld [vmem:[%s784 + $0x1c8] sm:$0xf]
        %v3434 = vld [vmem:[%s784 + $0x1cc] sm:$0xf]
        %v3435 = vld [vmem:[%s784 + $0x1d0] sm:$0xf]
        %v3436 = vld [vmem:[%s784 + $0x1d4] sm:$0xf]
        %v3437 = vld [vmem:[%s784 + $0x1d8] sm:$0xf]
        %v3438 = vld [vmem:[%s784 + $0x1dc] sm:$0xf]
        %v3439 = vld [vmem:[%s784 + $0x1e0] sm:$0xf]
        %v3440 = vld [vmem:[%s784 + $0x1e4] sm:$0xf]
        %v3441 = vld [vmem:[%s784 + $0x1e8] sm:$0xf]
        %v3442 = vld [vmem:[%s784 + $0x1ec] sm:$0xf]
        %v3443 = vld [vmem:[%s784 + $0x1f0] sm:$0xf]
        %v3444 = vld [vmem:[%s784 + $0x1f4] sm:$0xf]
        %v3445 = vld [vmem:[%s784 + $0x1f8] sm:$0xf]
        %v3446 = vld [vmem:[%s784 + $0x1fc] sm:$0xf]
        %v3511 = vunpack.c.l.b16 %v3383
        %v3512 = vunpack.c.l.b16 %v3384
        %v3513 = vunpack.c.l.b16 %v3385
        %v3514 = vunpack.c.l.b16 %v3386
        %v3515 = vunpack.c.l.b16 %v3387
        %v3516 = vunpack.c.l.b16 %v3388
        %v3517 = vunpack.c.l.b16 %v3389
        %v3518 = vunpack.c.l.b16 %v3390
        %v3519 = vunpack.c.l.b16 %v3391
        %v3520 = vunpack.c.l.b16 %v3392
        %v3521 = vunpack.c.l.b16 %v3393
        %v3522 = vunpack.c.l.b16 %v3394
        %v3523 = vunpack.c.l.b16 %v3395
        %v3524 = vunpack.c.l.b16 %v3396
        %v3525 = vunpack.c.l.b16 %v3397
        %v3526 = vunpack.c.l.b16 %v3398
        %v3527 = vunpack.c.l.b16 %v3399
        %v3528 = vunpack.c.l.b16 %v3400
        %v3529 = vunpack.c.l.b16 %v3401
        %v3530 = vunpack.c.l.b16 %v3402
        %v3531 = vunpack.c.l.b16 %v3403
        %v3532 = vunpack.c.l.b16 %v3404
        %v3533 = vunpack.c.l.b16 %v3405
        %v3534 = vunpack.c.l.b16 %v3406
        %v3535 = vunpack.c.l.b16 %v3407
        %v3536 = vunpack.c.l.b16 %v3408
        %v3537 = vunpack.c.l.b16 %v3409
        %v3538 = vunpack.c.l.b16 %v3410
        %v3539 = vunpack.c.l.b16 %v3411
        %v3540 = vunpack.c.l.b16 %v3412
        %v3541 = vunpack.c.l.b16 %v3413
        %v3542 = vunpack.c.l.b16 %v3414
        %v3543 = vunpack.c.l.b16 %v3415
        %v3544 = vunpack.c.l.b16 %v3416
        %v3545 = vunpack.c.l.b16 %v3417
        %v3546 = vunpack.c.l.b16 %v3418
        %v3547 = vunpack.c.l.b16 %v3419
        %v3548 = vunpack.c.l.b16 %v3420
        %v3549 = vunpack.c.l.b16 %v3421
        %v3550 = vunpack.c.l.b16 %v3422
        %v3551 = vunpack.c.l.b16 %v3423
        %v3552 = vunpack.c.l.b16 %v3424
        %v3553 = vunpack.c.l.b16 %v3425
        %v3554 = vunpack.c.l.b16 %v3426
        %v3555 = vunpack.c.l.b16 %v3427
        %v3556 = vunpack.c.l.b16 %v3428
        %v3557 = vunpack.c.l.b16 %v3429
        %v3558 = vunpack.c.l.b16 %v3430
        %v3559 = vunpack.c.l.b16 %v3431
        %v3560 = vunpack.c.l.b16 %v3432
        %v3561 = vunpack.c.l.b16 %v3433
        %v3562 = vunpack.c.l.b16 %v3434
        %v3563 = vunpack.c.l.b16 %v3435
        %v3564 = vunpack.c.l.b16 %v3436
        %v3565 = vunpack.c.l.b16 %v3437
        %v3566 = vunpack.c.l.b16 %v3438
        %v3567 = vunpack.c.l.b16 %v3439
        %v3568 = vunpack.c.l.b16 %v3440
        %v3569 = vunpack.c.l.b16 %v3441
        %v3570 = vunpack.c.l.b16 %v3442
        %v3571 = vunpack.c.l.b16 %v3443
        %v3572 = vunpack.c.l.b16 %v3444
        %v3573 = vunpack.c.l.b16 %v3445
        %v3574 = vunpack.c.l.b16 %v3446
        %v3575 = vpack.c.b16 %v3512, %v3511
        %v3576 = vpack.c.b16 %v3514, %v3513
        %v3577 = vpack.c.b16 %v3516, %v3515
        %v3578 = vpack.c.b16 %v3518, %v3517
        %v3579 = vpack.c.b16 %v3520, %v3519
        %v3580 = vpack.c.b16 %v3522, %v3521
        %v3581 = vpack.c.b16 %v3524, %v3523
        %v3582 = vpack.c.b16 %v3526, %v3525
        %v3583 = vpack.c.b16 %v3528, %v3527
        %v3584 = vpack.c.b16 %v3530, %v3529
        %v3585 = vpack.c.b16 %v3532, %v3531
        %v3586 = vpack.c.b16 %v3534, %v3533
        %v3587 = vpack.c.b16 %v3536, %v3535
        %v3588 = vpack.c.b16 %v3538, %v3537
        %v3589 = vpack.c.b16 %v3540, %v3539
        %v3590 = vpack.c.b16 %v3542, %v3541
        %v3591 = vpack.c.b16 %v3544, %v3543
        %v3592 = vpack.c.b16 %v3546, %v3545
        %v3593 = vpack.c.b16 %v3548, %v3547
        %v3594 = vpack.c.b16 %v3550, %v3549
        %v3595 = vpack.c.b16 %v3552, %v3551
        %v3596 = vpack.c.b16 %v3554, %v3553
        %v3597 = vpack.c.b16 %v3556, %v3555
        %v3598 = vpack.c.b16 %v3558, %v3557
        %v3599 = vpack.c.b16 %v3560, %v3559
        %v3600 = vpack.c.b16 %v3562, %v3561
        %v3601 = vpack.c.b16 %v3564, %v3563
        %v3602 = vpack.c.b16 %v3566, %v3565
        %v3603 = vpack.c.b16 %v3568, %v3567
        %v3604 = vpack.c.b16 %v3570, %v3569
        %v3605 = vpack.c.b16 %v3572, %v3571
        %v3606 = vpack.c.b16 %v3574, %v3573
        %3639 = vmatprep.subr.bf16.mxu0 0
        %3640 = vmatpush1.bf16.msra.mxu0 %v3575
        %3641 = vmatprep.subr.bf16.mxu0 0
        %3642 = vmatpush1.bf16.msra.mxu0 %v3576
        %3643 = vmatprep.subr.bf16.mxu0 0
        %3644 = vmatpush1.bf16.msra.mxu0 %v3577
        %3645 = vmatprep.subr.bf16.mxu0 0
        %3646 = vmatpush1.bf16.msra.mxu0 %v3578
        %3647 = vmatprep.subr.bf16.mxu0 0
        %3648 = vmatpush1.bf16.msra.mxu0 %v3579
        %3649 = vmatprep.subr.bf16.mxu0 0
        %3650 = vmatpush1.bf16.msra.mxu0 %v3580
        %3651 = vmatprep.subr.bf16.mxu0 0
        %3652 = vmatpush1.bf16.msra.mxu0 %v3581
        %3653 = vmatprep.subr.bf16.mxu0 0
        %3654 = vmatpush1.bf16.msra.mxu0 %v3582
        %3655 = vmatprep.subr.bf16.mxu0 0
        %3656 = vmatpush1.bf16.msra.mxu0 %v3583
        %3657 = vmatprep.subr.bf16.mxu0 0
        %3658 = vmatpush1.bf16.msra.mxu0 %v3584
        %3659 = vmatprep.subr.bf16.mxu0 0
        %3660 = vmatpush1.bf16.msra.mxu0 %v3585
        %3661 = vmatprep.subr.bf16.mxu0 0
        %3662 = vmatpush1.bf16.msra.mxu0 %v3586
        %3663 = vmatprep.subr.bf16.mxu0 0
        %3664 = vmatpush1.bf16.msra.mxu0 %v3587
        %3665 = vmatprep.subr.bf16.mxu0 0
        %3666 = vmatpush1.bf16.msra.mxu0 %v3588
        %3667 = vmatprep.subr.bf16.mxu0 0
        %3668 = vmatpush1.bf16.msra.mxu0 %v3589
        %3669 = vmatprep.subr.bf16.mxu0 0
        %3670 = vmatpush1.bf16.msra.mxu0 %v3590
        %3671 = vmatprep.mubr.bf16.mxu0 %v3380
        %3672 = vmatmul.mubr.bf16.gmra.mrb[0].mxu0 %v3379
        %v3673 = vpop.f32.mrb[0].mxu0
        %v3674 = vadd.f32 0.0, %v3673
        %v3675 = vpop.f32.mrb[0].mxu0
        %v3676 = vpop.f32.mrb[0].mxu0
        %v3677 = vpop.f32.mrb[0].mxu0
        %3678 = vdwg.mxu0
        %3679 = vmatprep.subr.bf16.mxu0 0
        %3680 = vmatpush1.bf16.msra.mxu0 %v3591
        %3681 = vmatprep.subr.bf16.mxu0 0
        %3682 = vmatpush1.bf16.msra.mxu0 %v3592
        %3683 = vmatprep.subr.bf16.mxu0 0
        %3684 = vmatpush1.bf16.msra.mxu0 %v3593
        %3685 = vmatprep.subr.bf16.mxu0 0
        %3686 = vmatpush1.bf16.msra.mxu0 %v3594
        %3687 = vmatprep.subr.bf16.mxu0 0
        %3688 = vmatpush1.bf16.msra.mxu0 %v3595
        %3689 = vmatprep.subr.bf16.mxu0 0
        %3690 = vmatpush1.bf16.msra.mxu0 %v3596
        %3691 = vmatprep.subr.bf16.mxu0 0
        %3692 = vmatpush1.bf16.msra.mxu0 %v3597
        %3693 = vmatprep.subr.bf16.mxu0 0
        %3694 = vmatpush1.bf16.msra.mxu0 %v3598
        %3695 = vmatprep.subr.bf16.mxu0 0
        %3696 = vmatpush1.bf16.msra.mxu0 %v3599
        %3697 = vmatprep.subr.bf16.mxu0 0
        %3698 = vmatpush1.bf16.msra.mxu0 %v3600
        %3699 = vmatprep.subr.bf16.mxu0 0
        %3700 = vmatpush1.bf16.msra.mxu0 %v3601
        %3701 = vmatprep.subr.bf16.mxu0 0
        %3702 = vmatpush1.bf16.msra.mxu0 %v3602
        %3703 = vmatprep.subr.bf16.mxu0 0
        %3704 = vmatpush1.bf16.msra.mxu0 %v3603
        %3705 = vmatprep.subr.bf16.mxu0 0
        %3706 = vmatpush1.bf16.msra.mxu0 %v3604
        %3707 = vmatprep.subr.bf16.mxu0 0
        %3708 = vmatpush1.bf16.msra.mxu0 %v3605
        %3709 = vmatprep.subr.bf16.mxu0 0
        %3710 = vmatpush1.bf16.msra.mxu0 %v3606
        %3711 = vmatprep.mubr.bf16.mxu0 %v3382
        %3712 = vmatmul.mubr.bf16.gmra.mrb[0].mxu0 %v3381
        %v3713 = vpop.f32.mrb[0].mxu0
        %v3714 = vadd.f32 %v3674, %v3713
        %v3715 = vpop.f32.mrb[0].mxu0
        %v3716 = vpop.f32.mrb[0].mxu0
        %v3717 = vpop.f32.mrb[0].mxu0
        %3718 = vdwg.mxu0
        %v3783 = vunpack.c.l.b16 %v3015
        %v3784 = vunpack.c.l.b16 %v3016
        %v3785 = vunpack.c.l.b16 %v3017
        %v3786 = vunpack.c.l.b16 %v3018
        %v3787 = vunpack.c.l.b16 %v3019
        %v3788 = vunpack.c.l.b16 %v3020
        %v3789 = vunpack.c.l.b16 %v3021
        %v3790 = vunpack.c.l.b16 %v3022
        %v3791 = vunpack.c.l.b16 %v3023
        %v3792 = vunpack.c.l.b16 %v3024
        %v3793 = vunpack.c.l.b16 %v3025
        %v3794 = vunpack.c.l.b16 %v3026
        %v3795 = vunpack.c.l.b16 %v3027
        %v3796 = vunpack.c.l.b16 %v3028
        %v3797 = vunpack.c.l.b16 %v3029
        %v3798 = vunpack.c.l.b16 %v3030
        %v3799 = vunpack.c.l.b16 %v3031
        %v3800 = vunpack.c.l.b16 %v3032
        %v3801 = vunpack.c.l.b16 %v3033
        %v3802 = vunpack.c.l.b16 %v3034
        %v3803 = vunpack.c.l.b16 %v3035
        %v3804 = vunpack.c.l.b16 %v3036
        %v3805 = vunpack.c.l.b16 %v3037
        %v3806 = vunpack.c.l.b16 %v3038
        %v3807 = vunpack.c.l.b16 %v3039
        %v3808 = vunpack.c.l.b16 %v3040
        %v3809 = vunpack.c.l.b16 %v3041
        %v3810 = vunpack.c.l.b16 %v3042
        %v3811 = vunpack.c.l.b16 %v3043
        %v3812 = vunpack.c.l.b16 %v3044
        %v3813 = vunpack.c.l.b16 %v3045
        %v3814 = vunpack.c.l.b16 %v3046
        %v3815 = vunpack.c.l.b16 %v3047
        %v3816 = vunpack.c.l.b16 %v3048
        %v3817 = vunpack.c.l.b16 %v3049
        %v3818 = vunpack.c.l.b16 %v3050
        %v3819 = vunpack.c.l.b16 %v3051
        %v3820 = vunpack.c.l.b16 %v3052
        %v3821 = vunpack.c.l.b16 %v3053
        %v3822 = vunpack.c.l.b16 %v3054
        %v3823 = vunpack.c.l.b16 %v3055
        %v3824 = vunpack.c.l.b16 %v3056
        %v3825 = vunpack.c.l.b16 %v3057
        %v3826 = vunpack.c.l.b16 %v3058
        %v3827 = vunpack.c.l.b16 %v3059
        %v3828 = vunpack.c.l.b16 %v3060
        %v3829 = vunpack.c.l.b16 %v3061
        %v3830 = vunpack.c.l.b16 %v3062
        %v3831 = vunpack.c.l.b16 %v3063
        %v3832 = vunpack.c.l.b16 %v3064
        %v3833 = vunpack.c.l.b16 %v3065
        %v3834 = vunpack.c.l.b16 %v3066
        %v3835 = vunpack.c.l.b16 %v3067
        %v3836 = vunpack.c.l.b16 %v3068
        %v3837 = vunpack.c.l.b16 %v3069
        %v3838 = vunpack.c.l.b16 %v3070
        %v3839 = vunpack.c.l.b16 %v3071
        %v3840 = vunpack.c.l.b16 %v3072
        %v3841 = vunpack.c.l.b16 %v3073
        %v3842 = vunpack.c.l.b16 %v3074
        %v3843 = vunpack.c.l.b16 %v3075
        %v3844 = vunpack.c.l.b16 %v3076
        %v3845 = vunpack.c.l.b16 %v3077
        %v3846 = vunpack.c.l.b16 %v3078
        %v3847 = vpack.c.b16 %v3784, %v3783
        %v3848 = vpack.c.b16 %v3786, %v3785
        %v3849 = vpack.c.b16 %v3788, %v3787
        %v3850 = vpack.c.b16 %v3790, %v3789
        %v3851 = vpack.c.b16 %v3792, %v3791
        %v3852 = vpack.c.b16 %v3794, %v3793
        %v3853 = vpack.c.b16 %v3796, %v3795
        %v3854 = vpack.c.b16 %v3798, %v3797
        %v3855 = vpack.c.b16 %v3800, %v3799
        %v3856 = vpack.c.b16 %v3802, %v3801
        %v3857 = vpack.c.b16 %v3804, %v3803
        %v3858 = vpack.c.b16 %v3806, %v3805
        %v3859 = vpack.c.b16 %v3808, %v3807
        %v3860 = vpack.c.b16 %v3810, %v3809
        %v3861 = vpack.c.b16 %v3812, %v3811
        %v3862 = vpack.c.b16 %v3814, %v3813
        %v3863 = vpack.c.b16 %v3816, %v3815
        %v3864 = vpack.c.b16 %v3818, %v3817
        %v3865 = vpack.c.b16 %v3820, %v3819
        %v3866 = vpack.c.b16 %v3822, %v3821
        %v3867 = vpack.c.b16 %v3824, %v3823
        %v3868 = vpack.c.b16 %v3826, %v3825
        %v3869 = vpack.c.b16 %v3828, %v3827
        %v3870 = vpack.c.b16 %v3830, %v3829
        %v3871 = vpack.c.b16 %v3832, %v3831
        %v3872 = vpack.c.b16 %v3834, %v3833
        %v3873 = vpack.c.b16 %v3836, %v3835
        %v3874 = vpack.c.b16 %v3838, %v3837
        %v3875 = vpack.c.b16 %v3840, %v3839
        %v3876 = vpack.c.b16 %v3842, %v3841
        %v3877 = vpack.c.b16 %v3844, %v3843
        %v3878 = vpack.c.b16 %v3846, %v3845
        %3911 = vmatprep.subr.bf16.mxu0 0
        %3912 = vmatpush1.bf16.msra.mxu0 %v3847
        %3913 = vmatprep.subr.bf16.mxu0 0
        %3914 = vmatpush1.bf16.msra.mxu0 %v3848
        %3915 = vmatprep.subr.bf16.mxu0 0
        %3916 = vmatpush1.bf16.msra.mxu0 %v3849
        %3917 = vmatprep.subr.bf16.mxu0 0
        %3918 = vmatpush1.bf16.msra.mxu0 %v3850
        %3919 = vmatprep.subr.bf16.mxu0 0
        %3920 = vmatpush1.bf16.msra.mxu0 %v3851
        %3921 = vmatprep.subr.bf16.mxu0 0
        %3922 = vmatpush1.bf16.msra.mxu0 %v3852
        %3923 = vmatprep.subr.bf16.mxu0 0
        %3924 = vmatpush1.bf16.msra.mxu0 %v3853
        %3925 = vmatprep.subr.bf16.mxu0 0
        %3926 = vmatpush1.bf16.msra.mxu0 %v3854
        %3927 = vmatprep.subr.bf16.mxu0 0
        %3928 = vmatpush1.bf16.msra.mxu0 %v3855
        %3929 = vmatprep.subr.bf16.mxu0 0
        %3930 = vmatpush1.bf16.msra.mxu0 %v3856
        %3931 = vmatprep.subr.bf16.mxu0 0
        %3932 = vmatpush1.bf16.msra.mxu0 %v3857
        %3933 = vmatprep.subr.bf16.mxu0 0
        %3934 = vmatpush1.bf16.msra.mxu0 %v3858
        %3935 = vmatprep.subr.bf16.mxu0 0
        %3936 = vmatpush1.bf16.msra.mxu0 %v3859
        %3937 = vmatprep.subr.bf16.mxu0 0
        %3938 = vmatpush1.bf16.msra.mxu0 %v3860
        %3939 = vmatprep.subr.bf16.mxu0 0
        %3940 = vmatpush1.bf16.msra.mxu0 %v3861
        %3941 = vmatprep.subr.bf16.mxu0 0
        %3942 = vmatpush1.bf16.msra.mxu0 %v3862
        %3943 = vmatprep.mubr.bf16.mxu0 %v3012
        %3944 = vmatmul.mubr.bf16.gmra.mrb[0].mxu0 %v3011
        %v3945 = vpop.f32.mrb[0].mxu0
        %v3946 = vadd.f32 %v3714, %v3945
        %v3947 = vpop.f32.mrb[0].mxu0
        %v3948 = vpop.f32.mrb[0].mxu0
        %v3949 = vpop.f32.mrb[0].mxu0
        %3950 = vdwg.mxu0
        %3951 = vmatprep.subr.bf16.mxu0 0
        %3952 = vmatpush1.bf16.msra.mxu0 %v3863
        %3953 = vmatprep.subr.bf16.mxu0 0
        %3954 = vmatpush1.bf16.msra.mxu0 %v3864
        %3955 = vmatprep.subr.bf16.mxu0 0
        %3956 = vmatpush1.bf16.msra.mxu0 %v3865
        %3957 = vmatprep.subr.bf16.mxu0 0
        %3958 = vmatpush1.bf16.msra.mxu0 %v3866
        %3959 = vmatprep.subr.bf16.mxu0 0
        %3960 = vmatpush1.bf16.msra.mxu0 %v3867
        %3961 = vmatprep.subr.bf16.mxu0 0
        %3962 = vmatpush1.bf16.msra.mxu0 %v3868
        %3963 = vmatprep.subr.bf16.mxu0 0
        %3964 = vmatpush1.bf16.msra.mxu0 %v3869
        %3965 = vmatprep.subr.bf16.mxu0 0
        %3966 = vmatpush1.bf16.msra.mxu0 %v3870
        %3967 = vmatprep.subr.bf16.mxu0 0
        %3968 = vmatpush1.bf16.msra.mxu0 %v3871
        %3969 = vmatprep.subr.bf16.mxu0 0
        %3970 = vmatpush1.bf16.msra.mxu0 %v3872
        %3971 = vmatprep.subr.bf16.mxu0 0
        %3972 = vmatpush1.bf16.msra.mxu0 %v3873
        %3973 = vmatprep.subr.bf16.mxu0 0
        %3974 = vmatpush1.bf16.msra.mxu0 %v3874
        %3975 = vmatprep.subr.bf16.mxu0 0
        %3976 = vmatpush1.bf16.msra.mxu0 %v3875
        %3977 = vmatprep.subr.bf16.mxu0 0
        %3978 = vmatpush1.bf16.msra.mxu0 %v3876
        %3979 = vmatprep.subr.bf16.mxu0 0
        %3980 = vmatpush1.bf16.msra.mxu0 %v3877
        %3981 = vmatprep.subr.bf16.mxu0 0
        %3982 = vmatpush1.bf16.msra.mxu0 %v3878
        %3983 = vmatprep.mubr.bf16.mxu0 %v3014
        %3984 = vmatmul.mubr.bf16.gmra.mrb[0].mxu0 %v3013
        %v3985 = vpop.f32.mrb[0].mxu0
        %v3986 = vadd.f32 %v3946, %v3985
        %v3987 = vpop.f32.mrb[0].mxu0
        %v3988 = vpop.f32.mrb[0].mxu0
        %v3989 = vpop.f32.mrb[0].mxu0
        %3990 = vdwg.mxu0
        %v3991 = vld [vmem:[%s766 + $0x20] sm:$0xff]
        %v3992 = vld [vmem:[%s766 + $0x28] sm:$0xff]
        %v3993 = vld [vmem:[%s766 + $0x60] sm:$0xff]
        %v3994 = vld [vmem:[%s766 + $0x68] sm:$0xff]
        %v3995 = vld [vmem:[%s766 + $0xa0] sm:$0xff]
        %v3996 = vld [vmem:[%s766 + $0xa8] sm:$0xff]
        %v3997 = vld [vmem:[%s766 + $0xe0] sm:$0xff]
        %v3998 = vld [vmem:[%s766 + $0xe8] sm:$0xff]
        %v3999 = vld [vmem:[%s766 + $0x120] sm:$0xff]
        %v4000 = vld [vmem:[%s766 + $0x128] sm:$0xff]
        %v4001 = vld [vmem:[%s766 + $0x160] sm:$0xff]
        %v4002 = vld [vmem:[%s766 + $0x168] sm:$0xff]
        %v4003 = vld [vmem:[%s766 + $0x1a0] sm:$0xff]
        %v4004 = vld [vmem:[%s766 + $0x1a8] sm:$0xff]
        %v4005 = vld [vmem:[%s766 + $0x1e0] sm:$0xff]
        %v4006 = vld [vmem:[%s766 + $0x1e8] sm:$0xff]
        %v4007 = vld [vmem:[%s766 + $0x220] sm:$0xff]
        %v4008 = vld [vmem:[%s766 + $0x228] sm:$0xff]
        %v4009 = vld [vmem:[%s766 + $0x260] sm:$0xff]
        %v4010 = vld [vmem:[%s766 + $0x268] sm:$0xff]
        %v4011 = vld [vmem:[%s766 + $0x2a0] sm:$0xff]
        %v4012 = vld [vmem:[%s766 + $0x2a8] sm:$0xff]
        %v4013 = vld [vmem:[%s766 + $0x2e0] sm:$0xff]
        %v4014 = vld [vmem:[%s766 + $0x2e8] sm:$0xff]
        %v4015 = vld [vmem:[%s766 + $0x320] sm:$0xff]
        %v4016 = vld [vmem:[%s766 + $0x328] sm:$0xff]
        %v4017 = vld [vmem:[%s766 + $0x360] sm:$0xff]
        %v4018 = vld [vmem:[%s766 + $0x368] sm:$0xff]
        %v4019 = vld [vmem:[%s766 + $0x3a0] sm:$0xff]
        %v4020 = vld [vmem:[%s766 + $0x3a8] sm:$0xff]
        %v4021 = vld [vmem:[%s766 + $0x3e0] sm:$0xff]
        %v4022 = vld [vmem:[%s766 + $0x3e8] sm:$0xff]
        %v4023 = vld [vmem:[%s775 + $0x8] sm:$0xf]
        %v4025 = vlaneseq
        %v4026 = vshrl.u32 %v4025, 7
        %v4027 = vsub.s32 0, %v4026
        %v4028 = vrot.slane %v4023, %v4027
        %v4029 = vlaneseq
        %v4030 = vshrl.u32 %v4029, 7
        %v4031 = vsub.s32 1, %v4030
        %v4032 = vrot.slane %v4023, %v4031
        %v4033 = vlaneseq
        %v4034 = vshrl.u32 %v4033, 7
        %v4035 = vsub.s32 2, %v4034
        %v4036 = vrot.slane %v4023, %v4035
        %v4037 = vlaneseq
        %v4038 = vshrl.u32 %v4037, 7
        %v4039 = vsub.s32 3, %v4038
        %v4040 = vrot.slane %v4023, %v4039
        %v4077 = vunpack.c.l.b16 %v3991
        %v4078 = vunpack.c.h.b16 %v3991
        %v4079 = vunpack.c.l.b16 %v3992
        %v4080 = vunpack.c.h.b16 %v3992
        %v4081 = vunpack.c.l.b16 %v3993
        %v4082 = vunpack.c.h.b16 %v3993
        %v4083 = vunpack.c.l.b16 %v3994
        %v4084 = vunpack.c.h.b16 %v3994
        %v4085 = vunpack.c.l.b16 %v3995
        %v4086 = vunpack.c.h.b16 %v3995
        %v4087 = vunpack.c.l.b16 %v3996
        %v4088 = vunpack.c.h.b16 %v3996
        %v4089 = vunpack.c.l.b16 %v3997
        %v4090 = vunpack.c.h.b16 %v3997
        %v4091 = vunpack.c.l.b16 %v3998
        %v4092 = vunpack.c.h.b16 %v3998
        %v4093 = vunpack.c.l.b16 %v3999
        %v4094 = vunpack.c.h.b16 %v3999
        %v4095 = vunpack.c.l.b16 %v4000
        %v4096 = vunpack.c.h.b16 %v4000
        %v4097 = vunpack.c.l.b16 %v4001
        %v4098 = vunpack.c.h.b16 %v4001
        %v4099 = vunpack.c.l.b16 %v4002
        %v4100 = vunpack.c.h.b16 %v4002
        %v4101 = vunpack.c.l.b16 %v4003
        %v4102 = vunpack.c.h.b16 %v4003
        %v4103 = vunpack.c.l.b16 %v4004
        %v4104 = vunpack.c.h.b16 %v4004
        %v4105 = vunpack.c.l.b16 %v4005
        %v4106 = vunpack.c.h.b16 %v4005
        %v4107 = vunpack.c.l.b16 %v4006
        %v4108 = vunpack.c.h.b16 %v4006
        %v4109 = vunpack.c.l.b16 %v4007
        %v4110 = vunpack.c.h.b16 %v4007
        %v4111 = vunpack.c.l.b16 %v4008
        %v4112 = vunpack.c.h.b16 %v4008
        %v4113 = vunpack.c.l.b16 %v4009
        %v4114 = vunpack.c.h.b16 %v4009
        %v4115 = vunpack.c.l.b16 %v4010
        %v4116 = vunpack.c.h.b16 %v4010
        %v4117 = vunpack.c.l.b16 %v4011
        %v4118 = vunpack.c.h.b16 %v4011
        %v4119 = vunpack.c.l.b16 %v4012
        %v4120 = vunpack.c.h.b16 %v4012
        %v4121 = vunpack.c.l.b16 %v4013
        %v4122 = vunpack.c.h.b16 %v4013
        %v4123 = vunpack.c.l.b16 %v4014
        %v4124 = vunpack.c.h.b16 %v4014
        %v4125 = vunpack.c.l.b16 %v4015
        %v4126 = vunpack.c.h.b16 %v4015
        %v4127 = vunpack.c.l.b16 %v4016
        %v4128 = vunpack.c.h.b16 %v4016
        %v4129 = vunpack.c.l.b16 %v4017
        %v4130 = vunpack.c.h.b16 %v4017
        %v4131 = vunpack.c.l.b16 %v4018
        %v4132 = vunpack.c.h.b16 %v4018
        %v4133 = vunpack.c.l.b16 %v4019
        %v4134 = vunpack.c.h.b16 %v4019
        %v4135 = vunpack.c.l.b16 %v4020
        %v4136 = vunpack.c.h.b16 %v4020
        %v4137 = vunpack.c.l.b16 %v4021
        %v4138 = vunpack.c.h.b16 %v4021
        %v4139 = vunpack.c.l.b16 %v4022
        %v4140 = vunpack.c.h.b16 %v4022
        %v4141 = vpack.c.b16 %v4081, %v4077
        %v4142 = vpack.c.b16 %v4082, %v4078
        %v4143 = vpack.c.b16 %v4083, %v4079
        %v4144 = vpack.c.b16 %v4084, %v4080
        %v4145 = vpack.c.b16 %v4089, %v4085
        %v4146 = vpack.c.b16 %v4090, %v4086
        %v4147 = vpack.c.b16 %v4091, %v4087
        %v4148 = vpack.c.b16 %v4092, %v4088
        %v4149 = vpack.c.b16 %v4097, %v4093
        %v4150 = vpack.c.b16 %v4098, %v4094
        %v4151 = vpack.c.b16 %v4099, %v4095
        %v4152 = vpack.c.b16 %v4100, %v4096
        %v4153 = vpack.c.b16 %v4105, %v4101
        %v4154 = vpack.c.b16 %v4106, %v4102
        %v4155 = vpack.c.b16 %v4107, %v4103
        %v4156 = vpack.c.b16 %v4108, %v4104
        %v4157 = vpack.c.b16 %v4113, %v4109
        %v4158 = vpack.c.b16 %v4114, %v4110
        %v4159 = vpack.c.b16 %v4115, %v4111
        %v4160 = vpack.c.b16 %v4116, %v4112
        %v4161 = vpack.c.b16 %v4121, %v4117
        %v4162 = vpack.c.b16 %v4122, %v4118
        %v4163 = vpack.c.b16 %v4123, %v4119
        %v4164 = vpack.c.b16 %v4124, %v4120
        %v4165 = vpack.c.b16 %v4129, %v4125
        %v4166 = vpack.c.b16 %v4130, %v4126
        %v4167 = vpack.c.b16 %v4131, %v4127
        %v4168 = vpack.c.b16 %v4132, %v4128
        %v4169 = vpack.c.b16 %v4137, %v4133
        %v4170 = vpack.c.b16 %v4138, %v4134
        %v4171 = vpack.c.b16 %v4139, %v4135
        %v4172 = vpack.c.b16 %v4140, %v4136
        %4205 = vmatprep.subr.bf16.mxu0 %v4142
        %4206 = vmatpush1.bf16.msra.mxu0 %v4141
        %4207 = vmatprep.subr.bf16.mxu0 %v4146
        %4208 = vmatpush1.bf16.msra.mxu0 %v4145
        %4209 = vmatprep.subr.bf16.mxu0 %v4150
        %4210 = vmatpush1.bf16.msra.mxu0 %v4149
        %4211 = vmatprep.subr.bf16.mxu0 %v4154
        %4212 = vmatpush1.bf16.msra.mxu0 %v4153
        %4213 = vmatprep.subr.bf16.mxu0 %v4158
        %4214 = vmatpush1.bf16.msra.mxu0 %v4157
        %4215 = vmatprep.subr.bf16.mxu0 %v4162
        %4216 = vmatpush1.bf16.msra.mxu0 %v4161
        %4217 = vmatprep.subr.bf16.mxu0 %v4166
        %4218 = vmatpush1.bf16.msra.mxu0 %v4165
        %4219 = vmatprep.subr.bf16.mxu0 %v4170
        %4220 = vmatpush1.bf16.msra.mxu0 %v4169
        %4221 = vmatprep.subr.bf16.mxu0 0
        %4222 = vmatpush1.bf16.msra.mxu0 0
        %4223 = vmatprep.subr.bf16.mxu0 0
        %4224 = vmatpush1.bf16.msra.mxu0 0
        %4225 = vmatprep.subr.bf16.mxu0 0
        %4226 = vmatpush1.bf16.msra.mxu0 0
        %4227 = vmatprep.subr.bf16.mxu0 0
        %4228 = vmatpush1.bf16.msra.mxu0 0
        %4229 = vmatprep.subr.bf16.mxu0 0
        %4230 = vmatpush1.bf16.msra.mxu0 0
        %4231 = vmatprep.subr.bf16.mxu0 0
        %4232 = vmatpush1.bf16.msra.mxu0 0
        %4233 = vmatprep.subr.bf16.mxu0 0
        %4234 = vmatpush1.bf16.msra.mxu0 0
        %4235 = vmatprep.subr.bf16.mxu0 0
        %4236 = vmatpush1.bf16.msra.mxu0 0
        %4237 = vmatprep.mubr.bf16.mxu0 0
        %4238 = vmatmul.mubr.bf16.gmra.mrb[0].mxu0 %v2710
        %v4239 = vpop.f32.mrb[0].mxu0
        %v4240 = vadd.f32 %v4028, %v4239
        %v4241 = vpop.f32.mrb[0].mxu0
        %v4242 = vadd.f32 %v4032, %v4241
        %v4243 = vpop.f32.mrb[0].mxu0
        %v4244 = vpop.f32.mrb[0].mxu0
        %4245 = vdwg.mxu0
        %4246 = vmatprep.subr.bf16.mxu0 %v4144
        %4247 = vmatpush1.bf16.msra.mxu0 %v4143
        %4248 = vmatprep.subr.bf16.mxu0 %v4148
        %4249 = vmatpush1.bf16.msra.mxu0 %v4147
        %4250 = vmatprep.subr.bf16.mxu0 %v4152
        %4251 = vmatpush1.bf16.msra.mxu0 %v4151
        %4252 = vmatprep.subr.bf16.mxu0 %v4156
        %4253 = vmatpush1.bf16.msra.mxu0 %v4155
        %4254 = vmatprep.subr.bf16.mxu0 %v4160
        %4255 = vmatpush1.bf16.msra.mxu0 %v4159
        %4256 = vmatprep.subr.bf16.mxu0 %v4164
        %4257 = vmatpush1.bf16.msra.mxu0 %v4163
        %4258 = vmatprep.subr.bf16.mxu0 %v4168
        %4259 = vmatpush1.bf16.msra.mxu0 %v4167
        %4260 = vmatprep.subr.bf16.mxu0 %v4172
        %4261 = vmatpush1.bf16.msra.mxu0 %v4171
        %4262 = vmatprep.subr.bf16.mxu0 0
        %4263 = vmatpush1.bf16.msra.mxu0 0
        %4264 = vmatprep.subr.bf16.mxu0 0
        %4265 = vmatpush1.bf16.msra.mxu0 0
        %4266 = vmatprep.subr.bf16.mxu0 0
        %4267 = vmatpush1.bf16.msra.mxu0 0
        %4268 = vmatprep.subr.bf16.mxu0 0
        %4269 = vmatpush1.bf16.msra.mxu0 0
        %4270 = vmatprep.subr.bf16.mxu0 0
        %4271 = vmatpush1.bf16.msra.mxu0 0
        %4272 = vmatprep.subr.bf16.mxu0 0
        %4273 = vmatpush1.bf16.msra.mxu0 0
        %4274 = vmatprep.subr.bf16.mxu0 0
        %4275 = vmatpush1.bf16.msra.mxu0 0
        %4276 = vmatprep.subr.bf16.mxu0 0
        %4277 = vmatpush1.bf16.msra.mxu0 0
        %4278 = vmatprep.mubr.bf16.mxu0 0
        %4279 = vmatmul.mubr.bf16.gmra.mrb[0].mxu0 %v2710
        %v4280 = vpop.f32.mrb[0].mxu0
        %v4281 = vadd.f32 %v4036, %v4280
        %v4282 = vpop.f32.mrb[0].mxu0
        %v4283 = vadd.f32 %v4040, %v4282
        %v4284 = vpop.f32.mrb[0].mxu0
        %v4285 = vpop.f32.mrb[0].mxu0
        %4286 = vdwg.mxu0
        %v4287 = vmax.f32 %v4240, 0.0
        %v4288 = vmax.f32 %v4242, 0.0
        %v4289 = vmax.f32 %v4281, 0.0
        %v4290 = vmax.f32 %v4283, 0.0
        %v4291 = vpack.c.bf16 %v4287, %v4287
        %v4292 = vpack.c.bf16 %v4288, %v4288
        %v4293 = vpack.c.bf16 %v4289, %v4289
        %v4294 = vpack.c.bf16 %v4290, %v4290
        %v4295 = vld [vmem:[%s784 + $0x200] sm:$0xf]
        %v4296 = vld [vmem:[%s784 + $0x204] sm:$0xf]
        %v4297 = vld [vmem:[%s784 + $0x208] sm:$0xf]
        %v4298 = vld [vmem:[%s784 + $0x20c] sm:$0xf]
        %v4299 = vld [vmem:[%s784 + $0x210] sm:$0xf]
        %v4300 = vld [vmem:[%s784 + $0x214] sm:$0xf]
        %v4301 = vld [vmem:[%s784 + $0x218] sm:$0xf]
        %v4302 = vld [vmem:[%s784 + $0x21c] sm:$0xf]
        %v4303 = vld [vmem:[%s784 + $0x220] sm:$0xf]
        %v4304 = vld [vmem:[%s784 + $0x224] sm:$0xf]
        %v4305 = vld [vmem:[%s784 + $0x228] sm:$0xf]
        %v4306 = vld [vmem:[%s784 + $0x22c] sm:$0xf]
        %v4307 = vld [vmem:[%s784 + $0x230] sm:$0xf]
        %v4308 = vld [vmem:[%s784 + $0x234] sm:$0xf]
        %v4309 = vld [vmem:[%s784 + $0x238] sm:$0xf]
        %v4310 = vld [vmem:[%s784 + $0x23c] sm:$0xf]
        %v4311 = vld [vmem:[%s784 + $0x240] sm:$0xf]
        %v4312 = vld [vmem:[%s784 + $0x244] sm:$0xf]
        %v4313 = vld [vmem:[%s784 + $0x248] sm:$0xf]
        %v4314 = vld [vmem:[%s784 + $0x24c] sm:$0xf]
        %v4315 = vld [vmem:[%s784 + $0x250] sm:$0xf]
        %v4316 = vld [vmem:[%s784 + $0x254] sm:$0xf]
        %v4317 = vld [vmem:[%s784 + $0x258] sm:$0xf]
        %v4318 = vld [vmem:[%s784 + $0x25c] sm:$0xf]
        %v4319 = vld [vmem:[%s784 + $0x260] sm:$0xf]
        %v4320 = vld [vmem:[%s784 + $0x264] sm:$0xf]
        %v4321 = vld [vmem:[%s784 + $0x268] sm:$0xf]
        %v4322 = vld [vmem:[%s784 + $0x26c] sm:$0xf]
        %v4323 = vld [vmem:[%s784 + $0x270] sm:$0xf]
        %v4324 = vld [vmem:[%s784 + $0x274] sm:$0xf]
        %v4325 = vld [vmem:[%s784 + $0x278] sm:$0xf]
        %v4326 = vld [vmem:[%s784 + $0x27c] sm:$0xf]
        %v4327 = vld [vmem:[%s784 + $0x280] sm:$0xf]
        %v4328 = vld [vmem:[%s784 + $0x284] sm:$0xf]
        %v4329 = vld [vmem:[%s784 + $0x288] sm:$0xf]
        %v4330 = vld [vmem:[%s784 + $0x28c] sm:$0xf]
        %v4331 = vld [vmem:[%s784 + $0x290] sm:$0xf]
        %v4332 = vld [vmem:[%s784 + $0x294] sm:$0xf]
        %v4333 = vld [vmem:[%s784 + $0x298] sm:$0xf]
        %v4334 = vld [vmem:[%s784 + $0x29c] sm:$0xf]
        %v4335 = vld [vmem:[%s784 + $0x2a0] sm:$0xf]
        %v4336 = vld [vmem:[%s784 + $0x2a4] sm:$0xf]
        %v4337 = vld [vmem:[%s784 + $0x2a8] sm:$0xf]
        %v4338 = vld [vmem:[%s784 + $0x2ac] sm:$0xf]
        %v4339 = vld [vmem:[%s784 + $0x2b0] sm:$0xf]
        %v4340 = vld [vmem:[%s784 + $0x2b4] sm:$0xf]
        %v4341 = vld [vmem:[%s784 + $0x2b8] sm:$0xf]
        %v4342 = vld [vmem:[%s784 + $0x2bc] sm:$0xf]
        %v4343 = vld [vmem:[%s784 + $0x2c0] sm:$0xf]
        %v4344 = vld [vmem:[%s784 + $0x2c4] sm:$0xf]
        %v4345 = vld [vmem:[%s784 + $0x2c8] sm:$0xf]
        %v4346 = vld [vmem:[%s784 + $0x2cc] sm:$0xf]
        %v4347 = vld [vmem:[%s784 + $0x2d0] sm:$0xf]
        %v4348 = vld [vmem:[%s784 + $0x2d4] sm:$0xf]
        %v4349 = vld [vmem:[%s784 + $0x2d8] sm:$0xf]
        %v4350 = vld [vmem:[%s784 + $0x2dc] sm:$0xf]
        %v4351 = vld [vmem:[%s784 + $0x2e0] sm:$0xf]
        %v4352 = vld [vmem:[%s784 + $0x2e4] sm:$0xf]
        %v4353 = vld [vmem:[%s784 + $0x2e8] sm:$0xf]
        %v4354 = vld [vmem:[%s784 + $0x2ec] sm:$0xf]
        %v4355 = vld [vmem:[%s784 + $0x2f0] sm:$0xf]
        %v4356 = vld [vmem:[%s784 + $0x2f4] sm:$0xf]
        %v4357 = vld [vmem:[%s784 + $0x2f8] sm:$0xf]
        %v4358 = vld [vmem:[%s784 + $0x2fc] sm:$0xf]
        %v4423 = vunpack.c.l.b16 %v4295
        %v4424 = vunpack.c.l.b16 %v4296
        %v4425 = vunpack.c.l.b16 %v4297
        %v4426 = vunpack.c.l.b16 %v4298
        %v4427 = vunpack.c.l.b16 %v4299
        %v4428 = vunpack.c.l.b16 %v4300
        %v4429 = vunpack.c.l.b16 %v4301
        %v4430 = vunpack.c.l.b16 %v4302
        %v4431 = vunpack.c.l.b16 %v4303
        %v4432 = vunpack.c.l.b16 %v4304
        %v4433 = vunpack.c.l.b16 %v4305
        %v4434 = vunpack.c.l.b16 %v4306
        %v4435 = vunpack.c.l.b16 %v4307
        %v4436 = vunpack.c.l.b16 %v4308
        %v4437 = vunpack.c.l.b16 %v4309
        %v4438 = vunpack.c.l.b16 %v4310
        %v4439 = vunpack.c.l.b16 %v4311
        %v4440 = vunpack.c.l.b16 %v4312
        %v4441 = vunpack.c.l.b16 %v4313
        %v4442 = vunpack.c.l.b16 %v4314
        %v4443 = vunpack.c.l.b16 %v4315
        %v4444 = vunpack.c.l.b16 %v4316
        %v4445 = vunpack.c.l.b16 %v4317
        %v4446 = vunpack.c.l.b16 %v4318
        %v4447 = vunpack.c.l.b16 %v4319
        %v4448 = vunpack.c.l.b16 %v4320
        %v4449 = vunpack.c.l.b16 %v4321
        %v4450 = vunpack.c.l.b16 %v4322
        %v4451 = vunpack.c.l.b16 %v4323
        %v4452 = vunpack.c.l.b16 %v4324
        %v4453 = vunpack.c.l.b16 %v4325
        %v4454 = vunpack.c.l.b16 %v4326
        %v4455 = vunpack.c.l.b16 %v4327
        %v4456 = vunpack.c.l.b16 %v4328
        %v4457 = vunpack.c.l.b16 %v4329
        %v4458 = vunpack.c.l.b16 %v4330
        %v4459 = vunpack.c.l.b16 %v4331
        %v4460 = vunpack.c.l.b16 %v4332
        %v4461 = vunpack.c.l.b16 %v4333
        %v4462 = vunpack.c.l.b16 %v4334
        %v4463 = vunpack.c.l.b16 %v4335
        %v4464 = vunpack.c.l.b16 %v4336
        %v4465 = vunpack.c.l.b16 %v4337
        %v4466 = vunpack.c.l.b16 %v4338
        %v4467 = vunpack.c.l.b16 %v4339
        %v4468 = vunpack.c.l.b16 %v4340
        %v4469 = vunpack.c.l.b16 %v4341
        %v4470 = vunpack.c.l.b16 %v4342
        %v4471 = vunpack.c.l.b16 %v4343
        %v4472 = vunpack.c.l.b16 %v4344
        %v4473 = vunpack.c.l.b16 %v4345
        %v4474 = vunpack.c.l.b16 %v4346
        %v4475 = vunpack.c.l.b16 %v4347
        %v4476 = vunpack.c.l.b16 %v4348
        %v4477 = vunpack.c.l.b16 %v4349
        %v4478 = vunpack.c.l.b16 %v4350
        %v4479 = vunpack.c.l.b16 %v4351
        %v4480 = vunpack.c.l.b16 %v4352
        %v4481 = vunpack.c.l.b16 %v4353
        %v4482 = vunpack.c.l.b16 %v4354
        %v4483 = vunpack.c.l.b16 %v4355
        %v4484 = vunpack.c.l.b16 %v4356
        %v4485 = vunpack.c.l.b16 %v4357
        %v4486 = vunpack.c.l.b16 %v4358
        %v4487 = vpack.c.b16 %v4424, %v4423
        %v4488 = vpack.c.b16 %v4426, %v4425
        %v4489 = vpack.c.b16 %v4428, %v4427
        %v4490 = vpack.c.b16 %v4430, %v4429
        %v4491 = vpack.c.b16 %v4432, %v4431
        %v4492 = vpack.c.b16 %v4434, %v4433
        %v4493 = vpack.c.b16 %v4436, %v4435
        %v4494 = vpack.c.b16 %v4438, %v4437
        %v4495 = vpack.c.b16 %v4440, %v4439
        %v4496 = vpack.c.b16 %v4442, %v4441
        %v4497 = vpack.c.b16 %v4444, %v4443
        %v4498 = vpack.c.b16 %v4446, %v4445
        %v4499 = vpack.c.b16 %v4448, %v4447
        %v4500 = vpack.c.b16 %v4450, %v4449
        %v4501 = vpack.c.b16 %v4452, %v4451
        %v4502 = vpack.c.b16 %v4454, %v4453
        %v4503 = vpack.c.b16 %v4456, %v4455
        %v4504 = vpack.c.b16 %v4458, %v4457
        %v4505 = vpack.c.b16 %v4460, %v4459
        %v4506 = vpack.c.b16 %v4462, %v4461
        %v4507 = vpack.c.b16 %v4464, %v4463
        %v4508 = vpack.c.b16 %v4466, %v4465
        %v4509 = vpack.c.b16 %v4468, %v4467
        %v4510 = vpack.c.b16 %v4470, %v4469
        %v4511 = vpack.c.b16 %v4472, %v4471
        %v4512 = vpack.c.b16 %v4474, %v4473
        %v4513 = vpack.c.b16 %v4476, %v4475
        %v4514 = vpack.c.b16 %v4478, %v4477
        %v4515 = vpack.c.b16 %v4480, %v4479
        %v4516 = vpack.c.b16 %v4482, %v4481
        %v4517 = vpack.c.b16 %v4484, %v4483
        %v4518 = vpack.c.b16 %v4486, %v4485
        %4551 = vmatprep.subr.bf16.mxu0 0
        %4552 = vmatpush1.bf16.msra.mxu0 %v4487
        %4553 = vmatprep.subr.bf16.mxu0 0
        %4554 = vmatpush1.bf16.msra.mxu0 %v4488
        %4555 = vmatprep.subr.bf16.mxu0 0
        %4556 = vmatpush1.bf16.msra.mxu0 %v4489
        %4557 = vmatprep.subr.bf16.mxu0 0
        %4558 = vmatpush1.bf16.msra.mxu0 %v4490
        %4559 = vmatprep.subr.bf16.mxu0 0
        %4560 = vmatpush1.bf16.msra.mxu0 %v4491
        %4561 = vmatprep.subr.bf16.mxu0 0
        %4562 = vmatpush1.bf16.msra.mxu0 %v4492
        %4563 = vmatprep.subr.bf16.mxu0 0
        %4564 = vmatpush1.bf16.msra.mxu0 %v4493
        %4565 = vmatprep.subr.bf16.mxu0 0
        %4566 = vmatpush1.bf16.msra.mxu0 %v4494
        %4567 = vmatprep.subr.bf16.mxu0 0
        %4568 = vmatpush1.bf16.msra.mxu0 %v4495
        %4569 = vmatprep.subr.bf16.mxu0 0
        %4570 = vmatpush1.bf16.msra.mxu0 %v4496
        %4571 = vmatprep.subr.bf16.mxu0 0
        %4572 = vmatpush1.bf16.msra.mxu0 %v4497
        %4573 = vmatprep.subr.bf16.mxu0 0
        %4574 = vmatpush1.bf16.msra.mxu0 %v4498
        %4575 = vmatprep.subr.bf16.mxu0 0
        %4576 = vmatpush1.bf16.msra.mxu0 %v4499
        %4577 = vmatprep.subr.bf16.mxu0 0
        %4578 = vmatpush1.bf16.msra.mxu0 %v4500
        %4579 = vmatprep.subr.bf16.mxu0 0
        %4580 = vmatpush1.bf16.msra.mxu0 %v4501
        %4581 = vmatprep.subr.bf16.mxu0 0
        %4582 = vmatpush1.bf16.msra.mxu0 %v4502
        %4583 = vmatprep.mubr.bf16.mxu0 %v4292
        %4584 = vmatmul.mubr.bf16.gmra.mrb[0].mxu0 %v4291
        %v4585 = vpop.f32.mrb[0].mxu0
        %v4586 = vadd.f32 0.0, %v4585
        %v4587 = vpop.f32.mrb[0].mxu0
        %v4588 = vpop.f32.mrb[0].mxu0
        %v4589 = vpop.f32.mrb[0].mxu0
        %4590 = vdwg.mxu0
        %4591 = vmatprep.subr.bf16.mxu0 0
        %4592 = vmatpush1.bf16.msra.mxu0 %v4503
        %4593 = vmatprep.subr.bf16.mxu0 0
        %4594 = vmatpush1.bf16.msra.mxu0 %v4504
        %4595 = vmatprep.subr.bf16.mxu0 0
        %4596 = vmatpush1.bf16.msra.mxu0 %v4505
        %4597 = vmatprep.subr.bf16.mxu0 0
        %4598 = vmatpush1.bf16.msra.mxu0 %v4506
        %4599 = vmatprep.subr.bf16.mxu0 0
        %4600 = vmatpush1.bf16.msra.mxu0 %v4507
        %4601 = vmatprep.subr.bf16.mxu0 0
        %4602 = vmatpush1.bf16.msra.mxu0 %v4508
        %4603 = vmatprep.subr.bf16.mxu0 0
        %4604 = vmatpush1.bf16.msra.mxu0 %v4509
        %4605 = vmatprep.subr.bf16.mxu0 0
        %4606 = vmatpush1.bf16.msra.mxu0 %v4510
        %4607 = vmatprep.subr.bf16.mxu0 0
        %4608 = vmatpush1.bf16.msra.mxu0 %v4511
        %4609 = vmatprep.subr.bf16.mxu0 0
        %4610 = vmatpush1.bf16.msra.mxu0 %v4512
        %4611 = vmatprep.subr.bf16.mxu0 0
        %4612 = vmatpush1.bf16.msra.mxu0 %v4513
        %4613 = vmatprep.subr.bf16.mxu0 0
        %4614 = vmatpush1.bf16.msra.mxu0 %v4514
        %4615 = vmatprep.subr.bf16.mxu0 0
        %4616 = vmatpush1.bf16.msra.mxu0 %v4515
        %4617 = vmatprep.subr.bf16.mxu0 0
        %4618 = vmatpush1.bf16.msra.mxu0 %v4516
        %4619 = vmatprep.subr.bf16.mxu0 0
        %4620 = vmatpush1.bf16.msra.mxu0 %v4517
        %4621 = vmatprep.subr.bf16.mxu0 0
        %4622 = vmatpush1.bf16.msra.mxu0 %v4518
        %4623 = vmatprep.mubr.bf16.mxu0 %v4294
        %4624 = vmatmul.mubr.bf16.gmra.mrb[0].mxu0 %v4293
        %v4625 = vpop.f32.mrb[0].mxu0
        %v4626 = vadd.f32 %v4586, %v4625
        %v4627 = vpop.f32.mrb[0].mxu0
        %v4628 = vpop.f32.mrb[0].mxu0
        %v4629 = vpop.f32.mrb[0].mxu0
        %4630 = vdwg.mxu0
        %v4631 = vadd.f32 %v3986, %v4626
        %v4632 = vld [vmem:[%s766 + $0x30] sm:$0xff]
        %v4633 = vld [vmem:[%s766 + $0x38] sm:$0xff]
        %v4634 = vld [vmem:[%s766 + $0x70] sm:$0xff]
        %v4635 = vld [vmem:[%s766 + $0x78] sm:$0xff]
        %v4636 = vld [vmem:[%s766 + $0xb0] sm:$0xff]
        %v4637 = vld [vmem:[%s766 + $0xb8] sm:$0xff]
        %v4638 = vld [vmem:[%s766 + $0xf0] sm:$0xff]
        %v4639 = vld [vmem:[%s766 + $0xf8] sm:$0xff]
        %v4640 = vld [vmem:[%s766 + $0x130] sm:$0xff]
        %v4641 = vld [vmem:[%s766 + $0x138] sm:$0xff]
        %v4642 = vld [vmem:[%s766 + $0x170] sm:$0xff]
        %v4643 = vld [vmem:[%s766 + $0x178] sm:$0xff]
        %v4644 = vld [vmem:[%s766 + $0x1b0] sm:$0xff]
        %v4645 = vld [vmem:[%s766 + $0x1b8] sm:$0xff]
        %v4646 = vld [vmem:[%s766 + $0x1f0] sm:$0xff]
        %v4647 = vld [vmem:[%s766 + $0x1f8] sm:$0xff]
        %v4648 = vld [vmem:[%s766 + $0x230] sm:$0xff]
        %v4649 = vld [vmem:[%s766 + $0x238] sm:$0xff]
        %v4650 = vld [vmem:[%s766 + $0x270] sm:$0xff]
        %v4651 = vld [vmem:[%s766 + $0x278] sm:$0xff]
        %v4652 = vld [vmem:[%s766 + $0x2b0] sm:$0xff]
        %v4653 = vld [vmem:[%s766 + $0x2b8] sm:$0xff]
        %v4654 = vld [vmem:[%s766 + $0x2f0] sm:$0xff]
        %v4655 = vld [vmem:[%s766 + $0x2f8] sm:$0xff]
        %v4656 = vld [vmem:[%s766 + $0x330] sm:$0xff]
        %v4657 = vld [vmem:[%s766 + $0x338] sm:$0xff]
        %v4658 = vld [vmem:[%s766 + $0x370] sm:$0xff]
        %v4659 = vld [vmem:[%s766 + $0x378] sm:$0xff]
        %v4660 = vld [vmem:[%s766 + $0x3b0] sm:$0xff]
        %v4661 = vld [vmem:[%s766 + $0x3b8] sm:$0xff]
        %v4662 = vld [vmem:[%s766 + $0x3f0] sm:$0xff]
        %v4663 = vld [vmem:[%s766 + $0x3f8] sm:$0xff]
        %v4664 = vld [vmem:[%s775 + $0xc] sm:$0xf]
        %v4666 = vlaneseq
        %v4667 = vshrl.u32 %v4666, 7
        %v4668 = vsub.s32 0, %v4667
        %v4669 = vrot.slane %v4664, %v4668
        %v4670 = vlaneseq
        %v4671 = vshrl.u32 %v4670, 7
        %v4672 = vsub.s32 1, %v4671
        %v4673 = vrot.slane %v4664, %v4672
        %v4674 = vlaneseq
        %v4675 = vshrl.u32 %v4674, 7
        %v4676 = vsub.s32 2, %v4675
        %v4677 = vrot.slane %v4664, %v4676
        %v4678 = vlaneseq
        %v4679 = vshrl.u32 %v4678, 7
        %v4680 = vsub.s32 3, %v4679
        %v4681 = vrot.slane %v4664, %v4680
        %v4718 = vunpack.c.l.b16 %v4632
        %v4719 = vunpack.c.h.b16 %v4632
        %v4720 = vunpack.c.l.b16 %v4633
        %v4721 = vunpack.c.h.b16 %v4633
        %v4722 = vunpack.c.l.b16 %v4634
        %v4723 = vunpack.c.h.b16 %v4634
        %v4724 = vunpack.c.l.b16 %v4635
        %v4725 = vunpack.c.h.b16 %v4635
        %v4726 = vunpack.c.l.b16 %v4636
        %v4727 = vunpack.c.h.b16 %v4636
        %v4728 = vunpack.c.l.b16 %v4637
        %v4729 = vunpack.c.h.b16 %v4637
        %v4730 = vunpack.c.l.b16 %v4638
        %v4731 = vunpack.c.h.b16 %v4638
        %v4732 = vunpack.c.l.b16 %v4639
        %v4733 = vunpack.c.h.b16 %v4639
        %v4734 = vunpack.c.l.b16 %v4640
        %v4735 = vunpack.c.h.b16 %v4640
        %v4736 = vunpack.c.l.b16 %v4641
        %v4737 = vunpack.c.h.b16 %v4641
        %v4738 = vunpack.c.l.b16 %v4642
        %v4739 = vunpack.c.h.b16 %v4642
        %v4740 = vunpack.c.l.b16 %v4643
        %v4741 = vunpack.c.h.b16 %v4643
        %v4742 = vunpack.c.l.b16 %v4644
        %v4743 = vunpack.c.h.b16 %v4644
        %v4744 = vunpack.c.l.b16 %v4645
        %v4745 = vunpack.c.h.b16 %v4645
        %v4746 = vunpack.c.l.b16 %v4646
        %v4747 = vunpack.c.h.b16 %v4646
        %v4748 = vunpack.c.l.b16 %v4647
        %v4749 = vunpack.c.h.b16 %v4647
        %v4750 = vunpack.c.l.b16 %v4648
        %v4751 = vunpack.c.h.b16 %v4648
        %v4752 = vunpack.c.l.b16 %v4649
        %v4753 = vunpack.c.h.b16 %v4649
        %v4754 = vunpack.c.l.b16 %v4650
        %v4755 = vunpack.c.h.b16 %v4650
        %v4756 = vunpack.c.l.b16 %v4651
        %v4757 = vunpack.c.h.b16 %v4651
        %v4758 = vunpack.c.l.b16 %v4652
        %v4759 = vunpack.c.h.b16 %v4652
        %v4760 = vunpack.c.l.b16 %v4653
        %v4761 = vunpack.c.h.b16 %v4653
        %v4762 = vunpack.c.l.b16 %v4654
        %v4763 = vunpack.c.h.b16 %v4654
        %v4764 = vunpack.c.l.b16 %v4655
        %v4765 = vunpack.c.h.b16 %v4655
        %v4766 = vunpack.c.l.b16 %v4656
        %v4767 = vunpack.c.h.b16 %v4656
        %v4768 = vunpack.c.l.b16 %v4657
        %v4769 = vunpack.c.h.b16 %v4657
        %v4770 = vunpack.c.l.b16 %v4658
        %v4771 = vunpack.c.h.b16 %v4658
        %v4772 = vunpack.c.l.b16 %v4659
        %v4773 = vunpack.c.h.b16 %v4659
        %v4774 = vunpack.c.l.b16 %v4660
        %v4775 = vunpack.c.h.b16 %v4660
        %v4776 = vunpack.c.l.b16 %v4661
        %v4777 = vunpack.c.h.b16 %v4661
        %v4778 = vunpack.c.l.b16 %v4662
        %v4779 = vunpack.c.h.b16 %v4662
        %v4780 = vunpack.c.l.b16 %v4663
        %v4781 = vunpack.c.h.b16 %v4663
        %v4782 = vpack.c.b16 %v4722, %v4718
        %v4783 = vpack.c.b16 %v4723, %v4719
        %v4784 = vpack.c.b16 %v4724, %v4720
        %v4785 = vpack.c.b16 %v4725, %v4721
        %v4786 = vpack.c.b16 %v4730, %v4726
        %v4787 = vpack.c.b16 %v4731, %v4727
        %v4788 = vpack.c.b16 %v4732, %v4728
        %v4789 = vpack.c.b16 %v4733, %v4729
        %v4790 = vpack.c.b16 %v4738, %v4734
        %v4791 = vpack.c.b16 %v4739, %v4735
        %v4792 = vpack.c.b16 %v4740, %v4736
        %v4793 = vpack.c.b16 %v4741, %v4737
        %v4794 = vpack.c.b16 %v4746, %v4742
        %v4795 = vpack.c.b16 %v4747, %v4743
        %v4796 = vpack.c.b16 %v4748, %v4744
        %v4797 = vpack.c.b16 %v4749, %v4745
        %v4798 = vpack.c.b16 %v4754, %v4750
        %v4799 = vpack.c.b16 %v4755, %v4751
        %v4800 = vpack.c.b16 %v4756, %v4752
        %v4801 = vpack.c.b16 %v4757, %v4753
        %v4802 = vpack.c.b16 %v4762, %v4758
        %v4803 = vpack.c.b16 %v4763, %v4759
        %v4804 = vpack.c.b16 %v4764, %v4760
        %v4805 = vpack.c.b16 %v4765, %v4761
        %v4806 = vpack.c.b16 %v4770, %v4766
        %v4807 = vpack.c.b16 %v4771, %v4767
        %v4808 = vpack.c.b16 %v4772, %v4768
        %v4809 = vpack.c.b16 %v4773, %v4769
        %v4810 = vpack.c.b16 %v4778, %v4774
        %v4811 = vpack.c.b16 %v4779, %v4775
        %v4812 = vpack.c.b16 %v4780, %v4776
        %v4813 = vpack.c.b16 %v4781, %v4777
        %4846 = vmatprep.subr.bf16.mxu0 %v4783
        %4847 = vmatpush1.bf16.msra.mxu0 %v4782
        %4848 = vmatprep.subr.bf16.mxu0 %v4787
        %4849 = vmatpush1.bf16.msra.mxu0 %v4786
        %4850 = vmatprep.subr.bf16.mxu0 %v4791
        %4851 = vmatpush1.bf16.msra.mxu0 %v4790
        %4852 = vmatprep.subr.bf16.mxu0 %v4795
        %4853 = vmatpush1.bf16.msra.mxu0 %v4794
        %4854 = vmatprep.subr.bf16.mxu0 %v4799
        %4855 = vmatpush1.bf16.msra.mxu0 %v4798
        %4856 = vmatprep.subr.bf16.mxu0 %v4803
        %4857 = vmatpush1.bf16.msra.mxu0 %v4802
        %4858 = vmatprep.subr.bf16.mxu0 %v4807
        %4859 = vmatpush1.bf16.msra.mxu0 %v4806
        %4860 = vmatprep.subr.bf16.mxu0 %v4811
        %4861 = vmatpush1.bf16.msra.mxu0 %v4810
        %4862 = vmatprep.subr.bf16.mxu0 0
        %4863 = vmatpush1.bf16.msra.mxu0 0
        %4864 = vmatprep.subr.bf16.mxu0 0
        %4865 = vmatpush1.bf16.msra.mxu0 0
        %4866 = vmatprep.subr.bf16.mxu0 0
        %4867 = vmatpush1.bf16.msra.mxu0 0
        %4868 = vmatprep.subr.bf16.mxu0 0
        %4869 = vmatpush1.bf16.msra.mxu0 0
        %4870 = vmatprep.subr.bf16.mxu0 0
        %4871 = vmatpush1.bf16.msra.mxu0 0
        %4872 = vmatprep.subr.bf16.mxu0 0
        %4873 = vmatpush1.bf16.msra.mxu0 0
        %4874 = vmatprep.subr.bf16.mxu0 0
        %4875 = vmatpush1.bf16.msra.mxu0 0
        %4876 = vmatprep.subr.bf16.mxu0 0
        %4877 = vmatpush1.bf16.msra.mxu0 0
        %4878 = vmatprep.mubr.bf16.mxu0 0
        %4879 = vmatmul.mubr.bf16.gmra.mrb[0].mxu0 %v2710
        %v4880 = vpop.f32.mrb[0].mxu0
        %v4881 = vadd.f32 %v4669, %v4880
        %v4882 = vpop.f32.mrb[0].mxu0
        %v4883 = vadd.f32 %v4673, %v4882
        %v4884 = vpop.f32.mrb[0].mxu0
        %v4885 = vpop.f32.mrb[0].mxu0
        %4886 = vdwg.mxu0
        %4887 = vmatprep.subr.bf16.mxu0 %v4785
        %4888 = vmatpush1.bf16.msra.mxu0 %v4784
        %4889 = vmatprep.subr.bf16.mxu0 %v4789
        %4890 = vmatpush1.bf16.msra.mxu0 %v4788
        %4891 = vmatprep.subr.bf16.mxu0 %v4793
        %4892 = vmatpush1.bf16.msra.mxu0 %v4792
        %4893 = vmatprep.subr.bf16.mxu0 %v4797
        %4894 = vmatpush1.bf16.msra.mxu0 %v4796
        %4895 = vmatprep.subr.bf16.mxu0 %v4801
        %4896 = vmatpush1.bf16.msra.mxu0 %v4800
        %4897 = vmatprep.subr.bf16.mxu0 %v4805
        %4898 = vmatpush1.bf16.msra.mxu0 %v4804
        %4899 = vmatprep.subr.bf16.mxu0 %v4809
        %4900 = vmatpush1.bf16.msra.mxu0 %v4808
        %4901 = vmatprep.subr.bf16.mxu0 %v4813
        %4902 = vmatpush1.bf16.msra.mxu0 %v4812
        %4903 = vmatprep.subr.bf16.mxu0 0
        %4904 = vmatpush1.bf16.msra.mxu0 0
        %4905 = vmatprep.subr.bf16.mxu0 0
        %4906 = vmatpush1.bf16.msra.mxu0 0
        %4907 = vmatprep.subr.bf16.mxu0 0
        %4908 = vmatpush1.bf16.msra.mxu0 0
        %4909 = vmatprep.subr.bf16.mxu0 0
        %4910 = vmatpush1.bf16.msra.mxu0 0
        %4911 = vmatprep.subr.bf16.mxu0 0
        %4912 = vmatpush1.bf16.msra.mxu0 0
        %4913 = vmatprep.subr.bf16.mxu0 0
        %4914 = vmatpush1.bf16.msra.mxu0 0
        %4915 = vmatprep.subr.bf16.mxu0 0
        %4916 = vmatpush1.bf16.msra.mxu0 0
        %4917 = vmatprep.subr.bf16.mxu0 0
        %4918 = vmatpush1.bf16.msra.mxu0 0
        %4919 = vmatprep.mubr.bf16.mxu0 0
        %4920 = vmatmul.mubr.bf16.gmra.mrb[0].mxu0 %v2710
        %v4921 = vpop.f32.mrb[0].mxu0
        %v4922 = vadd.f32 %v4677, %v4921
        %v4923 = vpop.f32.mrb[0].mxu0
        %v4924 = vadd.f32 %v4681, %v4923
        %v4925 = vpop.f32.mrb[0].mxu0
        %v4926 = vpop.f32.mrb[0].mxu0
        %4927 = vdwg.mxu0
        %v4928 = vmax.f32 %v4881, 0.0
        %v4929 = vmax.f32 %v4883, 0.0
        %v4930 = vmax.f32 %v4922, 0.0
        %v4931 = vmax.f32 %v4924, 0.0
        %v4932 = vpack.c.bf16 %v4928, %v4928
        %v4933 = vpack.c.bf16 %v4929, %v4929
        %v4934 = vpack.c.bf16 %v4930, %v4930
        %v4935 = vpack.c.bf16 %v4931, %v4931
        %v4936 = vld [vmem:[%s784 + $0x300] sm:$0xf]
        %v4937 = vld [vmem:[%s784 + $0x304] sm:$0xf]
        %v4938 = vld [vmem:[%s784 + $0x308] sm:$0xf]
        %v4939 = vld [vmem:[%s784 + $0x30c] sm:$0xf]
        %v4940 = vld [vmem:[%s784 + $0x310] sm:$0xf]
        %v4941 = vld [vmem:[%s784 + $0x314] sm:$0xf]
        %v4942 = vld [vmem:[%s784 + $0x318] sm:$0xf]
        %v4943 = vld [vmem:[%s784 + $0x31c] sm:$0xf]
        %v4944 = vld [vmem:[%s784 + $0x320] sm:$0xf]
        %v4945 = vld [vmem:[%s784 + $0x324] sm:$0xf]
        %v4946 = vld [vmem:[%s784 + $0x328] sm:$0xf]
        %v4947 = vld [vmem:[%s784 + $0x32c] sm:$0xf]
        %v4948 = vld [vmem:[%s784 + $0x330] sm:$0xf]
        %v4949 = vld [vmem:[%s784 + $0x334] sm:$0xf]
        %v4950 = vld [vmem:[%s784 + $0x338] sm:$0xf]
        %v4951 = vld [vmem:[%s784 + $0x33c] sm:$0xf]
        %v4952 = vld [vmem:[%s784 + $0x340] sm:$0xf]
        %v4953 = vld [vmem:[%s784 + $0x344] sm:$0xf]
        %v4954 = vld [vmem:[%s784 + $0x348] sm:$0xf]
        %v4955 = vld [vmem:[%s784 + $0x34c] sm:$0xf]
        %v4956 = vld [vmem:[%s784 + $0x350] sm:$0xf]
        %v4957 = vld [vmem:[%s784 + $0x354] sm:$0xf]
        %v4958 = vld [vmem:[%s784 + $0x358] sm:$0xf]
        %v4959 = vld [vmem:[%s784 + $0x35c] sm:$0xf]
        %v4960 = vld [vmem:[%s784 + $0x360] sm:$0xf]
        %v4961 = vld [vmem:[%s784 + $0x364] sm:$0xf]
        %v4962 = vld [vmem:[%s784 + $0x368] sm:$0xf]
        %v4963 = vld [vmem:[%s784 + $0x36c] sm:$0xf]
        %v4964 = vld [vmem:[%s784 + $0x370] sm:$0xf]
        %v4965 = vld [vmem:[%s784 + $0x374] sm:$0xf]
        %v4966 = vld [vmem:[%s784 + $0x378] sm:$0xf]
        %v4967 = vld [vmem:[%s784 + $0x37c] sm:$0xf]
        %v4968 = vld [vmem:[%s784 + $0x380] sm:$0xf]
        %v4969 = vld [vmem:[%s784 + $0x384] sm:$0xf]
        %v4970 = vld [vmem:[%s784 + $0x388] sm:$0xf]
        %v4971 = vld [vmem:[%s784 + $0x38c] sm:$0xf]
        %v4972 = vld [vmem:[%s784 + $0x390] sm:$0xf]
        %v4973 = vld [vmem:[%s784 + $0x394] sm:$0xf]
        %v4974 = vld [vmem:[%s784 + $0x398] sm:$0xf]
        %v4975 = vld [vmem:[%s784 + $0x39c] sm:$0xf]
        %v4976 = vld [vmem:[%s784 + $0x3a0] sm:$0xf]
        %v4977 = vld [vmem:[%s784 + $0x3a4] sm:$0xf]
        %v4978 = vld [vmem:[%s784 + $0x3a8] sm:$0xf]
        %v4979 = vld [vmem:[%s784 + $0x3ac] sm:$0xf]
        %v4980 = vld [vmem:[%s784 + $0x3b0] sm:$0xf]
        %v4981 = vld [vmem:[%s784 + $0x3b4] sm:$0xf]
        %v4982 = vld [vmem:[%s784 + $0x3b8] sm:$0xf]
        %v4983 = vld [vmem:[%s784 + $0x3bc] sm:$0xf]
        %v4984 = vld [vmem:[%s784 + $0x3c0] sm:$0xf]
        %v4985 = vld [vmem:[%s784 + $0x3c4] sm:$0xf]
        %v4986 = vld [vmem:[%s784 + $0x3c8] sm:$0xf]
        %v4987 = vld [vmem:[%s784 + $0x3cc] sm:$0xf]
        %v4988 = vld [vmem:[%s784 + $0x3d0] sm:$0xf]
        %v4989 = vld [vmem:[%s784 + $0x3d4] sm:$0xf]
        %v4990 = vld [vmem:[%s784 + $0x3d8] sm:$0xf]
        %v4991 = vld [vmem:[%s784 + $0x3dc] sm:$0xf]
        %v4992 = vld [vmem:[%s784 + $0x3e0] sm:$0xf]
        %v4993 = vld [vmem:[%s784 + $0x3e4] sm:$0xf]
        %v4994 = vld [vmem:[%s784 + $0x3e8] sm:$0xf]
        %v4995 = vld [vmem:[%s784 + $0x3ec] sm:$0xf]
        %v4996 = vld [vmem:[%s784 + $0x3f0] sm:$0xf]
        %v4997 = vld [vmem:[%s784 + $0x3f4] sm:$0xf]
        %v4998 = vld [vmem:[%s784 + $0x3f8] sm:$0xf]
        %v4999 = vld [vmem:[%s784 + $0x3fc] sm:$0xf]
        %v5064 = vunpack.c.l.b16 %v4936
        %v5065 = vunpack.c.l.b16 %v4937
        %v5066 = vunpack.c.l.b16 %v4938
        %v5067 = vunpack.c.l.b16 %v4939
        %v5068 = vunpack.c.l.b16 %v4940
        %v5069 = vunpack.c.l.b16 %v4941
        %v5070 = vunpack.c.l.b16 %v4942
        %v5071 = vunpack.c.l.b16 %v4943
        %v5072 = vunpack.c.l.b16 %v4944
        %v5073 = vunpack.c.l.b16 %v4945
        %v5074 = vunpack.c.l.b16 %v4946
        %v5075 = vunpack.c.l.b16 %v4947
        %v5076 = vunpack.c.l.b16 %v4948
        %v5077 = vunpack.c.l.b16 %v4949
        %v5078 = vunpack.c.l.b16 %v4950
        %v5079 = vunpack.c.l.b16 %v4951
        %v5080 = vunpack.c.l.b16 %v4952
        %v5081 = vunpack.c.l.b16 %v4953
        %v5082 = vunpack.c.l.b16 %v4954
        %v5083 = vunpack.c.l.b16 %v4955
        %v5084 = vunpack.c.l.b16 %v4956
        %v5085 = vunpack.c.l.b16 %v4957
        %v5086 = vunpack.c.l.b16 %v4958
        %v5087 = vunpack.c.l.b16 %v4959
        %v5088 = vunpack.c.l.b16 %v4960
        %v5089 = vunpack.c.l.b16 %v4961
        %v5090 = vunpack.c.l.b16 %v4962
        %v5091 = vunpack.c.l.b16 %v4963
        %v5092 = vunpack.c.l.b16 %v4964
        %v5093 = vunpack.c.l.b16 %v4965
        %v5094 = vunpack.c.l.b16 %v4966
        %v5095 = vunpack.c.l.b16 %v4967
        %v5096 = vunpack.c.l.b16 %v4968
        %v5097 = vunpack.c.l.b16 %v4969
        %v5098 = vunpack.c.l.b16 %v4970
        %v5099 = vunpack.c.l.b16 %v4971
        %v5100 = vunpack.c.l.b16 %v4972
        %v5101 = vunpack.c.l.b16 %v4973
        %v5102 = vunpack.c.l.b16 %v4974
        %v5103 = vunpack.c.l.b16 %v4975
        %v5104 = vunpack.c.l.b16 %v4976
        %v5105 = vunpack.c.l.b16 %v4977
        %v5106 = vunpack.c.l.b16 %v4978
        %v5107 = vunpack.c.l.b16 %v4979
        %v5108 = vunpack.c.l.b16 %v4980
        %v5109 = vunpack.c.l.b16 %v4981
        %v5110 = vunpack.c.l.b16 %v4982
        %v5111 = vunpack.c.l.b16 %v4983
        %v5112 = vunpack.c.l.b16 %v4984
        %v5113 = vunpack.c.l.b16 %v4985
        %v5114 = vunpack.c.l.b16 %v4986
        %v5115 = vunpack.c.l.b16 %v4987
        %v5116 = vunpack.c.l.b16 %v4988
        %v5117 = vunpack.c.l.b16 %v4989
        %v5118 = vunpack.c.l.b16 %v4990
        %v5119 = vunpack.c.l.b16 %v4991
        %v5120 = vunpack.c.l.b16 %v4992
        %v5121 = vunpack.c.l.b16 %v4993
        %v5122 = vunpack.c.l.b16 %v4994
        %v5123 = vunpack.c.l.b16 %v4995
        %v5124 = vunpack.c.l.b16 %v4996
        %v5125 = vunpack.c.l.b16 %v4997
        %v5126 = vunpack.c.l.b16 %v4998
        %v5127 = vunpack.c.l.b16 %v4999
        %v5128 = vpack.c.b16 %v5065, %v5064
        %v5129 = vpack.c.b16 %v5067, %v5066
        %v5130 = vpack.c.b16 %v5069, %v5068
        %v5131 = vpack.c.b16 %v5071, %v5070
        %v5132 = vpack.c.b16 %v5073, %v5072
        %v5133 = vpack.c.b16 %v5075, %v5074
        %v5134 = vpack.c.b16 %v5077, %v5076
        %v5135 = vpack.c.b16 %v5079, %v5078
        %v5136 = vpack.c.b16 %v5081, %v5080
        %v5137 = vpack.c.b16 %v5083, %v5082
        %v5138 = vpack.c.b16 %v5085, %v5084
        %v5139 = vpack.c.b16 %v5087, %v5086
        %v5140 = vpack.c.b16 %v5089, %v5088
        %v5141 = vpack.c.b16 %v5091, %v5090
        %v5142 = vpack.c.b16 %v5093, %v5092
        %v5143 = vpack.c.b16 %v5095, %v5094
        %v5144 = vpack.c.b16 %v5097, %v5096
        %v5145 = vpack.c.b16 %v5099, %v5098
        %v5146 = vpack.c.b16 %v5101, %v5100
        %v5147 = vpack.c.b16 %v5103, %v5102
        %v5148 = vpack.c.b16 %v5105, %v5104
        %v5149 = vpack.c.b16 %v5107, %v5106
        %v5150 = vpack.c.b16 %v5109, %v5108
        %v5151 = vpack.c.b16 %v5111, %v5110
        %v5152 = vpack.c.b16 %v5113, %v5112
        %v5153 = vpack.c.b16 %v5115, %v5114
        %v5154 = vpack.c.b16 %v5117, %v5116
        %v5155 = vpack.c.b16 %v5119, %v5118
        %v5156 = vpack.c.b16 %v5121, %v5120
        %v5157 = vpack.c.b16 %v5123, %v5122
        %v5158 = vpack.c.b16 %v5125, %v5124
        %v5159 = vpack.c.b16 %v5127, %v5126
        %5192 = vmatprep.subr.bf16.mxu0 0
        %5193 = vmatpush1.bf16.msra.mxu0 %v5128
        %5194 = vmatprep.subr.bf16.mxu0 0
        %5195 = vmatpush1.bf16.msra.mxu0 %v5129
        %5196 = vmatprep.subr.bf16.mxu0 0
        %5197 = vmatpush1.bf16.msra.mxu0 %v5130
        %5198 = vmatprep.subr.bf16.mxu0 0
        %5199 = vmatpush1.bf16.msra.mxu0 %v5131
        %5200 = vmatprep.subr.bf16.mxu0 0
        %5201 = vmatpush1.bf16.msra.mxu0 %v5132
        %5202 = vmatprep.subr.bf16.mxu0 0
        %5203 = vmatpush1.bf16.msra.mxu0 %v5133
        %5204 = vmatprep.subr.bf16.mxu0 0
        %5205 = vmatpush1.bf16.msra.mxu0 %v5134
        %5206 = vmatprep.subr.bf16.mxu0 0
        %5207 = vmatpush1.bf16.msra.mxu0 %v5135
        %5208 = vmatprep.subr.bf16.mxu0 0
        %5209 = vmatpush1.bf16.msra.mxu0 %v5136
        %5210 = vmatprep.subr.bf16.mxu0 0
        %5211 = vmatpush1.bf16.msra.mxu0 %v5137
        %5212 = vmatprep.subr.bf16.mxu0 0
        %5213 = vmatpush1.bf16.msra.mxu0 %v5138
        %5214 = vmatprep.subr.bf16.mxu0 0
        %5215 = vmatpush1.bf16.msra.mxu0 %v5139
        %5216 = vmatprep.subr.bf16.mxu0 0
        %5217 = vmatpush1.bf16.msra.mxu0 %v5140
        %5218 = vmatprep.subr.bf16.mxu0 0
        %5219 = vmatpush1.bf16.msra.mxu0 %v5141
        %5220 = vmatprep.subr.bf16.mxu0 0
        %5221 = vmatpush1.bf16.msra.mxu0 %v5142
        %5222 = vmatprep.subr.bf16.mxu0 0
        %5223 = vmatpush1.bf16.msra.mxu0 %v5143
        %5224 = vmatprep.mubr.bf16.mxu0 %v4933
        %5225 = vmatmul.mubr.bf16.gmra.mrb[0].mxu0 %v4932
        %v5226 = vpop.f32.mrb[0].mxu0
        %v5227 = vadd.f32 0.0, %v5226
        %v5228 = vpop.f32.mrb[0].mxu0
        %v5229 = vpop.f32.mrb[0].mxu0
        %v5230 = vpop.f32.mrb[0].mxu0
        %5231 = vdwg.mxu0
        %5232 = vmatprep.subr.bf16.mxu0 0
        %5233 = vmatpush1.bf16.msra.mxu0 %v5144
        %5234 = vmatprep.subr.bf16.mxu0 0
        %5235 = vmatpush1.bf16.msra.mxu0 %v5145
        %5236 = vmatprep.subr.bf16.mxu0 0
        %5237 = vmatpush1.bf16.msra.mxu0 %v5146
        %5238 = vmatprep.subr.bf16.mxu0 0
        %5239 = vmatpush1.bf16.msra.mxu0 %v5147
        %5240 = vmatprep.subr.bf16.mxu0 0
        %5241 = vmatpush1.bf16.msra.mxu0 %v5148
        %5242 = vmatprep.subr.bf16.mxu0 0
        %5243 = vmatpush1.bf16.msra.mxu0 %v5149
        %5244 = vmatprep.subr.bf16.mxu0 0
        %5245 = vmatpush1.bf16.msra.mxu0 %v5150
        %5246 = vmatprep.subr.bf16.mxu0 0
        %5247 = vmatpush1.bf16.msra.mxu0 %v5151
        %5248 = vmatprep.subr.bf16.mxu0 0
        %5249 = vmatpush1.bf16.msra.mxu0 %v5152
        %5250 = vmatprep.subr.bf16.mxu0 0
        %5251 = vmatpush1.bf16.msra.mxu0 %v5153
        %5252 = vmatprep.subr.bf16.mxu0 0
        %5253 = vmatpush1.bf16.msra.mxu0 %v5154
        %5254 = vmatprep.subr.bf16.mxu0 0
        %5255 = vmatpush1.bf16.msra.mxu0 %v5155
        %5256 = vmatprep.subr.bf16.mxu0 0
        %5257 = vmatpush1.bf16.msra.mxu0 %v5156
        %5258 = vmatprep.subr.bf16.mxu0 0
        %5259 = vmatpush1.bf16.msra.mxu0 %v5157
        %5260 = vmatprep.subr.bf16.mxu0 0
        %5261 = vmatpush1.bf16.msra.mxu0 %v5158
        %5262 = vmatprep.subr.bf16.mxu0 0
        %5263 = vmatpush1.bf16.msra.mxu0 %v5159
        %5264 = vmatprep.mubr.bf16.mxu0 %v4935
        %5265 = vmatmul.mubr.bf16.gmra.mrb[0].mxu0 %v4934
        %v5266 = vpop.f32.mrb[0].mxu0
        %v5267 = vadd.f32 %v5227, %v5266
        %v5268 = vpop.f32.mrb[0].mxu0
        %v5269 = vpop.f32.mrb[0].mxu0
        %v5270 = vpop.f32.mrb[0].mxu0
        %5271 = vdwg.mxu0
        %v5272 = vadd.f32 %v4631, %v5267
        %v5273 = vld [vmem:[%s923] sm:$0x1]
        %v5275 = vlaneseq
        %v5276 = vshrl.u32 %v5275, 7
        %v5277 = vsub.s32 0, %v5276
        %v5278 = vrot.slane %v5273, %v5277
        %v5280 = vadd.f32 %v5272, %v5278
        %v5281 = vadd.f32 %v2709, %v5280
        %5282 = vadd.xlane.f32.xlu0 %v5281
        %v5283 = vpop.xlane.xlu0 %5282
        %v5284 = vmul.f32 %v5283, %v2684
        %v5285 = vsub.f32 %v5281, %v5284
        %v5286 = vmul.f32 %v5285, %v5285
        %5287 = vadd.xlane.f32.xlu0 %v5286
        %v5288 = vpop.xlane.xlu0 %5287
        %v5289 = vmul.f32 %v5288, %v2684
        %v5290 = vadd.f32 %v5289, 1e-05
        %v5291 = vrsqrt.pop %v5290
        %v5292 = vmul.f32 %v5285, %v5291
        %v5293 = vld [vmem:[%s926] sm:$0x1]
        %v5295 = vlaneseq
        %v5296 = vshrl.u32 %v5295, 7
        %v5297 = vsub.s32 0, %v5296
        %v5298 = vrot.slane %v5293, %v5297
        %v5300 = vmul.f32 %v5292, %v5298
        %v5301 = vld [vmem:[%s929] sm:$0x1]
        %v5303 = vlaneseq
        %v5304 = vshrl.u32 %v5303, 7
        %v5305 = vsub.s32 0, %v5304
        %v5306 = vrot.slane %v5301, %v5305
        %v5308 = vadd.f32 %v5300, %v5306
        %5309 = vst [vmem:[%s933] sm:$0xff] %v5308
        %p5310 = scmp.eq.s32.totalorder %s44, 1
        // Predicated region
        $region125: #{vit_encoder_forward.1} parent=91 // pred_check
          %p5311 = pneg %p5310
        $region126: #{vit_encoder_forward.1} parent=91 // pred_check_branch
          %5313 = sbr.rel (%p5311) target = $region128
        $region127: #{vit_encoder_forward.1} parent=91 // pred_region
          %v5314 = vpack.c.bf16 %v5308, %v5308
          %v5315 = vld [vmem:[#allocation10] sm:$0xff]
          %v5316 = vld [vmem:[#allocation10 + $0x8] sm:$0xff]
          %v5317 = vld [vmem:[#allocation10 + $0x10] sm:$0xff]
          %v5318 = vld [vmem:[#allocation10 + $0x18] sm:$0xff]
          %v5319 = vld [vmem:[#allocation10 + $0x20] sm:$0xff]
          %v5320 = vld [vmem:[#allocation10 + $0x28] sm:$0xff]
          %v5321 = vld [vmem:[#allocation10 + $0x30] sm:$0xff]
          %v5322 = vld [vmem:[#allocation10 + $0x38] sm:$0xff]
          %v5323 = vld [vmem:[#allocation10 + $0x40] sm:$0xff]
          %v5324 = vld [vmem:[#allocation10 + $0x48] sm:$0xff]
          %v5325 = vld [vmem:[#allocation10 + $0x50] sm:$0xff]
          %v5326 = vld [vmem:[#allocation10 + $0x58] sm:$0xff]
          %v5327 = vld [vmem:[#allocation10 + $0x60] sm:$0xff]
          %v5328 = vld [vmem:[#allocation10 + $0x68] sm:$0xff]
          %v5329 = vld [vmem:[#allocation10 + $0x70] sm:$0xff]
          %v5330 = vld [vmem:[#allocation10 + $0x78] sm:$0xff]
          %v5331 = vld [vmem:[#allocation12] sm:$0x3]
          %v5333 = vlaneseq
          %v5334 = vshrl.u32 %v5333, 7
          %v5335 = vsub.s32 0, %v5334
          %v5336 = vrot.slane %v5331, %v5335
          %v5337 = vlaneseq
          %v5338 = vshrl.u32 %v5337, 7
          %v5339 = vsub.s32 1, %v5338
          %v5340 = vrot.slane %v5331, %v5339
          %v5359 = vunpack.c.l.b16 %v5315
          %v5360 = vunpack.c.h.b16 %v5315
          %v5361 = vunpack.c.l.b16 %v5316
          %v5362 = vunpack.c.h.b16 %v5316
          %v5363 = vunpack.c.l.b16 %v5317
          %v5364 = vunpack.c.h.b16 %v5317
          %v5365 = vunpack.c.l.b16 %v5318
          %v5366 = vunpack.c.h.b16 %v5318
          %v5367 = vunpack.c.l.b16 %v5319
          %v5368 = vunpack.c.h.b16 %v5319
          %v5369 = vunpack.c.l.b16 %v5320
          %v5370 = vunpack.c.h.b16 %v5320
          %v5371 = vunpack.c.l.b16 %v5321
          %v5372 = vunpack.c.h.b16 %v5321
          %v5373 = vunpack.c.l.b16 %v5322
          %v5374 = vunpack.c.h.b16 %v5322
          %v5375 = vunpack.c.l.b16 %v5323
          %v5376 = vunpack.c.h.b16 %v5323
          %v5377 = vunpack.c.l.b16 %v5324
          %v5378 = vunpack.c.h.b16 %v5324
          %v5379 = vunpack.c.l.b16 %v5325
          %v5380 = vunpack.c.h.b16 %v5325
          %v5381 = vunpack.c.l.b16 %v5326
          %v5382 = vunpack.c.h.b16 %v5326
          %v5383 = vunpack.c.l.b16 %v5327
          %v5384 = vunpack.c.h.b16 %v5327
          %v5385 = vunpack.c.l.b16 %v5328
          %v5386 = vunpack.c.h.b16 %v5328
          %v5387 = vunpack.c.l.b16 %v5329
          %v5388 = vunpack.c.h.b16 %v5329
          %v5389 = vunpack.c.l.b16 %v5330
          %v5390 = vunpack.c.h.b16 %v5330
          %v5391 = vpack.c.b16 %v5361, %v5359
          %v5392 = vpack.c.b16 %v5362, %v5360
          %v5393 = vpack.c.b16 %v5365, %v5363
          %v5394 = vpack.c.b16 %v5366, %v5364
          %v5395 = vpack.c.b16 %v5369, %v5367
          %v5396 = vpack.c.b16 %v5370, %v5368
          %v5397 = vpack.c.b16 %v5373, %v5371
          %v5398 = vpack.c.b16 %v5374, %v5372
          %v5399 = vpack.c.b16 %v5377, %v5375
          %v5400 = vpack.c.b16 %v5378, %v5376
          %v5401 = vpack.c.b16 %v5381, %v5379
          %v5402 = vpack.c.b16 %v5382, %v5380
          %v5403 = vpack.c.b16 %v5385, %v5383
          %v5404 = vpack.c.b16 %v5386, %v5384
          %v5405 = vpack.c.b16 %v5389, %v5387
          %v5406 = vpack.c.b16 %v5390, %v5388
          %5423 = vmatprep.subr.bf16.mxu0 %v5392
          %5424 = vmatpush1.bf16.msra.mxu0 %v5391
          %5425 = vmatprep.subr.bf16.mxu0 %v5394
          %5426 = vmatpush1.bf16.msra.mxu0 %v5393
          %5427 = vmatprep.subr.bf16.mxu0 %v5396
          %5428 = vmatpush1.bf16.msra.mxu0 %v5395
          %5429 = vmatprep.subr.bf16.mxu0 %v5398
          %5430 = vmatpush1.bf16.msra.mxu0 %v5397
          %5431 = vmatprep.subr.bf16.mxu0 %v5400
          %5432 = vmatpush1.bf16.msra.mxu0 %v5399
          %5433 = vmatprep.subr.bf16.mxu0 %v5402
          %5434 = vmatpush1.bf16.msra.mxu0 %v5401
          %5435 = vmatprep.subr.bf16.mxu0 %v5404
          %5436 = vmatpush1.bf16.msra.mxu0 %v5403
          %5437 = vmatprep.subr.bf16.mxu0 %v5406
          %5438 = vmatpush1.bf16.msra.mxu0 %v5405
          %5439 = vmatprep.subr.bf16.mxu0 0
          %5440 = vmatpush1.bf16.msra.mxu0 0
          %5441 = vmatprep.subr.bf16.mxu0 0
          %5442 = vmatpush1.bf16.msra.mxu0 0
          %5443 = vmatprep.subr.bf16.mxu0 0
          %5444 = vmatpush1.bf16.msra.mxu0 0
          %5445 = vmatprep.subr.bf16.mxu0 0
          %5446 = vmatpush1.bf16.msra.mxu0 0
          %5447 = vmatprep.subr.bf16.mxu0 0
          %5448 = vmatpush1.bf16.msra.mxu0 0
          %5449 = vmatprep.subr.bf16.mxu0 0
          %5450 = vmatpush1.bf16.msra.mxu0 0
          %5451 = vmatprep.subr.bf16.mxu0 0
          %5452 = vmatpush1.bf16.msra.mxu0 0
          %5453 = vmatprep.subr.bf16.mxu0 0
          %5454 = vmatpush1.bf16.msra.mxu0 0
          %5455 = vmatprep.mubr.bf16.mxu0 0
          %5456 = vmatmul.mubr.bf16.gmra.mrb[0].mxu0 %v5314
          %v5457 = vpop.f32.mrb[0].mxu0
          %v5458 = vadd.f32 %v5336, %v5457
          %v5459 = vpop.f32.mrb[0].mxu0
          %v5460 = vadd.f32 %v5340, %v5459
          %v5461 = vpop.f32.mrb[0].mxu0
          %v5462 = vpop.f32.mrb[0].mxu0
          %5463 = vdwg.mxu0
          %5464 = vst [vmem:[%s938] sm:$0xff] %v5458
          %5465 = vst [vmem:[%s938 + $0x8] sm:$0xff] %v5460
        $region128: #{vit_encoder_forward.1} parent=91 // pred_fallthru
          _
        %p5466 = scmp.lt.s32.totalorder %s43, 1
        %s5467 = scalar_select %p5466, %s43, 1
        %s5468 = smul.addr %s5467, 8
        %s5469 = scalar_lea.vmem %s18, %s5468
        %p5470 = scmp.lt.s32.totalorder %s43, 1
        %s5471 = scalar_select %p5470, %s43, 1
        %s5472 = smul.addr %s5471, 2
        %s5473 = smul.addr %s5472, 8
        %s5474 = scalar_lea.vmem %s19, %s5473
        // Predicated region
        $region129: #{vit_encoder_forward.1} parent=91 // pred_check
          %p5475 = pneg %p512
        $region130: #{vit_encoder_forward.1} parent=91 // pred_check_branch
          %5477 = sbr.rel (%p5475) target = $region132
        $region131: #{vit_encoder_forward.1} parent=91 // pred_region
          _
        $region132: #{vit_encoder_forward.1} parent=91 // pred_fallthru
          _
        // Predicated region
        $region133: #{vit_encoder_forward.1} parent=91 // pred_check
          %p5478 = pneg %p538
        $region134: #{vit_encoder_forward.1} parent=91 // pred_check_branch
          %5480 = sbr.rel (%p5478) target = $region136
        $region135: #{vit_encoder_forward.1} parent=91 // pred_region
          _
        $region136: #{vit_encoder_forward.1} parent=91 // pred_fallthru
          _
      $region92: #{vit_encoder_forward.1} parent=5 // pred_fallthru
        _
      %p5481 = scmp.le.s32.totalorder 2, %s34
      // Predicated region
      $region137: #{vit_encoder_forward.1} parent=5 // pred_check
        %p5482 = pneg %p5481
      $region138: #{vit_encoder_forward.1} parent=5 // pred_check_branch
        %5484 = sbr.rel (%p5482) target = $region140
      $region139: #{vit_encoder_forward.1} parent=5 // pred_region
        %s5485 = ssub.s32 %s34, 2
        // Predicated region
        $region141: #{vit_encoder_forward.1} parent=139 // pred_check
          %p5486 = pneg %p518
        $region142: #{vit_encoder_forward.1} parent=139 // pred_check_branch
          %5488 = sbr.rel (%p5486) target = $region144
        $region143: #{vit_encoder_forward.1} parent=139 // pred_region
          %p5489 = scmp.lt.s32.totalorder %s45, 1
          %s5490 = scalar_select %p5489, %s45, 1
          %s5491 = smul.addr %s5490, 8
          %s5492 = scalar_lea.vmem %s18, %s5491
        $region144: #{vit_encoder_forward.1} parent=139 // pred_fallthru
          _
        // Predicated region
        $region145: #{vit_encoder_forward.1} parent=139 // pred_check
          %p5493 = pneg %p544
        $region146: #{vit_encoder_forward.1} parent=139 // pred_check_branch
          %5495 = sbr.rel (%p5493) target = $region148
        $region147: #{vit_encoder_forward.1} parent=139 // pred_region
          %p5496 = scmp.lt.s32.totalorder %s45, 1
          %s5497 = scalar_select %p5496, %s45, 1
          %s5498 = smul.addr %s5497, 2
          %s5499 = smul.addr %s5498, 8
          %s5500 = scalar_lea.vmem %s19, %s5499
        $region148: #{vit_encoder_forward.1} parent=139 // pred_fallthru
          _
      $region140: #{vit_encoder_forward.1} parent=5 // pred_fallthru
        _
    $region6: #{vit_encoder_forward.1} parent=1 // loop_footer
      %s38 = sadd.s32 1, %s34
    $region7: #{vit_encoder_forward.1} parent=1 // loop_footer_branch
      %33 = sbr.rel target = $region3
    $region8: #{vit_encoder_forward.1} parent=1 // loop_exit
      _
    %5501 = vsyncpa [#allocation3], 1
    %s5502 = scalar_lea.sflag [#allocation3], 1
    %5503 = vsyncpa %s5502, 1
    %5504 = vsyncpa [#allocation5], 1
    %s5505 = scalar_lea.sflag [#allocation5], 1
    %5506 = vsyncpa %s5505, 1
    %5507 = vsyncpa [#allocation8], 1
    %s5508 = scalar_lea.sflag [#allocation8], 1
    %5509 = vsyncpa %s5508, 1
    %5510 = vsyncpa [#allocation11], 1

</llo_original>
